<compile_context>
chip_gen: v6e
topology: v6e:2x2x1
jax: 0.10.0
libtpu: 0.0.40
codegen_flags: <defaults>
</compile_context>

<pallas_src>
import numpy as np

import jax
import jax.numpy as jnp
from jax import lax
from jax.experimental import pallas as pl
from jax.experimental.pallas import tpu as pltpu

EPS = 1e-5
PAD = 128   # lane-aligned halo width of the padded scratch rows


# ----------------------------------------------------------------------------
# host-side helpers (constants / parameter preprocessing)
# ----------------------------------------------------------------------------
def _tap_masks(n, h, w):
    """(9, n*h*w) validity masks for the 9 taps of a 3x3 pad-1 conv on a
    lane-flattened image (flat index p = img*h*w + y*w + x).  mask[t, p] = 0
    where the flat shift p + (dy*w + dx) would bleed across a row/image edge."""
    y = np.arange(h)[:, None]
    x = np.arange(w)[None, :]
    rows = []
    for dy in (-1, 0, 1):
        for dx in (-1, 0, 1):
            ok = (y + dy >= 0) & (y + dy < h) & (x + dx >= 0) & (x + dx < w)
            rows.append(np.tile(ok.reshape(-1), n))
    return np.stack(rows).astype(np.float32)


def _interp_matrix(out_size, in_size):
    """1-D bilinear interpolation matrix, PyTorch align_corners=True semantics."""
    a = np.zeros((out_size, in_size), np.float32)
    if out_size == 1:
        a[0, 0] = 1.0
        return a
    scale = (in_size - 1) / (out_size - 1)
    for o in range(out_size):
        s = o * scale
        i0 = int(np.floor(s))
        i1 = min(i0 + 1, in_size - 1)
        w1 = np.float32(s - i0)
        a[o, i0] += np.float32(1.0) - w1
        a[o, i1] += w1
    return a


def _fold_conv_bn(w, bn):
    """Fold eval-mode BN (gamma,beta,mean,var) into conv weight + per-channel shift."""
    gamma, beta, mean, var = bn
    scale = gamma / jnp.sqrt(var + EPS)
    return w * scale[:, None, None, None], beta - mean * scale


def _rows3x3(wf):
    """(Cout, Cin, 3, 3) -> (Cout, 9*Cin); columns [t*Cin:(t+1)*Cin] = W[:, :, ky, kx]
    with tap order t = (dy+1)*3 + (dx+1) (matches the in-kernel tap loop)."""
    cout, cin = wf.shape[0], wf.shape[1]
    return jnp.transpose(wf, (0, 2, 3, 1)).reshape(cout, 9 * cin)


# ----------------------------------------------------------------------------
# kernel factory
# ----------------------------------------------------------------------------
def _make_kernel(n, c0, h0, w0, c1, h1, w1):
    l0 = n * h0 * w0
    l1 = n * h1 * w1
    k0 = 9 * c0
    k1 = 9 * c1
    # weight-slab row offsets (must match the wrapper's concatenation order)
    r0a, r0b, rf10 = 0, c0, 2 * c0
    r1a, r1b, rf01 = 2 * c0 + c1, 2 * c0 + 2 * c1, 2 * c0 + 3 * c1

    def conv3x3(pad_ref, stk_ref, w_ref, wrow, cout, cin, m_ref, mrow, width, length):
        """3x3 / stride-1 / pad-1 conv with folded BN, as ONE MXU matmul.

        Scatters the 9 masked, lane-shifted tap slices into the stack scratch
        (rows [0, 9*cin); row 9*cin is a constant-ones row so the per-channel
        BN shift folds in as a bias column of the weight slab), then contracts
        with a single jnp.dot of depth 9*cin+1."""
        t = 0
        for dy in (-1, 0, 1):
            for dx in (-1, 0, 1):
                o = dy * width + dx
                xs = pad_ref[:, PAD + o:PAD + o + length]
                if o != 0:   # center-tap mask is all ones -> skip the multiply
                    xs = xs * m_ref[mrow + t:mrow + t + 1, :]
                stk_ref[t * cin:(t + 1) * cin, :] = xs
                t += 1
        kk = 9 * cin
        w = w_ref[wrow:wrow + cout, 0:kk + 1]           # taps + bias column
        return jnp.dot(w, stk_ref[0:kk + 1, :], preferred_element_type=jnp.float32)

    def kernel(x0_ref, x1_ref, w_ref, aux0_ref, aux1_ref, o0_ref, o1_ref,
               pad0_ref, pad1_ref, stk0_ref, stk1_ref):
        # zero only the halo borders; interiors are overwritten before every use
        pad0_ref[:, 0:PAD] = jnp.zeros((c0, PAD), jnp.float32)
        pad0_ref[:, PAD + l0:PAD + l0 + PAD] = jnp.zeros((c0, PAD), jnp.float32)
        pad1_ref[:, 0:PAD] = jnp.zeros((c1, PAD), jnp.float32)
        pad1_ref[:, PAD + l1:PAD + l1 + PAD] = jnp.zeros((c1, PAD), jnp.float32)
        # constant-one rows fold the per-channel BN shifts into the conv matmuls
        stk0_ref[k0:k0 + 1, :] = jnp.ones((1, l0), jnp.float32)
        stk1_ref[k1:k1 + 1, :] = jnp.ones((1, l1), jnp.float32)

        # ---------------- branch 0 : BasicBlock (c0 -> c0) ------------------
        x0 = x0_ref[...]
        pad0_ref[:, PAD:PAD + l0] = x0
        y = conv3x3(pad0_ref, stk0_ref, w_ref, r0a, c0, c0, aux0_ref, l1, w0, l0)
        y = jnp.maximum(y, 0.0)                                   # bn1 + relu
        pad0_ref[:, PAD:PAD + l0] = y
        y = conv3x3(pad0_ref, stk0_ref, w_ref, r0b, c0, c0, aux0_ref, l1, w0, l0)
        b0 = jnp.maximum(y + x0, 0.0)                             # bn2 + res + relu
        pad0_ref[:, PAD:PAD + l0] = b0     # staged for the stride-2 fuse conv

        # ---------------- branch 1 : BasicBlock (c1 -> c1) ------------------
        x1 = x1_ref[...]
        pad1_ref[:, PAD:PAD + l1] = x1
        z = conv3x3(pad1_ref, stk1_ref, w_ref, r1a, c1, c1, aux1_ref, l0, w1, l1)
        z = jnp.maximum(z, 0.0)
        pad1_ref[:, PAD:PAD + l1] = z
        z = conv3x3(pad1_ref, stk1_ref, w_ref, r1b, c1, c1, aux1_ref, l0, w1, l1)
        b1 = jnp.maximum(z + x1, 0.0)

        # ------ fuse output 1 : relu(BN(conv3x3 stride-2 (b0)) + b1) --------
        f10 = conv3x3(pad0_ref, stk0_ref, w_ref, rf10, c1, c0, aux0_ref, l1, w0, l0)
        # TODO(synk): at real HRNet sizes replace the one-hot subsample matmul
        #             with a strided / output-position gather.
        f10 = jnp.dot(f10, aux1_ref[0:l0, :], preferred_element_type=jnp.float32)
        o1_ref[...] = jnp.maximum(f10 + b1, 0.0)

        # ------ fuse output 0 : relu(b0 + upsample(BN(conv1x1(b1)))) --------
        f01 = jnp.dot(w_ref[rf01:rf01 + c0, 0:c1], b1,
                      preferred_element_type=jnp.float32)
        f01 = f01 + w_ref[rf01:rf01 + c0, c1:c1 + 1]              # BN shift pre-upsample
        # TODO(synk): at real HRNet sizes factor the bilinear upsample separably.
        f01 = jnp.dot(f01, aux0_ref[0:l1, :], preferred_element_type=jnp.float32)
        o0_ref[...] = jnp.maximum(b0 + f01, 0.0)

    return kernel


# ----------------------------------------------------------------------------
# wrapper
# ----------------------------------------------------------------------------
def hr_module_forward(x_list, params):
    x0, x1 = x_list
    n, c0, h0, w0 = x0.shape
    _, c1, h1, w1 = x1.shape
    l0, l1 = n * h0 * w0, n * h1 * w1

    def flat(x):
        nn_, cc, hh, ww = x.shape
        return jnp.transpose(x, (1, 0, 2, 3)).reshape(cc, nn_ * hh * ww)

    def unflat(xf, cc, hh, ww):
        return jnp.transpose(xf.reshape(cc, n, hh, ww), (1, 0, 2, 3))

    x0f = flat(x0).astype(jnp.float32)
    x1f = flat(x1).astype(jnp.float32)

    # fold eval-mode BN into conv weights / per-channel shifts
    w0a, s0a = _fold_conv_bn(params["w0a"], params["bn0a"])
    w0b, s0b = _fold_conv_bn(params["w0b"], params["bn0b"])
    w1a, s1a = _fold_conv_bn(params["w1a"], params["bn1a"])
    w1b, s1b = _fold_conv_bn(params["w1b"], params["bn1b"])
    wf01, sf01 = _fold_conv_bn(params["wf01"], params["bnf01"])
    wf10, sf10 = _fold_conv_bn(params["wf10"], params["bnf10"])

    # one weight+bias slab; row blocks: [w0a, w0b, wf10, w1a, w1b, wf01]
    maxw = 9 * max(c0, c1) + 1
    def blk(rows, shift):
        cout, kk = rows.shape
        b = jnp.zeros((cout, maxw), jnp.float32)
        b = b.at[:, :kk].set(rows.astype(jnp.float32))
        b = b.at[:, kk].set(shift.astype(jnp.float32))
        return b
    wslab = jnp.concatenate([
        blk(_rows3x3(w0a), s0a), blk(_rows3x3(w0b), s0b), blk(_rows3x3(wf10), sf10),
        blk(_rows3x3(w1a), s1a), blk(_rows3x3(w1b), s1b), blk(wf01[:, :, 0, 0], sf01),
    ], axis=0)

    # constants slab 0: bilinear (align_corners=True) upsample matrix + branch-0 masks
    a_h = _interp_matrix(h0, h1)
    a_w = _interp_matrix(w0, w1)
    up = np.kron(np.eye(n, dtype=np.float32), np.kron(a_h, a_w).T)       # (l1, l0)
    aux0 = jnp.asarray(np.concatenate([up, _tap_masks(n, h0, w0)], axis=0))

    # constants slab 1: stride-2 one-hot subsample matrix + branch-1 masks
    ssel = np.zeros((h0 * w0, h1 * w1), np.float32)
    for yo in range(h1):
        for xo in range(w1):
            ssel[(2 * yo) * w0 + (2 * xo), yo * w1 + xo] = 1.0
    sel = np.kron(np.eye(n, dtype=np.float32), ssel)                      # (l0, l1)
    aux1 = jnp.asarray(np.concatenate([sel, _tap_masks(n, h1, w1)], axis=0))

    inputs = [x0f, x1f, wslab, aux0, aux1]

    kernel = _make_kernel(n, c0, h0, w0, c1, h1, w1)
    o0f, o1f = pl.pallas_call(
        kernel,
        out_shape=(jax.ShapeDtypeStruct((c0, l0), jnp.float32),
                   jax.ShapeDtypeStruct((c1, l1), jnp.float32)),
        grid=(1,),
        in_specs=[pl.BlockSpec(a.shape, lambda i: (0, 0)) for a in inputs],
        out_specs=(pl.BlockSpec((c0, l0), lambda i: (0, 0)),
                   pl.BlockSpec((c1, l1), lambda i: (0, 0))),
        scratch_shapes=[pltpu.VMEM((c0, l0 + 2 * PAD), jnp.float32),   # pad0
                        pltpu.VMEM((c1, l1 + 2 * PAD), jnp.float32),   # pad1
                        pltpu.VMEM((9 * c0 + 1, l0), jnp.float32),     # tap stack 0
                        pltpu.VMEM((9 * c1 + 1, l1), jnp.float32)],    # tap stack 1
        compiler_params=pltpu.CompilerParams(
            dimension_semantics=("arbitrary",)),
    )(*inputs)

    return [unflat(o0f, c0, h0, w0), unflat(o1f, c1, h1, w1)]


# ----------------------------------------------------------------------------
# pure-JAX reference of the (eval-mode) HighResolutionModule forward
# ----------------------------------------------------------------------------
def hr_module_reference(x_list, params):
    x0, x1 = x_list
    h0, w0 = x0.shape[2], x0.shape[3]
    h1, w1 = x1.shape[2], x1.shape[3]

    def conv(x, w, stride, pad):
        return lax.conv_general_dilated(
            x, w, (stride, stride), [(pad, pad), (pad, pad)],
            dimension_numbers=("NCHW", "OIHW", "NCHW"),
            precision=lax.Precision.HIGHEST)

    def bn(y, p):
        g, b, m, v = p
        s = g / jnp.sqrt(v + EPS)
        return y * s[None, :, None, None] + (b - m * s)[None, :, None, None]

    def basic_block(x, w1_, bn1, w2_, bn2):
        y = jax.nn.relu(bn(conv(x, w1_, 1, 1), bn1))
        y = bn(conv(y, w2_, 1, 1), bn2)
        return jax.nn.relu(y + x)

    b0 = basic_block(x0, params["w0a"], params["bn0a"], params["w0b"], params["bn0b"])
    b1 = basic_block(x1, params["w1a"], params["bn1a"], params["w1b"], params["bn1b"])

    # fuse output 0
    f01 = bn(conv(b1, params["wf01"], 1, 0), params["bnf01"])
    a_h = jnp.asarray(_interp_matrix(h0, h1))
    a_w = jnp.asarray(_interp_matrix(w0, w1))
    up = jnp.einsum("yh,nchw,xw->ncyx", a_h, f01, a_w,
                    precision=lax.Precision.HIGHEST)
    y0 = jax.nn.relu(b0 + up)

    # fuse output 1
    f10 = bn(conv(b0, params["wf10"], 2, 1), params["bnf10"])
    y1 = jax.nn.relu(f10 + b1)
    return [y0, y1]


# ----------------------------------------------------------------------------
if __name__ == "__main__":
    key = jax.random.PRNGKey(0)
    keys = jax.random.split(key, 16)

    N = 2
    C0, H0, W0 = 8, 16, 16
    C1, H1, W1 = 16, 8, 8

    x0 = jax.random.normal(keys[0], (N, C0, H0, W0), jnp.float32)
    x1 = jax.random.normal(keys[1], (N, C1, H1, W1), jnp.float32)

    def bn_params(k, c):
        k1, k2, k3, k4 = jax.random.split(k, 4)
        gamma = 1.0 + 0.2 * jax.random.normal(k1, (c,), jnp.float32)
        beta = 0.1 * jax.random.normal(k2, (c,), jnp.float32)
        mean = 0.1 * jax.random.normal(k3, (c,), jnp.float32)
        var = 1.0 + 0.2 * jax.random.uniform(k4, (c,), jnp.float32)
        return (gamma, beta, mean, var)

    P = {
        "w0a": 0.1 * jax.random.normal(keys[2], (C0, C0, 3, 3), jnp.float32),
        "bn0a": bn_params(keys[3], C0),
        "w0b": 0.1 * jax.random.normal(keys[4], (C0, C0, 3, 3), jnp.float32),
        "bn0b": bn_params(keys[5], C0),
        "w1a": 0.1 * jax.random.normal(keys[6], (C1, C1, 3, 3), jnp.float32),
        "bn1a": bn_params(keys[7], C1),
        "w1b": 0.1 * jax.random.normal(keys[8], (C1, C1, 3, 3), jnp.float32),
        "bn1b": bn_params(keys[9], C1),
        "wf01": 0.1 * jax.random.normal(keys[10], (C0, C1, 1, 1), jnp.float32),
        "bnf01": bn_params(keys[11], C0),
        "wf10": 0.1 * jax.random.normal(keys[12], (C1, C0, 3, 3), jnp.float32),
        "bnf10": bn_params(keys[13], C1),
    }

    y0, y1 = hr_module_forward([x0, x1], P)
    y0 = jax.block_until_ready(y0)
    y1 = jax.block_until_ready(y1)

    r0, r1 = hr_module_reference([x0, x1], P)
    assert y0.shape == r0.shape == (N, C0, H0, W0)
    assert y1.shape == r1.shape == (N, C1, H1, W1)
    # NOTE: in-kernel matmuls use default TPU precision (bf16-rounded operands,
    # f32 accumulation); the reference uses Precision.HIGHEST, hence the tolerance.
    assert jnp.allclose(y0, r0, atol=2e-2, rtol=2e-2), "branch-0 fuse output mismatch"
    assert jnp.allclose(y1, r1, atol=2e-2, rtol=2e-2), "branch-1 fuse output mismatch"

    print("KERNEL_OK")
</pallas_src>

<mosaic_0001>
module attributes {stable_mosaic.version = 11 : i64} {
  func.func @kernel(%arg0: i32, %arg1: memref<8x512xf32, #tpu.memory_space<vmem>>, %arg2: memref<16x128xf32, #tpu.memory_space<vmem>>, %arg3: memref<72x145xf32, #tpu.memory_space<vmem>>, %arg4: memref<137x512xf32, #tpu.memory_space<vmem>>, %arg5: memref<521x128xf32, #tpu.memory_space<vmem>>, %arg6: memref<8x512xf32, #tpu.memory_space<vmem>>, %arg7: memref<16x128xf32, #tpu.memory_space<vmem>>, %arg8: memref<8x768xf32, #tpu.memory_space<vmem>>, %arg9: memref<16x384xf32, #tpu.memory_space<vmem>>, %arg10: memref<73x512xf32, #tpu.memory_space<vmem>>, %arg11: memref<145x128xf32, #tpu.memory_space<vmem>>) attributes {dimension_semantics = [#tpu.dimension_semantics<arbitrary>], iteration_bounds = array<i64: 1>, scalar_prefetch = 0 : i64, scratch_operands = 4 : i64, tpu.core_type = #tpu.core_type<tc>, window_params = [{pipeline_mode = #tpu.pipeline_mode<synchronous>, transform_indices = @transform_0, window_bounds = array<i64: 8, 512>}, {pipeline_mode = #tpu.pipeline_mode<synchronous>, transform_indices = @transform_1, window_bounds = array<i64: 16, 128>}, {pipeline_mode = #tpu.pipeline_mode<synchronous>, transform_indices = @transform_2, window_bounds = array<i64: 72, 145>}, {pipeline_mode = #tpu.pipeline_mode<synchronous>, transform_indices = @transform_3, window_bounds = array<i64: 137, 512>}, {pipeline_mode = #tpu.pipeline_mode<synchronous>, transform_indices = @transform_4, window_bounds = array<i64: 521, 128>}, {pipeline_mode = #tpu.pipeline_mode<synchronous>, transform_indices = @transform_5, window_bounds = array<i64: 8, 512>}, {pipeline_mode = #tpu.pipeline_mode<synchronous>, transform_indices = @transform_6, window_bounds = array<i64: 16, 128>}]} {
    %cst = arith.constant 0.000000e+00 : f32
    %0 = vector.broadcast %cst : f32 to vector<8x128xf32>
    %c0 = arith.constant 0 : index
    %c0_0 = arith.constant 0 : index
    %1 = vector.load %arg8[%c0, %c0_0] : memref<8x768xf32, #tpu.memory_space<vmem>>, vector<8x128xf32>
    tpu.vector_store %arg8[%c0, %c0_0], %0 {strides = array<i32>} : memref<8x768xf32, #tpu.memory_space<vmem>>, vector<8x128xf32>,
    %cst_1 = arith.constant 0.000000e+00 : f32
    %2 = vector.broadcast %cst_1 : f32 to vector<8x128xf32>
    %c0_2 = arith.constant 0 : index
    %c640 = arith.constant 640 : index
    %3 = vector.load %arg8[%c0_2, %c640] : memref<8x768xf32, #tpu.memory_space<vmem>>, vector<8x128xf32>
    tpu.vector_store %arg8[%c0_2, %c640], %2 {strides = array<i32>} : memref<8x768xf32, #tpu.memory_space<vmem>>, vector<8x128xf32>,
    %cst_3 = arith.constant 0.000000e+00 : f32
    %4 = vector.broadcast %cst_3 : f32 to vector<16x128xf32>
    %c0_4 = arith.constant 0 : index
    %c0_5 = arith.constant 0 : index
    %5 = vector.load %arg9[%c0_4, %c0_5] : memref<16x384xf32, #tpu.memory_space<vmem>>, vector<16x128xf32>
    tpu.vector_store %arg9[%c0_4, %c0_5], %4 {strides = array<i32>} : memref<16x384xf32, #tpu.memory_space<vmem>>, vector<16x128xf32>,
    %cst_6 = arith.constant 0.000000e+00 : f32
    %6 = vector.broadcast %cst_6 : f32 to vector<16x128xf32>
    %c0_7 = arith.constant 0 : index
    %c256 = arith.constant 256 : index
    %7 = vector.load %arg9[%c0_7, %c256] : memref<16x384xf32, #tpu.memory_space<vmem>>, vector<16x128xf32>
    tpu.vector_store %arg9[%c0_7, %c256], %6 {strides = array<i32>} : memref<16x384xf32, #tpu.memory_space<vmem>>, vector<16x128xf32>,
    %cst_8 = arith.constant 1.000000e+00 : f32
    %8 = vector.broadcast %cst_8 : f32 to vector<1x512xf32>
    %c72 = arith.constant 72 : index
    %c0_9 = arith.constant 0 : index
    %9 = vector.load %arg10[%c72, %c0_9] : memref<73x512xf32, #tpu.memory_space<vmem>>, vector<1x512xf32>
    tpu.vector_store %arg10[%c72, %c0_9], %8 {strides = array<i32>} : memref<73x512xf32, #tpu.memory_space<vmem>>, vector<1x512xf32>,
    %cst_10 = arith.constant 1.000000e+00 : f32
    %10 = vector.broadcast %cst_10 : f32 to vector<1x128xf32>
    %c144 = arith.constant 144 : index
    %c0_11 = arith.constant 0 : index
    %11 = vector.load %arg11[%c144, %c0_11] : memref<145x128xf32, #tpu.memory_space<vmem>>, vector<1x128xf32>
    tpu.vector_store %arg11[%c144, %c0_11], %10 {strides = array<i32>} : memref<145x128xf32, #tpu.memory_space<vmem>>, vector<1x128xf32>,
    %c0_12 = arith.constant 0 : index
    %c0_13 = arith.constant 0 : index
    %12 = vector.load %arg1[%c0_12, %c0_13] : memref<8x512xf32, #tpu.memory_space<vmem>>, vector<8x512xf32>
    %c0_14 = arith.constant 0 : index
    %c128 = arith.constant 128 : index
    %13 = vector.load %arg8[%c0_14, %c128] : memref<8x768xf32, #tpu.memory_space<vmem>>, vector<8x512xf32>
    tpu.vector_store %arg8[%c0_14, %c128], %12 {strides = array<i32>} : memref<8x768xf32, #tpu.memory_space<vmem>>, vector<8x512xf32>,
    %c0_15 = arith.constant 0 : index
    %c111 = arith.constant 111 : index
    %14 = vector.load %arg8[%c0_15, %c111] : memref<8x768xf32, #tpu.memory_space<vmem>>, vector<8x512xf32>
    %c128_16 = arith.constant 128 : index
    %c0_17 = arith.constant 0 : index
    %15 = vector.load %arg4[%c128_16, %c0_17] : memref<137x512xf32, #tpu.memory_space<vmem>>, vector<1x512xf32>
    %16 = vector.broadcast %15 : vector<1x512xf32> to vector<8x512xf32>
    %17 = arith.mulf %14, %16 : vector<8x512xf32>
    %c0_18 = arith.constant 0 : index
    %c0_19 = arith.constant 0 : index
    %18 = vector.load %arg10[%c0_18, %c0_19] : memref<73x512xf32, #tpu.memory_space<vmem>>, vector<8x512xf32>
    tpu.vector_store %arg10[%c0_18, %c0_19], %17 {strides = array<i32>} : memref<73x512xf32, #tpu.memory_space<vmem>>, vector<8x512xf32>,
    %c0_20 = arith.constant 0 : index
    %c112 = arith.constant 112 : index
    %19 = vector.load %arg8[%c0_20, %c112] : memref<8x768xf32, #tpu.memory_space<vmem>>, vector<8x512xf32>
    %c129 = arith.constant 129 : index
    %c0_21 = arith.constant 0 : index
    %20 = vector.load %arg4[%c129, %c0_21] : memref<137x512xf32, #tpu.memory_space<vmem>>, vector<1x512xf32>
    %21 = vector.broadcast %20 : vector<1x512xf32> to vector<8x512xf32>
    %22 = arith.mulf %19, %21 : vector<8x512xf32>
    %c8 = arith.constant 8 : index
    %c0_22 = arith.constant 0 : index
    %23 = vector.load %arg10[%c8, %c0_22] : memref<73x512xf32, #tpu.memory_space<vmem>>, vector<8x512xf32>
    tpu.vector_store %arg10[%c8, %c0_22], %22 {strides = array<i32>} : memref<73x512xf32, #tpu.memory_space<vmem>>, vector<8x512xf32>,
    %c0_23 = arith.constant 0 : index
    %c113 = arith.constant 113 : index
    %24 = vector.load %arg8[%c0_23, %c113] : memref<8x768xf32, #tpu.memory_space<vmem>>, vector<8x512xf32>
    %c130 = arith.constant 130 : index
    %c0_24 = arith.constant 0 : index
    %25 = vector.load %arg4[%c130, %c0_24] : memref<137x512xf32, #tpu.memory_space<vmem>>, vector<1x512xf32>
    %26 = vector.broadcast %25 : vector<1x512xf32> to vector<8x512xf32>
    %27 = arith.mulf %24, %26 : vector<8x512xf32>
    %c16 = arith.constant 16 : index
    %c0_25 = arith.constant 0 : index
    %28 = vector.load %arg10[%c16, %c0_25] : memref<73x512xf32, #tpu.memory_space<vmem>>, vector<8x512xf32>
    tpu.vector_store %arg10[%c16, %c0_25], %27 {strides = array<i32>} : memref<73x512xf32, #tpu.memory_space<vmem>>, vector<8x512xf32>,
    %c0_26 = arith.constant 0 : index
    %c127 = arith.constant 127 : index
    %29 = vector.load %arg8[%c0_26, %c127] : memref<8x768xf32, #tpu.memory_space<vmem>>, vector<8x512xf32>
    %c131 = arith.constant 131 : index
    %c0_27 = arith.constant 0 : index
    %30 = vector.load %arg4[%c131, %c0_27] : memref<137x512xf32, #tpu.memory_space<vmem>>, vector<1x512xf32>
    %31 = vector.broadcast %30 : vector<1x512xf32> to vector<8x512xf32>
    %32 = arith.mulf %29, %31 : vector<8x512xf32>
    %c24 = arith.constant 24 : index
    %c0_28 = arith.constant 0 : index
    %33 = vector.load %arg10[%c24, %c0_28] : memref<73x512xf32, #tpu.memory_space<vmem>>, vector<8x512xf32>
    tpu.vector_store %arg10[%c24, %c0_28], %32 {strides = array<i32>} : memref<73x512xf32, #tpu.memory_space<vmem>>, vector<8x512xf32>,
    %c0_29 = arith.constant 0 : index
    %c128_30 = arith.constant 128 : index
    %34 = vector.load %arg8[%c0_29, %c128_30] : memref<8x768xf32, #tpu.memory_space<vmem>>, vector<8x512xf32>
    %c32 = arith.constant 32 : index
    %c0_31 = arith.constant 0 : index
    %35 = vector.load %arg10[%c32, %c0_31] : memref<73x512xf32, #tpu.memory_space<vmem>>, vector<8x512xf32>
    tpu.vector_store %arg10[%c32, %c0_31], %34 {strides = array<i32>} : memref<73x512xf32, #tpu.memory_space<vmem>>, vector<8x512xf32>,
    %c0_32 = arith.constant 0 : index
    %c129_33 = arith.constant 129 : index
    %36 = vector.load %arg8[%c0_32, %c129_33] : memref<8x768xf32, #tpu.memory_space<vmem>>, vector<8x512xf32>
    %c133 = arith.constant 133 : index
    %c0_34 = arith.constant 0 : index
    %37 = vector.load %arg4[%c133, %c0_34] : memref<137x512xf32, #tpu.memory_space<vmem>>, vector<1x512xf32>
    %38 = vector.broadcast %37 : vector<1x512xf32> to vector<8x512xf32>
    %39 = arith.mulf %36, %38 : vector<8x512xf32>
    %c40 = arith.constant 40 : index
    %c0_35 = arith.constant 0 : index
    %40 = vector.load %arg10[%c40, %c0_35] : memref<73x512xf32, #tpu.memory_space<vmem>>, vector<8x512xf32>
    tpu.vector_store %arg10[%c40, %c0_35], %39 {strides = array<i32>} : memref<73x512xf32, #tpu.memory_space<vmem>>, vector<8x512xf32>,
    %c0_36 = arith.constant 0 : index
    %c143 = arith.constant 143 : index
    %41 = vector.load %arg8[%c0_36, %c143] : memref<8x768xf32, #tpu.memory_space<vmem>>, vector<8x512xf32>
    %c134 = arith.constant 134 : index
    %c0_37 = arith.constant 0 : index
    %42 = vector.load %arg4[%c134, %c0_37] : memref<137x512xf32, #tpu.memory_space<vmem>>, vector<1x512xf32>
    %43 = vector.broadcast %42 : vector<1x512xf32> to vector<8x512xf32>
    %44 = arith.mulf %41, %43 : vector<8x512xf32>
    %c48 = arith.constant 48 : index
    %c0_38 = arith.constant 0 : index
    %45 = vector.load %arg10[%c48, %c0_38] : memref<73x512xf32, #tpu.memory_space<vmem>>, vector<8x512xf32>
    tpu.vector_store %arg10[%c48, %c0_38], %44 {strides = array<i32>} : memref<73x512xf32, #tpu.memory_space<vmem>>, vector<8x512xf32>,
    %c0_39 = arith.constant 0 : index
    %c144_40 = arith.constant 144 : index
    %46 = vector.load %arg8[%c0_39, %c144_40] : memref<8x768xf32, #tpu.memory_space<vmem>>, vector<8x512xf32>
    %c135 = arith.constant 135 : index
    %c0_41 = arith.constant 0 : index
    %47 = vector.load %arg4[%c135, %c0_41] : memref<137x512xf32, #tpu.memory_space<vmem>>, vector<1x512xf32>
    %48 = vector.broadcast %47 : vector<1x512xf32> to vector<8x512xf32>
    %49 = arith.mulf %46, %48 : vector<8x512xf32>
    %c56 = arith.constant 56 : index
    %c0_42 = arith.constant 0 : index
    %50 = vector.load %arg10[%c56, %c0_42] : memref<73x512xf32, #tpu.memory_space<vmem>>, vector<8x512xf32>
    tpu.vector_store %arg10[%c56, %c0_42], %49 {strides = array<i32>} : memref<73x512xf32, #tpu.memory_space<vmem>>, vector<8x512xf32>,
    %c0_43 = arith.constant 0 : index
    %c145 = arith.constant 145 : index
    %51 = vector.load %arg8[%c0_43, %c145] : memref<8x768xf32, #tpu.memory_space<vmem>>, vector<8x512xf32>
    %c136 = arith.constant 136 : index
    %c0_44 = arith.constant 0 : index
    %52 = vector.load %arg4[%c136, %c0_44] : memref<137x512xf32, #tpu.memory_space<vmem>>, vector<1x512xf32>
    %53 = vector.broadcast %52 : vector<1x512xf32> to vector<8x512xf32>
    %54 = arith.mulf %51, %53 : vector<8x512xf32>
    %c64 = arith.constant 64 : index
    %c0_45 = arith.constant 0 : index
    %55 = vector.load %arg10[%c64, %c0_45] : memref<73x512xf32, #tpu.memory_space<vmem>>, vector<8x512xf32>
    tpu.vector_store %arg10[%c64, %c0_45], %54 {strides = array<i32>} : memref<73x512xf32, #tpu.memory_space<vmem>>, vector<8x512xf32>,
    %c0_46 = arith.constant 0 : index
    %c0_47 = arith.constant 0 : index
    %56 = vector.load %arg3[%c0_46, %c0_47] : memref<72x145xf32, #tpu.memory_space<vmem>>, vector<8x73xf32>
    %c0_48 = arith.constant 0 : index
    %c0_49 = arith.constant 0 : index
    %57 = vector.load %arg10[%c0_48, %c0_49] : memref<73x512xf32, #tpu.memory_space<vmem>>, vector<73x512xf32>
    %cst_50 = arith.constant dense<0.000000e+00> : vector<8x512xf32>
    %58 = tpu.matmul %56, %57, %cst_50 {dimension_numbers = #tpu.dot_dimension_numbers<[1], [0], [0], [1], [0, 0, 1, 1], [], []>} : vector<8x73xf32>, vector<73x512xf32>, vector<8x512xf32> -> vector<8x512xf32>
    %cst_51 = arith.constant 0.000000e+00 : f32
    %59 = vector.broadcast %cst_51 : f32 to vector<8x512xf32>
    %60 = arith.maximumf %58, %59 : vector<8x512xf32>
    %c0_52 = arith.constant 0 : index
    %c128_53 = arith.constant 128 : index
    %61 = vector.load %arg8[%c0_52, %c128_53] : memref<8x768xf32, #tpu.memory_space<vmem>>, vector<8x512xf32>
    tpu.vector_store %arg8[%c0_52, %c128_53], %60 {strides = array<i32>} : memref<8x768xf32, #tpu.memory_space<vmem>>, vector<8x512xf32>,
    %c0_54 = arith.constant 0 : index
    %c111_55 = arith.constant 111 : index
    %62 = vector.load %arg8[%c0_54, %c111_55] : memref<8x768xf32, #tpu.memory_space<vmem>>, vector<8x512xf32>
    %c128_56 = arith.constant 128 : index
    %c0_57 = arith.constant 0 : index
    %63 = vector.load %arg4[%c128_56, %c0_57] : memref<137x512xf32, #tpu.memory_space<vmem>>, vector<1x512xf32>
    %64 = vector.broadcast %63 : vector<1x512xf32> to vector<8x512xf32>
    %65 = arith.mulf %62, %64 : vector<8x512xf32>
    %c0_58 = arith.constant 0 : index
    %c0_59 = arith.constant 0 : index
    %66 = vector.load %arg10[%c0_58, %c0_59] : memref<73x512xf32, #tpu.memory_space<vmem>>, vector<8x512xf32>
    tpu.vector_store %arg10[%c0_58, %c0_59], %65 {strides = array<i32>} : memref<73x512xf32, #tpu.memory_space<vmem>>, vector<8x512xf32>,
    %c0_60 = arith.constant 0 : index
    %c112_61 = arith.constant 112 : index
    %67 = vector.load %arg8[%c0_60, %c112_61] : memref<8x768xf32, #tpu.memory_space<vmem>>, vector<8x512xf32>
    %c129_62 = arith.constant 129 : index
    %c0_63 = arith.constant 0 : index
    %68 = vector.load %arg4[%c129_62, %c0_63] : memref<137x512xf32, #tpu.memory_space<vmem>>, vector<1x512xf32>
    %69 = vector.broadcast %68 : vector<1x512xf32> to vector<8x512xf32>
    %70 = arith.mulf %67, %69 : vector<8x512xf32>
    %c8_64 = arith.constant 8 : index
    %c0_65 = arith.constant 0 : index
    %71 = vector.load %arg10[%c8_64, %c0_65] : memref<73x512xf32, #tpu.memory_space<vmem>>, vector<8x512xf32>
    tpu.vector_store %arg10[%c8_64, %c0_65], %70 {strides = array<i32>} : memref<73x512xf32, #tpu.memory_space<vmem>>, vector<8x512xf32>,
    %c0_66 = arith.constant 0 : index
    %c113_67 = arith.constant 113 : index
    %72 = vector.load %arg8[%c0_66, %c113_67] : memref<8x768xf32, #tpu.memory_space<vmem>>, vector<8x512xf32>
    %c130_68 = arith.constant 130 : index
    %c0_69 = arith.constant 0 : index
    %73 = vector.load %arg4[%c130_68, %c0_69] : memref<137x512xf32, #tpu.memory_space<vmem>>, vector<1x512xf32>
    %74 = vector.broadcast %73 : vector<1x512xf32> to vector<8x512xf32>
    %75 = arith.mulf %72, %74 : vector<8x512xf32>
    %c16_70 = arith.constant 16 : index
    %c0_71 = arith.constant 0 : index
    %76 = vector.load %arg10[%c16_70, %c0_71] : memref<73x512xf32, #tpu.memory_space<vmem>>, vector<8x512xf32>
    tpu.vector_store %arg10[%c16_70, %c0_71], %75 {strides = array<i32>} : memref<73x512xf32, #tpu.memory_space<vmem>>, vector<8x512xf32>,
    %c0_72 = arith.constant 0 : index
    %c127_73 = arith.constant 127 : index
    %77 = vector.load %arg8[%c0_72, %c127_73] : memref<8x768xf32, #tpu.memory_space<vmem>>, vector<8x512xf32>
    %c131_74 = arith.constant 131 : index
    %c0_75 = arith.constant 0 : index
    %78 = vector.load %arg4[%c131_74, %c0_75] : memref<137x512xf32, #tpu.memory_space<vmem>>, vector<1x512xf32>
    %79 = vector.broadcast %78 : vector<1x512xf32> to vector<8x512xf32>
    %80 = arith.mulf %77, %79 : vector<8x512xf32>
    %c24_76 = arith.constant 24 : index
    %c0_77 = arith.constant 0 : index
    %81 = vector.load %arg10[%c24_76, %c0_77] : memref<73x512xf32, #tpu.memory_space<vmem>>, vector<8x512xf32>
    tpu.vector_store %arg10[%c24_76, %c0_77], %80 {strides = array<i32>} : memref<73x512xf32, #tpu.memory_space<vmem>>, vector<8x512xf32>,
    %c0_78 = arith.constant 0 : index
    %c128_79 = arith.constant 128 : index
    %82 = vector.load %arg8[%c0_78, %c128_79] : memref<8x768xf32, #tpu.memory_space<vmem>>, vector<8x512xf32>
    %c32_80 = arith.constant 32 : index
    %c0_81 = arith.constant 0 : index
    %83 = vector.load %arg10[%c32_80, %c0_81] : memref<73x512xf32, #tpu.memory_space<vmem>>, vector<8x512xf32>
    tpu.vector_store %arg10[%c32_80, %c0_81], %82 {strides = array<i32>} : memref<73x512xf32, #tpu.memory_space<vmem>>, vector<8x512xf32>,
    %c0_82 = arith.constant 0 : index
    %c129_83 = arith.constant 129 : index
    %84 = vector.load %arg8[%c0_82, %c129_83] : memref<8x768xf32, #tpu.memory_space<vmem>>, vector<8x512xf32>
    %c133_84 = arith.constant 133 : index
    %c0_85 = arith.constant 0 : index
    %85 = vector.load %arg4[%c133_84, %c0_85] : memref<137x512xf32, #tpu.memory_space<vmem>>, vector<1x512xf32>
    %86 = vector.broadcast %85 : vector<1x512xf32> to vector<8x512xf32>
    %87 = arith.mulf %84, %86 : vector<8x512xf32>
    %c40_86 = arith.constant 40 : index
    %c0_87 = arith.constant 0 : index
    %88 = vector.load %arg10[%c40_86, %c0_87] : memref<73x512xf32, #tpu.memory_space<vmem>>, vector<8x512xf32>
    tpu.vector_store %arg10[%c40_86, %c0_87], %87 {strides = array<i32>} : memref<73x512xf32, #tpu.memory_space<vmem>>, vector<8x512xf32>,
    %c0_88 = arith.constant 0 : index
    %c143_89 = arith.constant 143 : index
    %89 = vector.load %arg8[%c0_88, %c143_89] : memref<8x768xf32, #tpu.memory_space<vmem>>, vector<8x512xf32>
    %c134_90 = arith.constant 134 : index
    %c0_91 = arith.constant 0 : index
    %90 = vector.load %arg4[%c134_90, %c0_91] : memref<137x512xf32, #tpu.memory_space<vmem>>, vector<1x512xf32>
    %91 = vector.broadcast %90 : vector<1x512xf32> to vector<8x512xf32>
    %92 = arith.mulf %89, %91 : vector<8x512xf32>
    %c48_92 = arith.constant 48 : index
    %c0_93 = arith.constant 0 : index
    %93 = vector.load %arg10[%c48_92, %c0_93] : memref<73x512xf32, #tpu.memory_space<vmem>>, vector<8x512xf32>
    tpu.vector_store %arg10[%c48_92, %c0_93], %92 {strides = array<i32>} : memref<73x512xf32, #tpu.memory_space<vmem>>, vector<8x512xf32>,
    %c0_94 = arith.constant 0 : index
    %c144_95 = arith.constant 144 : index
    %94 = vector.load %arg8[%c0_94, %c144_95] : memref<8x768xf32, #tpu.memory_space<vmem>>, vector<8x512xf32>
    %c135_96 = arith.constant 135 : index
    %c0_97 = arith.constant 0 : index
    %95 = vector.load %arg4[%c135_96, %c0_97] : memref<137x512xf32, #tpu.memory_space<vmem>>, vector<1x512xf32>
    %96 = vector.broadcast %95 : vector<1x512xf32> to vector<8x512xf32>
    %97 = arith.mulf %94, %96 : vector<8x512xf32>
    %c56_98 = arith.constant 56 : index
    %c0_99 = arith.constant 0 : index
    %98 = vector.load %arg10[%c56_98, %c0_99] : memref<73x512xf32, #tpu.memory_space<vmem>>, vector<8x512xf32>
    tpu.vector_store %arg10[%c56_98, %c0_99], %97 {strides = array<i32>} : memref<73x512xf32, #tpu.memory_space<vmem>>, vector<8x512xf32>,
    %c0_100 = arith.constant 0 : index
    %c145_101 = arith.constant 145 : index
    %99 = vector.load %arg8[%c0_100, %c145_101] : memref<8x768xf32, #tpu.memory_space<vmem>>, vector<8x512xf32>
    %c136_102 = arith.constant 136 : index
    %c0_103 = arith.constant 0 : index
    %100 = vector.load %arg4[%c136_102, %c0_103] : memref<137x512xf32, #tpu.memory_space<vmem>>, vector<1x512xf32>
    %101 = vector.broadcast %100 : vector<1x512xf32> to vector<8x512xf32>
    %102 = arith.mulf %99, %101 : vector<8x512xf32>
    %c64_104 = arith.constant 64 : index
    %c0_105 = arith.constant 0 : index
    %103 = vector.load %arg10[%c64_104, %c0_105] : memref<73x512xf32, #tpu.memory_space<vmem>>, vector<8x512xf32>
    tpu.vector_store %arg10[%c64_104, %c0_105], %102 {strides = array<i32>} : memref<73x512xf32, #tpu.memory_space<vmem>>, vector<8x512xf32>,
    %c8_106 = arith.constant 8 : index
    %c0_107 = arith.constant 0 : index
    %104 = vector.load %arg3[%c8_106, %c0_107] : memref<72x145xf32, #tpu.memory_space<vmem>>, vector<8x73xf32>
    %c0_108 = arith.constant 0 : index
    %c0_109 = arith.constant 0 : index
    %105 = vector.load %arg10[%c0_108, %c0_109] : memref<73x512xf32, #tpu.memory_space<vmem>>, vector<73x512xf32>
    %cst_110 = arith.constant dense<0.000000e+00> : vector<8x512xf32>
    %106 = tpu.matmul %104, %105, %cst_110 {dimension_numbers = #tpu.dot_dimension_numbers<[1], [0], [0], [1], [0, 0, 1, 1], [], []>} : vector<8x73xf32>, vector<73x512xf32>, vector<8x512xf32> -> vector<8x512xf32>
    %107 = arith.addf %106, %12 : vector<8x512xf32>
    %cst_111 = arith.constant 0.000000e+00 : f32
    %108 = vector.broadcast %cst_111 : f32 to vector<8x512xf32>
    %109 = arith.maximumf %107, %108 : vector<8x512xf32>
    %c0_112 = arith.constant 0 : index
    %c128_113 = arith.constant 128 : index
    %110 = vector.load %arg8[%c0_112, %c128_113] : memref<8x768xf32, #tpu.memory_space<vmem>>, vector<8x512xf32>
    tpu.vector_store %arg8[%c0_112, %c128_113], %109 {strides = array<i32>} : memref<8x768xf32, #tpu.memory_space<vmem>>, vector<8x512xf32>,
    %c0_114 = arith.constant 0 : index
    %c0_115 = arith.constant 0 : index
    %111 = vector.load %arg2[%c0_114, %c0_115] : memref<16x128xf32, #tpu.memory_space<vmem>>, vector<16x128xf32>
    %c0_116 = arith.constant 0 : index
    %c128_117 = arith.constant 128 : index
    %112 = vector.load %arg9[%c0_116, %c128_117] : memref<16x384xf32, #tpu.memory_space<vmem>>, vector<16x128xf32>
    tpu.vector_store %arg9[%c0_116, %c128_117], %111 {strides = array<i32>} : memref<16x384xf32, #tpu.memory_space<vmem>>, vector<16x128xf32>,
    %c0_118 = arith.constant 0 : index
    %c119 = arith.constant 119 : index
    %113 = vector.load %arg9[%c0_118, %c119] : memref<16x384xf32, #tpu.memory_space<vmem>>, vector<16x128xf32>
    %c512 = arith.constant 512 : index
    %c0_119 = arith.constant 0 : index
    %114 = vector.load %arg5[%c512, %c0_119] : memref<521x128xf32, #tpu.memory_space<vmem>>, vector<1x128xf32>
    %115 = vector.broadcast %114 : vector<1x128xf32> to vector<16x128xf32>
    %116 = arith.mulf %113, %115 : vector<16x128xf32>
    %c0_120 = arith.constant 0 : index
    %c0_121 = arith.constant 0 : index
    %117 = vector.load %arg11[%c0_120, %c0_121] : memref<145x128xf32, #tpu.memory_space<vmem>>, vector<16x128xf32>
    tpu.vector_store %arg11[%c0_120, %c0_121], %116 {strides = array<i32>} : memref<145x128xf32, #tpu.memory_space<vmem>>, vector<16x128xf32>,
    %c0_122 = arith.constant 0 : index
    %c120 = arith.constant 120 : index
    %118 = vector.load %arg9[%c0_122, %c120] : memref<16x384xf32, #tpu.memory_space<vmem>>, vector<16x128xf32>
    %c513 = arith.constant 513 : index
    %c0_123 = arith.constant 0 : index
    %119 = vector.load %arg5[%c513, %c0_123] : memref<521x128xf32, #tpu.memory_space<vmem>>, vector<1x128xf32>
    %120 = vector.broadcast %119 : vector<1x128xf32> to vector<16x128xf32>
    %121 = arith.mulf %118, %120 : vector<16x128xf32>
    %c16_124 = arith.constant 16 : index
    %c0_125 = arith.constant 0 : index
    %122 = vector.load %arg11[%c16_124, %c0_125] : memref<145x128xf32, #tpu.memory_space<vmem>>, vector<16x128xf32>
    tpu.vector_store %arg11[%c16_124, %c0_125], %121 {strides = array<i32>} : memref<145x128xf32, #tpu.memory_space<vmem>>, vector<16x128xf32>,
    %c0_126 = arith.constant 0 : index
    %c121 = arith.constant 121 : index
    %123 = vector.load %arg9[%c0_126, %c121] : memref<16x384xf32, #tpu.memory_space<vmem>>, vector<16x128xf32>
    %c514 = arith.constant 514 : index
    %c0_127 = arith.constant 0 : index
    %124 = vector.load %arg5[%c514, %c0_127] : memref<521x128xf32, #tpu.memory_space<vmem>>, vector<1x128xf32>
    %125 = vector.broadcast %124 : vector<1x128xf32> to vector<16x128xf32>
    %126 = arith.mulf %123, %125 : vector<16x128xf32>
    %c32_128 = arith.constant 32 : index
    %c0_129 = arith.constant 0 : index
    %127 = vector.load %arg11[%c32_128, %c0_129] : memref<145x128xf32, #tpu.memory_space<vmem>>, vector<16x128xf32>
    tpu.vector_store %arg11[%c32_128, %c0_129], %126 {strides = array<i32>} : memref<145x128xf32, #tpu.memory_space<vmem>>, vector<16x128xf32>,
    %c0_130 = arith.constant 0 : index
    %c127_131 = arith.constant 127 : index
    %128 = vector.load %arg9[%c0_130, %c127_131] : memref<16x384xf32, #tpu.memory_space<vmem>>, vector<16x128xf32>
    %c515 = arith.constant 515 : index
    %c0_132 = arith.constant 0 : index
    %129 = vector.load %arg5[%c515, %c0_132] : memref<521x128xf32, #tpu.memory_space<vmem>>, vector<1x128xf32>
    %130 = vector.broadcast %129 : vector<1x128xf32> to vector<16x128xf32>
    %131 = arith.mulf %128, %130 : vector<16x128xf32>
    %c48_133 = arith.constant 48 : index
    %c0_134 = arith.constant 0 : index
    %132 = vector.load %arg11[%c48_133, %c0_134] : memref<145x128xf32, #tpu.memory_space<vmem>>, vector<16x128xf32>
    tpu.vector_store %arg11[%c48_133, %c0_134], %131 {strides = array<i32>} : memref<145x128xf32, #tpu.memory_space<vmem>>, vector<16x128xf32>,
    %c0_135 = arith.constant 0 : index
    %c128_136 = arith.constant 128 : index
    %133 = vector.load %arg9[%c0_135, %c128_136] : memref<16x384xf32, #tpu.memory_space<vmem>>, vector<16x128xf32>
    %c64_137 = arith.constant 64 : index
    %c0_138 = arith.constant 0 : index
    %134 = vector.load %arg11[%c64_137, %c0_138] : memref<145x128xf32, #tpu.memory_space<vmem>>, vector<16x128xf32>
    tpu.vector_store %arg11[%c64_137, %c0_138], %133 {strides = array<i32>} : memref<145x128xf32, #tpu.memory_space<vmem>>, vector<16x128xf32>,
    %c0_139 = arith.constant 0 : index
    %c129_140 = arith.constant 129 : index
    %135 = vector.load %arg9[%c0_139, %c129_140] : memref<16x384xf32, #tpu.memory_space<vmem>>, vector<16x128xf32>
    %c517 = arith.constant 517 : index
    %c0_141 = arith.constant 0 : index
    %136 = vector.load %arg5[%c517, %c0_141] : memref<521x128xf32, #tpu.memory_space<vmem>>, vector<1x128xf32>
    %137 = vector.broadcast %136 : vector<1x128xf32> to vector<16x128xf32>
    %138 = arith.mulf %135, %137 : vector<16x128xf32>
    %c80 = arith.constant 80 : index
    %c0_142 = arith.constant 0 : index
    %139 = vector.load %arg11[%c80, %c0_142] : memref<145x128xf32, #tpu.memory_space<vmem>>, vector<16x128xf32>
    tpu.vector_store %arg11[%c80, %c0_142], %138 {strides = array<i32>} : memref<145x128xf32, #tpu.memory_space<vmem>>, vector<16x128xf32>,
    %c0_143 = arith.constant 0 : index
    %c135_144 = arith.constant 135 : index
    %140 = vector.load %arg9[%c0_143, %c135_144] : memref<16x384xf32, #tpu.memory_space<vmem>>, vector<16x128xf32>
    %c518 = arith.constant 518 : index
    %c0_145 = arith.constant 0 : index
    %141 = vector.load %arg5[%c518, %c0_145] : memref<521x128xf32, #tpu.memory_space<vmem>>, vector<1x128xf32>
    %142 = vector.broadcast %141 : vector<1x128xf32> to vector<16x128xf32>
    %143 = arith.mulf %140, %142 : vector<16x128xf32>
    %c96 = arith.constant 96 : index
    %c0_146 = arith.constant 0 : index
    %144 = vector.load %arg11[%c96, %c0_146] : memref<145x128xf32, #tpu.memory_space<vmem>>, vector<16x128xf32>
    tpu.vector_store %arg11[%c96, %c0_146], %143 {strides = array<i32>} : memref<145x128xf32, #tpu.memory_space<vmem>>, vector<16x128xf32>,
    %c0_147 = arith.constant 0 : index
    %c136_148 = arith.constant 136 : index
    %145 = vector.load %arg9[%c0_147, %c136_148] : memref<16x384xf32, #tpu.memory_space<vmem>>, vector<16x128xf32>
    %c519 = arith.constant 519 : index
    %c0_149 = arith.constant 0 : index
    %146 = vector.load %arg5[%c519, %c0_149] : memref<521x128xf32, #tpu.memory_space<vmem>>, vector<1x128xf32>
    %147 = vector.broadcast %146 : vector<1x128xf32> to vector<16x128xf32>
    %148 = arith.mulf %145, %147 : vector<16x128xf32>
    %c112_150 = arith.constant 112 : index
    %c0_151 = arith.constant 0 : index
    %149 = vector.load %arg11[%c112_150, %c0_151] : memref<145x128xf32, #tpu.memory_space<vmem>>, vector<16x128xf32>
    tpu.vector_store %arg11[%c112_150, %c0_151], %148 {strides = array<i32>} : memref<145x128xf32, #tpu.memory_space<vmem>>, vector<16x128xf32>,
    %c0_152 = arith.constant 0 : index
    %c137 = arith.constant 137 : index
    %150 = vector.load %arg9[%c0_152, %c137] : memref<16x384xf32, #tpu.memory_space<vmem>>, vector<16x128xf32>
    %c520 = arith.constant 520 : index
    %c0_153 = arith.constant 0 : index
    %151 = vector.load %arg5[%c520, %c0_153] : memref<521x128xf32, #tpu.memory_space<vmem>>, vector<1x128xf32>
    %152 = vector.broadcast %151 : vector<1x128xf32> to vector<16x128xf32>
    %153 = arith.mulf %150, %152 : vector<16x128xf32>
    %c128_154 = arith.constant 128 : index
    %c0_155 = arith.constant 0 : index
    %154 = vector.load %arg11[%c128_154, %c0_155] : memref<145x128xf32, #tpu.memory_space<vmem>>, vector<16x128xf32>
    tpu.vector_store %arg11[%c128_154, %c0_155], %153 {strides = array<i32>} : memref<145x128xf32, #tpu.memory_space<vmem>>, vector<16x128xf32>,
    %c32_156 = arith.constant 32 : index
    %c0_157 = arith.constant 0 : index
    %155 = vector.load %arg3[%c32_156, %c0_157] : memref<72x145xf32, #tpu.memory_space<vmem>>, vector<16x145xf32>
    %c0_158 = arith.constant 0 : index
    %c0_159 = arith.constant 0 : index
    %156 = vector.load %arg11[%c0_158, %c0_159] : memref<145x128xf32, #tpu.memory_space<vmem>>, vector<145x128xf32>
    %cst_160 = arith.constant dense<0.000000e+00> : vector<16x128xf32>
    %157 = tpu.matmul %155, %156, %cst_160 {dimension_numbers = #tpu.dot_dimension_numbers<[1], [0], [0], [1], [0, 0, 1, 1], [], []>} : vector<16x145xf32>, vector<145x128xf32>, vector<16x128xf32> -> vector<16x128xf32>
    %cst_161 = arith.constant 0.000000e+00 : f32
    %158 = vector.broadcast %cst_161 : f32 to vector<16x128xf32>
    %159 = arith.maximumf %157, %158 : vector<16x128xf32>
    %c0_162 = arith.constant 0 : index
    %c128_163 = arith.constant 128 : index
    %160 = vector.load %arg9[%c0_162, %c128_163] : memref<16x384xf32, #tpu.memory_space<vmem>>, vector<16x128xf32>
    tpu.vector_store %arg9[%c0_162, %c128_163], %159 {strides = array<i32>} : memref<16x384xf32, #tpu.memory_space<vmem>>, vector<16x128xf32>,
    %c0_164 = arith.constant 0 : index
    %c119_165 = arith.constant 119 : index
    %161 = vector.load %arg9[%c0_164, %c119_165] : memref<16x384xf32, #tpu.memory_space<vmem>>, vector<16x128xf32>
    %c512_166 = arith.constant 512 : index
    %c0_167 = arith.constant 0 : index
    %162 = vector.load %arg5[%c512_166, %c0_167] : memref<521x128xf32, #tpu.memory_space<vmem>>, vector<1x128xf32>
    %163 = vector.broadcast %162 : vector<1x128xf32> to vector<16x128xf32>
    %164 = arith.mulf %161, %163 : vector<16x128xf32>
    %c0_168 = arith.constant 0 : index
    %c0_169 = arith.constant 0 : index
    %165 = vector.load %arg11[%c0_168, %c0_169] : memref<145x128xf32, #tpu.memory_space<vmem>>, vector<16x128xf32>
    tpu.vector_store %arg11[%c0_168, %c0_169], %164 {strides = array<i32>} : memref<145x128xf32, #tpu.memory_space<vmem>>, vector<16x128xf32>,
    %c0_170 = arith.constant 0 : index
    %c120_171 = arith.constant 120 : index
    %166 = vector.load %arg9[%c0_170, %c120_171] : memref<16x384xf32, #tpu.memory_space<vmem>>, vector<16x128xf32>
    %c513_172 = arith.constant 513 : index
    %c0_173 = arith.constant 0 : index
    %167 = vector.load %arg5[%c513_172, %c0_173] : memref<521x128xf32, #tpu.memory_space<vmem>>, vector<1x128xf32>
    %168 = vector.broadcast %167 : vector<1x128xf32> to vector<16x128xf32>
    %169 = arith.mulf %166, %168 : vector<16x128xf32>
    %c16_174 = arith.constant 16 : index
    %c0_175 = arith.constant 0 : index
    %170 = vector.load %arg11[%c16_174, %c0_175] : memref<145x128xf32, #tpu.memory_space<vmem>>, vector<16x128xf32>
    tpu.vector_store %arg11[%c16_174, %c0_175], %169 {strides = array<i32>} : memref<145x128xf32, #tpu.memory_space<vmem>>, vector<16x128xf32>,
    %c0_176 = arith.constant 0 : index
    %c121_177 = arith.constant 121 : index
    %171 = vector.load %arg9[%c0_176, %c121_177] : memref<16x384xf32, #tpu.memory_space<vmem>>, vector<16x128xf32>
    %c514_178 = arith.constant 514 : index
    %c0_179 = arith.constant 0 : index
    %172 = vector.load %arg5[%c514_178, %c0_179] : memref<521x128xf32, #tpu.memory_space<vmem>>, vector<1x128xf32>
    %173 = vector.broadcast %172 : vector<1x128xf32> to vector<16x128xf32>
    %174 = arith.mulf %171, %173 : vector<16x128xf32>
    %c32_180 = arith.constant 32 : index
    %c0_181 = arith.constant 0 : index
    %175 = vector.load %arg11[%c32_180, %c0_181] : memref<145x128xf32, #tpu.memory_space<vmem>>, vector<16x128xf32>
    tpu.vector_store %arg11[%c32_180, %c0_181], %174 {strides = array<i32>} : memref<145x128xf32, #tpu.memory_space<vmem>>, vector<16x128xf32>,
    %c0_182 = arith.constant 0 : index
    %c127_183 = arith.constant 127 : index
    %176 = vector.load %arg9[%c0_182, %c127_183] : memref<16x384xf32, #tpu.memory_space<vmem>>, vector<16x128xf32>
    %c515_184 = arith.constant 515 : index
    %c0_185 = arith.constant 0 : index
    %177 = vector.load %arg5[%c515_184, %c0_185] : memref<521x128xf32, #tpu.memory_space<vmem>>, vector<1x128xf32>
    %178 = vector.broadcast %177 : vector<1x128xf32> to vector<16x128xf32>
    %179 = arith.mulf %176, %178 : vector<16x128xf32>
    %c48_186 = arith.constant 48 : index
    %c0_187 = arith.constant 0 : index
    %180 = vector.load %arg11[%c48_186, %c0_187] : memref<145x128xf32, #tpu.memory_space<vmem>>, vector<16x128xf32>
    tpu.vector_store %arg11[%c48_186, %c0_187], %179 {strides = array<i32>} : memref<145x128xf32, #tpu.memory_space<vmem>>, vector<16x128xf32>,
    %c0_188 = arith.constant 0 : index
    %c128_189 = arith.constant 128 : index
    %181 = vector.load %arg9[%c0_188, %c128_189] : memref<16x384xf32, #tpu.memory_space<vmem>>, vector<16x128xf32>
    %c64_190 = arith.constant 64 : index
    %c0_191 = arith.constant 0 : index
    %182 = vector.load %arg11[%c64_190, %c0_191] : memref<145x128xf32, #tpu.memory_space<vmem>>, vector<16x128xf32>
    tpu.vector_store %arg11[%c64_190, %c0_191], %181 {strides = array<i32>} : memref<145x128xf32, #tpu.memory_space<vmem>>, vector<16x128xf32>,
    %c0_192 = arith.constant 0 : index
    %c129_193 = arith.constant 129 : index
    %183 = vector.load %arg9[%c0_192, %c129_193] : memref<16x384xf32, #tpu.memory_space<vmem>>, vector<16x128xf32>
    %c517_194 = arith.constant 517 : index
    %c0_195 = arith.constant 0 : index
    %184 = vector.load %arg5[%c517_194, %c0_195] : memref<521x128xf32, #tpu.memory_space<vmem>>, vector<1x128xf32>
    %185 = vector.broadcast %184 : vector<1x128xf32> to vector<16x128xf32>
    %186 = arith.mulf %183, %185 : vector<16x128xf32>
    %c80_196 = arith.constant 80 : index
    %c0_197 = arith.constant 0 : index
    %187 = vector.load %arg11[%c80_196, %c0_197] : memref<145x128xf32, #tpu.memory_space<vmem>>, vector<16x128xf32>
    tpu.vector_store %arg11[%c80_196, %c0_197], %186 {strides = array<i32>} : memref<145x128xf32, #tpu.memory_space<vmem>>, vector<16x128xf32>,
    %c0_198 = arith.constant 0 : index
    %c135_199 = arith.constant 135 : index
    %188 = vector.load %arg9[%c0_198, %c135_199] : memref<16x384xf32, #tpu.memory_space<vmem>>, vector<16x128xf32>
    %c518_200 = arith.constant 518 : index
    %c0_201 = arith.constant 0 : index
    %189 = vector.load %arg5[%c518_200, %c0_201] : memref<521x128xf32, #tpu.memory_space<vmem>>, vector<1x128xf32>
    %190 = vector.broadcast %189 : vector<1x128xf32> to vector<16x128xf32>
    %191 = arith.mulf %188, %190 : vector<16x128xf32>
    %c96_202 = arith.constant 96 : index
    %c0_203 = arith.constant 0 : index
    %192 = vector.load %arg11[%c96_202, %c0_203] : memref<145x128xf32, #tpu.memory_space<vmem>>, vector<16x128xf32>
    tpu.vector_store %arg11[%c96_202, %c0_203], %191 {strides = array<i32>} : memref<145x128xf32, #tpu.memory_space<vmem>>, vector<16x128xf32>,
    %c0_204 = arith.constant 0 : index
    %c136_205 = arith.constant 136 : index
    %193 = vector.load %arg9[%c0_204, %c136_205] : memref<16x384xf32, #tpu.memory_space<vmem>>, vector<16x128xf32>
    %c519_206 = arith.constant 519 : index
    %c0_207 = arith.constant 0 : index
    %194 = vector.load %arg5[%c519_206, %c0_207] : memref<521x128xf32, #tpu.memory_space<vmem>>, vector<1x128xf32>
    %195 = vector.broadcast %194 : vector<1x128xf32> to vector<16x128xf32>
    %196 = arith.mulf %193, %195 : vector<16x128xf32>
    %c112_208 = arith.constant 112 : index
    %c0_209 = arith.constant 0 : index
    %197 = vector.load %arg11[%c112_208, %c0_209] : memref<145x128xf32, #tpu.memory_space<vmem>>, vector<16x128xf32>
    tpu.vector_store %arg11[%c112_208, %c0_209], %196 {strides = array<i32>} : memref<145x128xf32, #tpu.memory_space<vmem>>, vector<16x128xf32>,
    %c0_210 = arith.constant 0 : index
    %c137_211 = arith.constant 137 : index
    %198 = vector.load %arg9[%c0_210, %c137_211] : memref<16x384xf32, #tpu.memory_space<vmem>>, vector<16x128xf32>
    %c520_212 = arith.constant 520 : index
    %c0_213 = arith.constant 0 : index
    %199 = vector.load %arg5[%c520_212, %c0_213] : memref<521x128xf32, #tpu.memory_space<vmem>>, vector<1x128xf32>
    %200 = vector.broadcast %199 : vector<1x128xf32> to vector<16x128xf32>
    %201 = arith.mulf %198, %200 : vector<16x128xf32>
    %c128_214 = arith.constant 128 : index
    %c0_215 = arith.constant 0 : index
    %202 = vector.load %arg11[%c128_214, %c0_215] : memref<145x128xf32, #tpu.memory_space<vmem>>, vector<16x128xf32>
    tpu.vector_store %arg11[%c128_214, %c0_215], %201 {strides = array<i32>} : memref<145x128xf32, #tpu.memory_space<vmem>>, vector<16x128xf32>,
    %c48_216 = arith.constant 48 : index
    %c0_217 = arith.constant 0 : index
    %203 = vector.load %arg3[%c48_216, %c0_217] : memref<72x145xf32, #tpu.memory_space<vmem>>, vector<16x145xf32>
    %c0_218 = arith.constant 0 : index
    %c0_219 = arith.constant 0 : index
    %204 = vector.load %arg11[%c0_218, %c0_219] : memref<145x128xf32, #tpu.memory_space<vmem>>, vector<145x128xf32>
    %cst_220 = arith.constant dense<0.000000e+00> : vector<16x128xf32>
    %205 = tpu.matmul %203, %204, %cst_220 {dimension_numbers = #tpu.dot_dimension_numbers<[1], [0], [0], [1], [0, 0, 1, 1], [], []>} : vector<16x145xf32>, vector<145x128xf32>, vector<16x128xf32> -> vector<16x128xf32>
    %206 = arith.addf %205, %111 : vector<16x128xf32>
    %cst_221 = arith.constant 0.000000e+00 : f32
    %207 = vector.broadcast %cst_221 : f32 to vector<16x128xf32>
    %208 = arith.maximumf %206, %207 : vector<16x128xf32>
    %c0_222 = arith.constant 0 : index
    %c111_223 = arith.constant 111 : index
    %209 = vector.load %arg8[%c0_222, %c111_223] : memref<8x768xf32, #tpu.memory_space<vmem>>, vector<8x512xf32>
    %c128_224 = arith.constant 128 : index
    %c0_225 = arith.constant 0 : index
    %210 = vector.load %arg4[%c128_224, %c0_225] : memref<137x512xf32, #tpu.memory_space<vmem>>, vector<1x512xf32>
    %211 = vector.broadcast %210 : vector<1x512xf32> to vector<8x512xf32>
    %212 = arith.mulf %209, %211 : vector<8x512xf32>
    %c0_226 = arith.constant 0 : index
    %c0_227 = arith.constant 0 : index
    %213 = vector.load %arg10[%c0_226, %c0_227] : memref<73x512xf32, #tpu.memory_space<vmem>>, vector<8x512xf32>
    tpu.vector_store %arg10[%c0_226, %c0_227], %212 {strides = array<i32>} : memref<73x512xf32, #tpu.memory_space<vmem>>, vector<8x512xf32>,
    %c0_228 = arith.constant 0 : index
    %c112_229 = arith.constant 112 : index
    %214 = vector.load %arg8[%c0_228, %c112_229] : memref<8x768xf32, #tpu.memory_space<vmem>>, vector<8x512xf32>
    %c129_230 = arith.constant 129 : index
    %c0_231 = arith.constant 0 : index
    %215 = vector.load %arg4[%c129_230, %c0_231] : memref<137x512xf32, #tpu.memory_space<vmem>>, vector<1x512xf32>
    %216 = vector.broadcast %215 : vector<1x512xf32> to vector<8x512xf32>
    %217 = arith.mulf %214, %216 : vector<8x512xf32>
    %c8_232 = arith.constant 8 : index
    %c0_233 = arith.constant 0 : index
    %218 = vector.load %arg10[%c8_232, %c0_233] : memref<73x512xf32, #tpu.memory_space<vmem>>, vector<8x512xf32>
    tpu.vector_store %arg10[%c8_232, %c0_233], %217 {strides = array<i32>} : memref<73x512xf32, #tpu.memory_space<vmem>>, vector<8x512xf32>,
    %c0_234 = arith.constant 0 : index
    %c113_235 = arith.constant 113 : index
    %219 = vector.load %arg8[%c0_234, %c113_235] : memref<8x768xf32, #tpu.memory_space<vmem>>, vector<8x512xf32>
    %c130_236 = arith.constant 130 : index
    %c0_237 = arith.constant 0 : index
    %220 = vector.load %arg4[%c130_236, %c0_237] : memref<137x512xf32, #tpu.memory_space<vmem>>, vector<1x512xf32>
    %221 = vector.broadcast %220 : vector<1x512xf32> to vector<8x512xf32>
    %222 = arith.mulf %219, %221 : vector<8x512xf32>
    %c16_238 = arith.constant 16 : index
    %c0_239 = arith.constant 0 : index
    %223 = vector.load %arg10[%c16_238, %c0_239] : memref<73x512xf32, #tpu.memory_space<vmem>>, vector<8x512xf32>
    tpu.vector_store %arg10[%c16_238, %c0_239], %222 {strides = array<i32>} : memref<73x512xf32, #tpu.memory_space<vmem>>, vector<8x512xf32>,
    %c0_240 = arith.constant 0 : index
    %c127_241 = arith.constant 127 : index
    %224 = vector.load %arg8[%c0_240, %c127_241] : memref<8x768xf32, #tpu.memory_space<vmem>>, vector<8x512xf32>
    %c131_242 = arith.constant 131 : index
    %c0_243 = arith.constant 0 : index
    %225 = vector.load %arg4[%c131_242, %c0_243] : memref<137x512xf32, #tpu.memory_space<vmem>>, vector<1x512xf32>
    %226 = vector.broadcast %225 : vector<1x512xf32> to vector<8x512xf32>
    %227 = arith.mulf %224, %226 : vector<8x512xf32>
    %c24_244 = arith.constant 24 : index
    %c0_245 = arith.constant 0 : index
    %228 = vector.load %arg10[%c24_244, %c0_245] : memref<73x512xf32, #tpu.memory_space<vmem>>, vector<8x512xf32>
    tpu.vector_store %arg10[%c24_244, %c0_245], %227 {strides = array<i32>} : memref<73x512xf32, #tpu.memory_space<vmem>>, vector<8x512xf32>,
    %c0_246 = arith.constant 0 : index
    %c128_247 = arith.constant 128 : index
    %229 = vector.load %arg8[%c0_246, %c128_247] : memref<8x768xf32, #tpu.memory_space<vmem>>, vector<8x512xf32>
    %c32_248 = arith.constant 32 : index
    %c0_249 = arith.constant 0 : index
    %230 = vector.load %arg10[%c32_248, %c0_249] : memref<73x512xf32, #tpu.memory_space<vmem>>, vector<8x512xf32>
    tpu.vector_store %arg10[%c32_248, %c0_249], %229 {strides = array<i32>} : memref<73x512xf32, #tpu.memory_space<vmem>>, vector<8x512xf32>,
    %c0_250 = arith.constant 0 : index
    %c129_251 = arith.constant 129 : index
    %231 = vector.load %arg8[%c0_250, %c129_251] : memref<8x768xf32, #tpu.memory_space<vmem>>, vector<8x512xf32>
    %c133_252 = arith.constant 133 : index
    %c0_253 = arith.constant 0 : index
    %232 = vector.load %arg4[%c133_252, %c0_253] : memref<137x512xf32, #tpu.memory_space<vmem>>, vector<1x512xf32>
    %233 = vector.broadcast %232 : vector<1x512xf32> to vector<8x512xf32>
    %234 = arith.mulf %231, %233 : vector<8x512xf32>
    %c40_254 = arith.constant 40 : index
    %c0_255 = arith.constant 0 : index
    %235 = vector.load %arg10[%c40_254, %c0_255] : memref<73x512xf32, #tpu.memory_space<vmem>>, vector<8x512xf32>
    tpu.vector_store %arg10[%c40_254, %c0_255], %234 {strides = array<i32>} : memref<73x512xf32, #tpu.memory_space<vmem>>, vector<8x512xf32>,
    %c0_256 = arith.constant 0 : index
    %c143_257 = arith.constant 143 : index
    %236 = vector.load %arg8[%c0_256, %c143_257] : memref<8x768xf32, #tpu.memory_space<vmem>>, vector<8x512xf32>
    %c134_258 = arith.constant 134 : index
    %c0_259 = arith.constant 0 : index
    %237 = vector.load %arg4[%c134_258, %c0_259] : memref<137x512xf32, #tpu.memory_space<vmem>>, vector<1x512xf32>
    %238 = vector.broadcast %237 : vector<1x512xf32> to vector<8x512xf32>
    %239 = arith.mulf %236, %238 : vector<8x512xf32>
    %c48_260 = arith.constant 48 : index
    %c0_261 = arith.constant 0 : index
    %240 = vector.load %arg10[%c48_260, %c0_261] : memref<73x512xf32, #tpu.memory_space<vmem>>, vector<8x512xf32>
    tpu.vector_store %arg10[%c48_260, %c0_261], %239 {strides = array<i32>} : memref<73x512xf32, #tpu.memory_space<vmem>>, vector<8x512xf32>,
    %c0_262 = arith.constant 0 : index
    %c144_263 = arith.constant 144 : index
    %241 = vector.load %arg8[%c0_262, %c144_263] : memref<8x768xf32, #tpu.memory_space<vmem>>, vector<8x512xf32>
    %c135_264 = arith.constant 135 : index
    %c0_265 = arith.constant 0 : index
    %242 = vector.load %arg4[%c135_264, %c0_265] : memref<137x512xf32, #tpu.memory_space<vmem>>, vector<1x512xf32>
    %243 = vector.broadcast %242 : vector<1x512xf32> to vector<8x512xf32>
    %244 = arith.mulf %241, %243 : vector<8x512xf32>
    %c56_266 = arith.constant 56 : index
    %c0_267 = arith.constant 0 : index
    %245 = vector.load %arg10[%c56_266, %c0_267] : memref<73x512xf32, #tpu.memory_space<vmem>>, vector<8x512xf32>
    tpu.vector_store %arg10[%c56_266, %c0_267], %244 {strides = array<i32>} : memref<73x512xf32, #tpu.memory_space<vmem>>, vector<8x512xf32>,
    %c0_268 = arith.constant 0 : index
    %c145_269 = arith.constant 145 : index
    %246 = vector.load %arg8[%c0_268, %c145_269] : memref<8x768xf32, #tpu.memory_space<vmem>>, vector<8x512xf32>
    %c136_270 = arith.constant 136 : index
    %c0_271 = arith.constant 0 : index
    %247 = vector.load %arg4[%c136_270, %c0_271] : memref<137x512xf32, #tpu.memory_space<vmem>>, vector<1x512xf32>
    %248 = vector.broadcast %247 : vector<1x512xf32> to vector<8x512xf32>
    %249 = arith.mulf %246, %248 : vector<8x512xf32>
    %c64_272 = arith.constant 64 : index
    %c0_273 = arith.constant 0 : index
    %250 = vector.load %arg10[%c64_272, %c0_273] : memref<73x512xf32, #tpu.memory_space<vmem>>, vector<8x512xf32>
    tpu.vector_store %arg10[%c64_272, %c0_273], %249 {strides = array<i32>} : memref<73x512xf32, #tpu.memory_space<vmem>>, vector<8x512xf32>,
    %c16_274 = arith.constant 16 : index
    %c0_275 = arith.constant 0 : index
    %251 = vector.load %arg3[%c16_274, %c0_275] : memref<72x145xf32, #tpu.memory_space<vmem>>, vector<16x73xf32>
    %c0_276 = arith.constant 0 : index
    %c0_277 = arith.constant 0 : index
    %252 = vector.load %arg10[%c0_276, %c0_277] : memref<73x512xf32, #tpu.memory_space<vmem>>, vector<73x512xf32>
    %cst_278 = arith.constant dense<0.000000e+00> : vector<16x512xf32>
    %253 = tpu.matmul %251, %252, %cst_278 {dimension_numbers = #tpu.dot_dimension_numbers<[1], [0], [0], [1], [0, 0, 1, 1], [], []>} : vector<16x73xf32>, vector<73x512xf32>, vector<16x512xf32> -> vector<16x512xf32>
    %c0_279 = arith.constant 0 : index
    %c0_280 = arith.constant 0 : index
    %254 = vector.load %arg5[%c0_279, %c0_280] : memref<521x128xf32, #tpu.memory_space<vmem>>, vector<512x128xf32>
    %cst_281 = arith.constant dense<0.000000e+00> : vector<16x128xf32>
    %255 = tpu.matmul %253, %254, %cst_281 {dimension_numbers = #tpu.dot_dimension_numbers<[1], [0], [0], [1], [0, 0, 1, 1], [], []>} : vector<16x512xf32>, vector<512x128xf32>, vector<16x128xf32> -> vector<16x128xf32>
    %256 = arith.addf %255, %208 : vector<16x128xf32>
    %cst_282 = arith.constant 0.000000e+00 : f32
    %257 = vector.broadcast %cst_282 : f32 to vector<16x128xf32>
    %258 = arith.maximumf %256, %257 : vector<16x128xf32>
    %c0_283 = arith.constant 0 : index
    %c0_284 = arith.constant 0 : index
    %259 = vector.load %arg7[%c0_283, %c0_284] : memref<16x128xf32, #tpu.memory_space<vmem>>, vector<16x128xf32>
    tpu.vector_store %arg7[%c0_283, %c0_284], %258 {strides = array<i32>} : memref<16x128xf32, #tpu.memory_space<vmem>>, vector<16x128xf32>,
    %c64_285 = arith.constant 64 : index
    %c0_286 = arith.constant 0 : index
    %260 = vector.load %arg3[%c64_285, %c0_286] : memref<72x145xf32, #tpu.memory_space<vmem>>, vector<8x16xf32>
    %cst_287 = arith.constant dense<0.000000e+00> : vector<8x128xf32>
    %261 = tpu.matmul %260, %208, %cst_287 {dimension_numbers = #tpu.dot_dimension_numbers<[1], [0], [0], [1], [0, 0, 1, 1], [], []>} : vector<8x16xf32>, vector<16x128xf32>, vector<8x128xf32> -> vector<8x128xf32>
    %c64_288 = arith.constant 64 : index
    %c16_289 = arith.constant 16 : index
    %262 = vector.load %arg3[%c64_288, %c16_289] : memref<72x145xf32, #tpu.memory_space<vmem>>, vector<8x1xf32>
    %263 = vector.broadcast %262 : vector<8x1xf32> to vector<8x128xf32>
    %264 = arith.addf %261, %263 : vector<8x128xf32>
    %c0_290 = arith.constant 0 : index
    %c0_291 = arith.constant 0 : index
    %265 = vector.load %arg4[%c0_290, %c0_291] : memref<137x512xf32, #tpu.memory_space<vmem>>, vector<128x512xf32>
    %cst_292 = arith.constant dense<0.000000e+00> : vector<8x512xf32>
    %266 = tpu.matmul %264, %265, %cst_292 {dimension_numbers = #tpu.dot_dimension_numbers<[1], [0], [0], [1], [0, 0, 1, 1], [], []>} : vector<8x128xf32>, vector<128x512xf32>, vector<8x512xf32> -> vector<8x512xf32>
    %267 = arith.addf %109, %266 : vector<8x512xf32>
    %cst_293 = arith.constant 0.000000e+00 : f32
    %268 = vector.broadcast %cst_293 : f32 to vector<8x512xf32>
    %269 = arith.maximumf %267, %268 : vector<8x512xf32>
    %c0_294 = arith.constant 0 : index
    %c0_295 = arith.constant 0 : index
    %270 = vector.load %arg6[%c0_294, %c0_295] : memref<8x512xf32, #tpu.memory_space<vmem>>, vector<8x512xf32>
    tpu.vector_store %arg6[%c0_294, %c0_295], %269 {strides = array<i32>} : memref<8x512xf32, #tpu.memory_space<vmem>>, vector<8x512xf32>,
    return
  }
  func.func @transform_0(%arg0: i32) -> (i32, i32) {
    %c0_i32 = arith.constant 0 : i32
    %c0_i32_0 = arith.constant 0 : i32
    %c0_i32_1 = arith.constant 0 : i32
    return %c0_i32, %c0_i32_0 : i32, i32
  }
  func.func @transform_1(%arg0: i32) -> (i32, i32) {
    %c0_i32 = arith.constant 0 : i32
    %c0_i32_0 = arith.constant 0 : i32
    %c0_i32_1 = arith.constant 0 : i32
    return %c0_i32, %c0_i32_0 : i32, i32
  }
  func.func @transform_2(%arg0: i32) -> (i32, i32) {
    %c0_i32 = arith.constant 0 : i32
    %c0_i32_0 = arith.constant 0 : i32
    %c0_i32_1 = arith.constant 0 : i32
    return %c0_i32, %c0_i32_0 : i32, i32
  }
  func.func @transform_3(%arg0: i32) -> (i32, i32) {
    %c0_i32 = arith.constant 0 : i32
    %c0_i32_0 = arith.constant 0 : i32
    %c0_i32_1 = arith.constant 0 : i32
    return %c0_i32, %c0_i32_0 : i32, i32
  }
  func.func @transform_4(%arg0: i32) -> (i32, i32) {
    %c0_i32 = arith.constant 0 : i32
    %c0_i32_0 = arith.constant 0 : i32
    %c0_i32_1 = arith.constant 0 : i32
    return %c0_i32, %c0_i32_0 : i32, i32
  }
  func.func @transform_5(%arg0: i32) -> (i32, i32) {
    %c0_i32 = arith.constant 0 : i32
    %c0_i32_0 = arith.constant 0 : i32
    %c0_i32_1 = arith.constant 0 : i32
    return %c0_i32, %c0_i32_0 : i32, i32
  }
  func.func @transform_6(%arg0: i32) -> (i32, i32) {
    %c0_i32 = arith.constant 0 : i32
    %c0_i32_0 = arith.constant 0 : i32
    %c0_i32_1 = arith.constant 0 : i32
    return %c0_i32, %c0_i32_0 : i32, i32
  }
}

</mosaic_0001>

<llo_original>
// kernel: tpu_custom_call.1
$region0: #{tpu_custom_call.1}
  #allocation0 [shape = 'u32[]', space=smem, size = 0x4, offset = 0x4, fixed_abs, tag = 'smem constant byte address 0x4 - core index']
  #allocation1 [shape = 'u32[144,128]{1,0:T(1,128)}', space=vmem, size = 0x12000, scoped, tag = 'internal scratch']
  #allocation2 [shape = 'f32[8,768]{1,0:T(8,128)}', space=vmem, size = 0x6000, scoped, tag = 'scratch operand']
  #allocation3 [shape = 'f32[16,384]{1,0:T(8,128)}', space=vmem, size = 0x6000, scoped, tag = 'scratch operand']
  #allocation4 [shape = 'f32[73,512]{1,0:T(8,128)}', space=vmem, size = 0x28000, scoped, tag = 'scratch operand']
  #allocation5 [shape = 'f32[145,128]{1,0:T(8,128)}', space=vmem, size = 0x13000, scoped, tag = 'scratch operand']
  %s0 = inlined_call_operand.hbm [shape: f32[8,512], index: 0, kind: input, shape index: {}]
  %s1 = inlined_call_operand.hbm [shape: f32[16,128], index: 1, kind: input, shape index: {}]
  %s2 = inlined_call_operand.hbm [shape: f32[72,145], index: 2, kind: input, shape index: {}]
  %s3 = inlined_call_operand.hbm [shape: f32[137,512], index: 3, kind: input, shape index: {}]
  %s4 = inlined_call_operand.hbm [shape: f32[521,128], index: 4, kind: input, shape index: {}]
  %s5 = inlined_call_operand.hbm [shape: f32[8,512], index: 5, kind: output, shape index: {0}]
  %s6 = inlined_call_operand.hbm [shape: f32[16,128], index: 6, kind: output, shape index: {1}]
  %7 = xla_tuple %s5, %s6
  %s8 = sld [smem:[#allocation0]]
  $region58: #{tpu_custom_call.1} parent=0
    _
  %s10 = ssub.s32 1, %s8
  %s11 = scalar_select 0, %s10, %s8
  $region1: #{tpu_custom_call.1} parent=0
    #allocation6 [shape = 'u8[16384]{0}', space=vmem, size = 0x4000, scoped, tag = 'input window, operand 0, single buffered']
    #allocation7 [shape = 's32[1]{0}', space=sflag, size = 0x4, scoped, tag = 'scoped memory for tpu_custom_call.1']
    #allocation8 [shape = 's32[1]{0}', space=sflag, size = 0x4, scoped, tag = 'scoped memory for tpu_custom_call.1']
    #allocation9 [shape = 'u8[8192]{0}', space=vmem, size = 0x2000, scoped, tag = 'input window, operand 1, single buffered']
    #allocation10 [shape = 's32[1]{0}', space=sflag, size = 0x4, scoped, tag = 'scoped memory for tpu_custom_call.1']
    #allocation11 [shape = 'u8[73728]{0}', space=vmem, size = 0x12000, scoped, tag = 'input window, operand 2, single buffered']
    #allocation12 [shape = 'u8[294912]{0}', space=vmem, size = 0x48000, scoped, tag = 'input window, operand 3, single buffered']
    #allocation13 [shape = 's32[1]{0}', space=sflag, size = 0x4, scoped, tag = 'scoped memory for tpu_custom_call.1']
    #allocation14 [shape = 'u8[270336]{0}', space=vmem, size = 0x42000, scoped, tag = 'input window, operand 4, single buffered']
    #allocation15 [shape = 'u8[16384]{0}', space=vmem, size = 0x4000, scoped, tag = 'output window, operand 0, single buffered']
    #allocation16 [shape = 'u8[8192]{0}', space=vmem, size = 0x2000, scoped, tag = 'output window, operand 1, single buffered']
    #allocation17 [shape = 's32[1]{0}', space=sflag, size = 0x4, scoped, tag = 'scoped memory for tpu_custom_call.1']
    %12 = vsyncpa [#allocation7], 0
    %13 = vsyncpa [#allocation10], 0
    %14 = vsyncpa [#allocation13], 0
    %15 = vsyncpa [#allocation8], 0
    %16 = vsyncpa [#allocation17], 0
    // Predicated region
    $region2: #{tpu_custom_call.1} parent=1 // pred_check
      _
    $region3: #{tpu_custom_call.1} parent=1 // pred_check_branch
      %18 = sbr.rel (0) target = $region5
    $region4: #{tpu_custom_call.1} parent=1 // pred_region
      %s20 = ssub.s32 512, 512
      %21 = vsyncadd [#allocation7], %s20
      %s23 = sshll.u32 [#allocation6], 4
      %s24 = int_to_ptr.vmem [resolvable:$true] %s23
      %26 = dma.hbm_to_vmem [thread:$0]  %s0, 512, %s24, [#allocation7]
    $region5: #{tpu_custom_call.1} parent=1 // pred_fallthru
      _
    // Predicated region
    $region6: #{tpu_custom_call.1} parent=1 // pred_check
      _
    $region7: #{tpu_custom_call.1} parent=1 // pred_check_branch
      %28 = sbr.rel (0) target = $region9
    $region8: #{tpu_custom_call.1} parent=1 // pred_region
      %s30 = ssub.s32 256, 256
      %31 = vsyncadd [#allocation10], %s30
      %s32 = sshll.u32 [#allocation9], 4
      %s33 = int_to_ptr.vmem [resolvable:$true] %s32
      %38 = dma.hbm_to_vmem [thread:$0]  %s1, 256, %s33, [#allocation10], 128, 128, 8
    $region9: #{tpu_custom_call.1} parent=1 // pred_fallthru
      _
    // Predicated region
    $region10: #{tpu_custom_call.1} parent=1 // pred_check
      _
    $region11: #{tpu_custom_call.1} parent=1 // pred_check_branch
      %40 = sbr.rel (0) target = $region13
    $region12: #{tpu_custom_call.1} parent=1 // pred_region
      %s42 = ssub.s32 2304, 2304
      %43 = vsyncadd [#allocation10], %s42
      %s44 = sshll.u32 [#allocation11], 4
      %s45 = int_to_ptr.vmem [resolvable:$true] %s44
      %50 = dma.hbm_to_vmem [thread:$0]  %s2, 2304, %s45, [#allocation10], 256, 256, 16
    $region13: #{tpu_custom_call.1} parent=1 // pred_fallthru
      _
    // Predicated region
    $region14: #{tpu_custom_call.1} parent=1 // pred_check
      _
    $region15: #{tpu_custom_call.1} parent=1 // pred_check_branch
      %52 = sbr.rel (0) target = $region17
    $region16: #{tpu_custom_call.1} parent=1 // pred_region
      %s54 = ssub.s32 9216, 9216
      %55 = vsyncadd [#allocation13], %s54
      %s56 = sshll.u32 [#allocation12], 4
      %s57 = int_to_ptr.vmem [resolvable:$true] %s56
      %62 = dma.hbm_to_vmem [thread:$0]  %s3, 9216, %s57, [#allocation13], 512, 512, 32
    $region17: #{tpu_custom_call.1} parent=1 // pred_fallthru
      _
    // Predicated region
    $region18: #{tpu_custom_call.1} parent=1 // pred_check
      _
    $region19: #{tpu_custom_call.1} parent=1 // pred_check_branch
      %64 = sbr.rel (0) target = $region21
    $region20: #{tpu_custom_call.1} parent=1 // pred_region
      %s66 = ssub.s32 8448, 8448
      %67 = vsyncadd [#allocation13], %s66
      %s68 = sshll.u32 [#allocation14], 4
      %s69 = int_to_ptr.vmem [resolvable:$true] %s68
      %74 = dma.hbm_to_vmem [thread:$0]  %s4, 8448, %s69, [#allocation13], 128, 128, 8
    $region21: #{tpu_custom_call.1} parent=1 // pred_fallthru
      _
    // Predicated region
    $region22: #{tpu_custom_call.1} parent=1 // pred_check
      _
    $region23: #{tpu_custom_call.1} parent=1 // pred_check_branch
      %76 = sbr.rel (0) target = $region25
    $region24: #{tpu_custom_call.1} parent=1 // pred_region
      %77 = dma.done [#allocation7], 512
    $region25: #{tpu_custom_call.1} parent=1 // pred_fallthru
      _
    // Predicated region
    $region26: #{tpu_custom_call.1} parent=1 // pred_check
      _
    $region27: #{tpu_custom_call.1} parent=1 // pred_check_branch
      %79 = sbr.rel (0) target = $region29
    $region28: #{tpu_custom_call.1} parent=1 // pred_region
      %80 = dma.done [#allocation10], 256
    $region29: #{tpu_custom_call.1} parent=1 // pred_fallthru
      _
    // Predicated region
    $region30: #{tpu_custom_call.1} parent=1 // pred_check
      _
    $region31: #{tpu_custom_call.1} parent=1 // pred_check_branch
      %82 = sbr.rel (0) target = $region33
    $region32: #{tpu_custom_call.1} parent=1 // pred_region
      %83 = dma.done [#allocation10], 2304
    $region33: #{tpu_custom_call.1} parent=1 // pred_fallthru
      _
    // Predicated region
    $region34: #{tpu_custom_call.1} parent=1 // pred_check
      _
    $region35: #{tpu_custom_call.1} parent=1 // pred_check_branch
      %85 = sbr.rel (0) target = $region37
    $region36: #{tpu_custom_call.1} parent=1 // pred_region
      %86 = dma.done [#allocation13], 9216
    $region37: #{tpu_custom_call.1} parent=1 // pred_fallthru
      _
    // Predicated region
    $region38: #{tpu_custom_call.1} parent=1 // pred_check
      _
    $region39: #{tpu_custom_call.1} parent=1 // pred_check_branch
      %88 = sbr.rel (0) target = $region41
    $region40: #{tpu_custom_call.1} parent=1 // pred_region
      %89 = dma.done [#allocation13], 8448
    $region41: #{tpu_custom_call.1} parent=1 // pred_fallthru
      _
    %90 = vst [vmem:[#allocation2] sm:$0xff] 0.0
    %91 = vst [vmem:[#allocation2 + $0x28] sm:$0xff] 0.0
    %92 = vst [vmem:[#allocation3] sm:$0xff] 0.0
    %93 = vst [vmem:[#allocation3 + $0x18] sm:$0xff] 0.0
    %94 = vst [vmem:[#allocation3 + $0x10] sm:$0xff] 0.0
    %95 = vst [vmem:[#allocation3 + $0x28] sm:$0xff] 0.0
    %v96 = vlaneseq
    %vm97 = vcmp.ge.s32.totalorder %v96, 0
    %vm98 = vcmp.lt.s32.totalorder %v96, 512
    %vm99 = vmand %vm97, %vm98
    %s100 = scalar_lea.vmem [#allocation4], 288
    %101 = vst.msk [vmem:[%s100] ss:$8 sm:$0xf] %vm99, 1.0
    %102 = vst.msk [vmem:[%s100] ss:$8 sm:$0x0] %vm99, 1.0
    %103 = vst [vmem:[#allocation5 + $0x90] sm:$0x1] 1.0
    %v104 = vld [vmem:[#allocation6] sm:$0xff]
    %v105 = vld [vmem:[#allocation6 + $0x8] sm:$0xff]
    %v106 = vld [vmem:[#allocation6 + $0x10] sm:$0xff]
    %v107 = vld [vmem:[#allocation6 + $0x18] sm:$0xff]
    %108 = vst [vmem:[#allocation2 + $0x8] sm:$0xff] %v104
    %109 = vst [vmem:[#allocation2 + $0x10] sm:$0xff] %v105
    %110 = vst [vmem:[#allocation2 + $0x18] sm:$0xff] %v106
    %111 = vst [vmem:[#allocation2 + $0x20] sm:$0xff] %v107
    %v112 = vld [vmem:[#allocation2] sm:$0xff]
    %v113 = vld [vmem:[#allocation2 + $0x8] sm:$0xff]
    %v114 = vld [vmem:[#allocation2 + $0x10] sm:$0xff]
    %v115 = vld [vmem:[#allocation2 + $0x18] sm:$0xff]
    %v116 = vld [vmem:[#allocation2 + $0x20] sm:$0xff]
    %s117 = scalar_lea.vmem [#allocation12], 512
    %v118 = vld [vmem:[%s117] ss:$8 sm:$0xf]
    %v120 = vlaneseq
    %v121 = vshrl.u32 %v120, 7
    %v122 = vsub.s32 0, %v121
    %v123 = vrot.slane %v118, %v122
    %v124 = vlaneseq
    %v125 = vshrl.u32 %v124, 7
    %v126 = vsub.s32 1, %v125
    %v127 = vrot.slane %v118, %v126
    %v128 = vlaneseq
    %v129 = vshrl.u32 %v128, 7
    %v130 = vsub.s32 2, %v129
    %v131 = vrot.slane %v118, %v130
    %v132 = vlaneseq
    %v133 = vshrl.u32 %v132, 7
    %v134 = vsub.s32 3, %v133
    %v135 = vrot.slane %v118, %v134
    %136 = vrot.lane.b32.xlu0 %v123, 111
    %v137 = vpop.permute.xlu0 %136
    %138 = vrot.lane.b32.xlu0 %v127, 111
    %v139 = vpop.permute.xlu0 %138
    %140 = vrot.lane.b32.xlu0 %v131, 111
    %v141 = vpop.permute.xlu0 %140
    %142 = vrot.lane.b32.xlu0 %v135, 111
    %v143 = vpop.permute.xlu0 %142
    %vm144 = vcmask 908288
    %v145 = vsel %vm144, %v137, %v139
    %v146 = vsel %vm144, %v139, %v141
    %v147 = vsel %vm144, %v141, %v143
    %v153 = vmul.f32 %v112, %v137
    %v154 = vmul.f32 %v113, %v145
    %v155 = vmul.f32 %v114, %v146
    %v156 = vmul.f32 %v115, %v147
    %v157 = vmul.f32 %v116, %v143
    %163 = vrot.lane.b32.xlu0 %v153, 17
    %v164 = vpop.permute.xlu0 %163
    %165 = vrot.lane.b32.xlu0 %v154, 17
    %v166 = vpop.permute.xlu0 %165
    %167 = vrot.lane.b32.xlu0 %v155, 17
    %v168 = vpop.permute.xlu0 %167
    %169 = vrot.lane.b32.xlu0 %v156, 17
    %v170 = vpop.permute.xlu0 %169
    %171 = vrot.lane.b32.xlu0 %v157, 17
    %v172 = vpop.permute.xlu0 %171
    %vm173 = vcmask 138240
    %v174 = vsel %vm173, %v164, %v166
    %v175 = vsel %vm173, %v166, %v168
    %v176 = vsel %vm173, %v168, %v170
    %v177 = vsel %vm173, %v170, %v172
    %182 = vst [vmem:[#allocation4] sm:$0xff] %v174
    %183 = vst [vmem:[#allocation4 + $0x8] sm:$0xff] %v175
    %184 = vst [vmem:[#allocation4 + $0x10] sm:$0xff] %v176
    %185 = vst [vmem:[#allocation4 + $0x18] sm:$0xff] %v177
    %v186 = vld [vmem:[#allocation2] sm:$0xff]
    %v187 = vld [vmem:[#allocation2 + $0x8] sm:$0xff]
    %v188 = vld [vmem:[#allocation2 + $0x10] sm:$0xff]
    %v189 = vld [vmem:[#allocation2 + $0x18] sm:$0xff]
    %v190 = vld [vmem:[#allocation2 + $0x20] sm:$0xff]
    %s191 = scalar_lea.vmem [#allocation12], 513
    %v192 = vld [vmem:[%s191] ss:$8 sm:$0xf]
    %v194 = vlaneseq
    %v195 = vshrl.u32 %v194, 7
    %v196 = vsub.s32 0, %v195
    %v197 = vrot.slane %v192, %v196
    %v198 = vlaneseq
    %v199 = vshrl.u32 %v198, 7
    %v200 = vsub.s32 1, %v199
    %v201 = vrot.slane %v192, %v200
    %v202 = vlaneseq
    %v203 = vshrl.u32 %v202, 7
    %v204 = vsub.s32 2, %v203
    %v205 = vrot.slane %v192, %v204
    %v206 = vlaneseq
    %v207 = vshrl.u32 %v206, 7
    %v208 = vsub.s32 3, %v207
    %v209 = vrot.slane %v192, %v208
    %210 = vrot.lane.b32.xlu0 %v197, 112
    %v211 = vpop.permute.xlu0 %210
    %212 = vrot.lane.b32.xlu0 %v201, 112
    %v213 = vpop.permute.xlu0 %212
    %214 = vrot.lane.b32.xlu0 %v205, 112
    %v215 = vpop.permute.xlu0 %214
    %216 = vrot.lane.b32.xlu0 %v209, 112
    %v217 = vpop.permute.xlu0 %216
    %vm218 = vcmask 916480
    %v219 = vsel %vm218, %v211, %v213
    %v220 = vsel %vm218, %v213, %v215
    %v221 = vsel %vm218, %v215, %v217
    %v227 = vmul.f32 %v186, %v211
    %v228 = vmul.f32 %v187, %v219
    %v229 = vmul.f32 %v188, %v220
    %v230 = vmul.f32 %v189, %v221
    %v231 = vmul.f32 %v190, %v217
    %237 = vrot.lane.b32.xlu0 %v227, 16
    %v238 = vpop.permute.xlu0 %237
    %239 = vrot.lane.b32.xlu0 %v228, 16
    %v240 = vpop.permute.xlu0 %239
    %241 = vrot.lane.b32.xlu0 %v229, 16
    %v242 = vpop.permute.xlu0 %241
    %243 = vrot.lane.b32.xlu0 %v230, 16
    %v244 = vpop.permute.xlu0 %243
    %245 = vrot.lane.b32.xlu0 %v231, 16
    %v246 = vpop.permute.xlu0 %245
    %vm247 = vcmask 130048
    %v248 = vsel %vm247, %v238, %v240
    %v249 = vsel %vm247, %v240, %v242
    %v250 = vsel %vm247, %v242, %v244
    %v251 = vsel %vm247, %v244, %v246
    %256 = vst [vmem:[#allocation4 + $0x20] sm:$0xff] %v248
    %257 = vst [vmem:[#allocation4 + $0x28] sm:$0xff] %v249
    %258 = vst [vmem:[#allocation4 + $0x30] sm:$0xff] %v250
    %259 = vst [vmem:[#allocation4 + $0x38] sm:$0xff] %v251
    %v260 = vld [vmem:[#allocation2] sm:$0xff]
    %v261 = vld [vmem:[#allocation2 + $0x8] sm:$0xff]
    %v262 = vld [vmem:[#allocation2 + $0x10] sm:$0xff]
    %v263 = vld [vmem:[#allocation2 + $0x18] sm:$0xff]
    %v264 = vld [vmem:[#allocation2 + $0x20] sm:$0xff]
    %s265 = scalar_lea.vmem [#allocation12], 514
    %v266 = vld [vmem:[%s265] ss:$8 sm:$0xf]
    %v268 = vlaneseq
    %v269 = vshrl.u32 %v268, 7
    %v270 = vsub.s32 0, %v269
    %v271 = vrot.slane %v266, %v270
    %v272 = vlaneseq
    %v273 = vshrl.u32 %v272, 7
    %v274 = vsub.s32 1, %v273
    %v275 = vrot.slane %v266, %v274
    %v276 = vlaneseq
    %v277 = vshrl.u32 %v276, 7
    %v278 = vsub.s32 2, %v277
    %v279 = vrot.slane %v266, %v278
    %v280 = vlaneseq
    %v281 = vshrl.u32 %v280, 7
    %v282 = vsub.s32 3, %v281
    %v283 = vrot.slane %v266, %v282
    %284 = vrot.lane.b32.xlu0 %v271, 113
    %v285 = vpop.permute.xlu0 %284
    %286 = vrot.lane.b32.xlu0 %v275, 113
    %v287 = vpop.permute.xlu0 %286
    %288 = vrot.lane.b32.xlu0 %v279, 113
    %v289 = vpop.permute.xlu0 %288
    %290 = vrot.lane.b32.xlu0 %v283, 113
    %v291 = vpop.permute.xlu0 %290
    %vm292 = vcmask 924672
    %v293 = vsel %vm292, %v285, %v287
    %v294 = vsel %vm292, %v287, %v289
    %v295 = vsel %vm292, %v289, %v291
    %v301 = vmul.f32 %v260, %v285
    %v302 = vmul.f32 %v261, %v293
    %v303 = vmul.f32 %v262, %v294
    %v304 = vmul.f32 %v263, %v295
    %v305 = vmul.f32 %v264, %v291
    %311 = vrot.lane.b32.xlu0 %v301, 15
    %v312 = vpop.permute.xlu0 %311
    %313 = vrot.lane.b32.xlu0 %v302, 15
    %v314 = vpop.permute.xlu0 %313
    %315 = vrot.lane.b32.xlu0 %v303, 15
    %v316 = vpop.permute.xlu0 %315
    %317 = vrot.lane.b32.xlu0 %v304, 15
    %v318 = vpop.permute.xlu0 %317
    %319 = vrot.lane.b32.xlu0 %v305, 15
    %v320 = vpop.permute.xlu0 %319
    %vm321 = vcmask 121856
    %v322 = vsel %vm321, %v312, %v314
    %v323 = vsel %vm321, %v314, %v316
    %v324 = vsel %vm321, %v316, %v318
    %v325 = vsel %vm321, %v318, %v320
    %330 = vst [vmem:[#allocation4 + $0x40] sm:$0xff] %v322
    %331 = vst [vmem:[#allocation4 + $0x48] sm:$0xff] %v323
    %332 = vst [vmem:[#allocation4 + $0x50] sm:$0xff] %v324
    %333 = vst [vmem:[#allocation4 + $0x58] sm:$0xff] %v325
    %v334 = vld [vmem:[#allocation2] sm:$0xff]
    %v335 = vld [vmem:[#allocation2 + $0x8] sm:$0xff]
    %v336 = vld [vmem:[#allocation2 + $0x10] sm:$0xff]
    %v337 = vld [vmem:[#allocation2 + $0x18] sm:$0xff]
    %v338 = vld [vmem:[#allocation2 + $0x20] sm:$0xff]
    %s339 = scalar_lea.vmem [#allocation12], 515
    %v340 = vld [vmem:[%s339] ss:$8 sm:$0xf]
    %v342 = vlaneseq
    %v343 = vshrl.u32 %v342, 7
    %v344 = vsub.s32 0, %v343
    %v345 = vrot.slane %v340, %v344
    %v346 = vlaneseq
    %v347 = vshrl.u32 %v346, 7
    %v348 = vsub.s32 1, %v347
    %v349 = vrot.slane %v340, %v348
    %v350 = vlaneseq
    %v351 = vshrl.u32 %v350, 7
    %v352 = vsub.s32 2, %v351
    %v353 = vrot.slane %v340, %v352
    %v354 = vlaneseq
    %v355 = vshrl.u32 %v354, 7
    %v356 = vsub.s32 3, %v355
    %v357 = vrot.slane %v340, %v356
    %358 = vrot.lane.b32.xlu0 %v345, 127
    %v359 = vpop.permute.xlu0 %358
    %360 = vrot.lane.b32.xlu0 %v349, 127
    %v361 = vpop.permute.xlu0 %360
    %362 = vrot.lane.b32.xlu0 %v353, 127
    %v363 = vpop.permute.xlu0 %362
    %364 = vrot.lane.b32.xlu0 %v357, 127
    %v365 = vpop.permute.xlu0 %364
    %vm366 = vcmask 1039360
    %v367 = vsel %vm366, %v359, %v361
    %v368 = vsel %vm366, %v361, %v363
    %v369 = vsel %vm366, %v363, %v365
    %v375 = vmul.f32 %v334, %v359
    %v376 = vmul.f32 %v335, %v367
    %v377 = vmul.f32 %v336, %v368
    %v378 = vmul.f32 %v337, %v369
    %v379 = vmul.f32 %v338, %v365
    %385 = vrot.lane.b32.xlu0 %v375, 1
    %v386 = vpop.permute.xlu0 %385
    %387 = vrot.lane.b32.xlu0 %v376, 1
    %v388 = vpop.permute.xlu0 %387
    %389 = vrot.lane.b32.xlu0 %v377, 1
    %v390 = vpop.permute.xlu0 %389
    %391 = vrot.lane.b32.xlu0 %v378, 1
    %v392 = vpop.permute.xlu0 %391
    %393 = vrot.lane.b32.xlu0 %v379, 1
    %v394 = vpop.permute.xlu0 %393
    %vm395 = vcmask 7168
    %v396 = vsel %vm395, %v386, %v388
    %v397 = vsel %vm395, %v388, %v390
    %v398 = vsel %vm395, %v390, %v392
    %v399 = vsel %vm395, %v392, %v394
    %404 = vst [vmem:[#allocation4 + $0x60] sm:$0xff] %v396
    %405 = vst [vmem:[#allocation4 + $0x68] sm:$0xff] %v397
    %406 = vst [vmem:[#allocation4 + $0x70] sm:$0xff] %v398
    %407 = vst [vmem:[#allocation4 + $0x78] sm:$0xff] %v399
    %v408 = vld [vmem:[#allocation2 + $0x8] sm:$0xff]
    %v409 = vld [vmem:[#allocation2 + $0x10] sm:$0xff]
    %v410 = vld [vmem:[#allocation2 + $0x18] sm:$0xff]
    %v411 = vld [vmem:[#allocation2 + $0x20] sm:$0xff]
    %412 = vst [vmem:[#allocation4 + $0x80] sm:$0xff] %v408
    %413 = vst [vmem:[#allocation4 + $0x88] sm:$0xff] %v409
    %414 = vst [vmem:[#allocation4 + $0x90] sm:$0xff] %v410
    %415 = vst [vmem:[#allocation4 + $0x98] sm:$0xff] %v411
    %v416 = vld [vmem:[#allocation2 + $0x8] sm:$0xff]
    %v417 = vld [vmem:[#allocation2 + $0x10] sm:$0xff]
    %v418 = vld [vmem:[#allocation2 + $0x18] sm:$0xff]
    %v419 = vld [vmem:[#allocation2 + $0x20] sm:$0xff]
    %v420 = vld [vmem:[#allocation2 + $0x28] sm:$0xff]
    %s421 = scalar_lea.vmem [#allocation12], 517
    %v422 = vld [vmem:[%s421] ss:$8 sm:$0xf]
    %v424 = vlaneseq
    %v425 = vshrl.u32 %v424, 7
    %v426 = vsub.s32 0, %v425
    %v427 = vrot.slane %v422, %v426
    %v428 = vlaneseq
    %v429 = vshrl.u32 %v428, 7
    %v430 = vsub.s32 1, %v429
    %v431 = vrot.slane %v422, %v430
    %v432 = vlaneseq
    %v433 = vshrl.u32 %v432, 7
    %v434 = vsub.s32 2, %v433
    %v435 = vrot.slane %v422, %v434
    %v436 = vlaneseq
    %v437 = vshrl.u32 %v436, 7
    %v438 = vsub.s32 3, %v437
    %v439 = vrot.slane %v422, %v438
    %440 = vrot.lane.b32.xlu0 %v427, 1
    %v441 = vpop.permute.xlu0 %440
    %442 = vrot.lane.b32.xlu0 %v431, 1
    %v443 = vpop.permute.xlu0 %442
    %444 = vrot.lane.b32.xlu0 %v435, 1
    %v445 = vpop.permute.xlu0 %444
    %446 = vrot.lane.b32.xlu0 %v439, 1
    %v447 = vpop.permute.xlu0 %446
    %v448 = vsel %vm395, %v441, %v443
    %v449 = vsel %vm395, %v443, %v445
    %v450 = vsel %vm395, %v445, %v447
    %v456 = vmul.f32 %v416, %v441
    %v457 = vmul.f32 %v417, %v448
    %v458 = vmul.f32 %v418, %v449
    %v459 = vmul.f32 %v419, %v450
    %v460 = vmul.f32 %v420, %v447
    %466 = vrot.lane.b32.xlu0 %v456, 127
    %v467 = vpop.permute.xlu0 %466
    %468 = vrot.lane.b32.xlu0 %v457, 127
    %v469 = vpop.permute.xlu0 %468
    %470 = vrot.lane.b32.xlu0 %v458, 127
    %v471 = vpop.permute.xlu0 %470
    %472 = vrot.lane.b32.xlu0 %v459, 127
    %v473 = vpop.permute.xlu0 %472
    %474 = vrot.lane.b32.xlu0 %v460, 127
    %v475 = vpop.permute.xlu0 %474
    %v476 = vsel %vm366, %v467, %v469
    %v477 = vsel %vm366, %v469, %v471
    %v478 = vsel %vm366, %v471, %v473
    %v479 = vsel %vm366, %v473, %v475
    %484 = vst [vmem:[#allocation4 + $0xa0] sm:$0xff] %v476
    %485 = vst [vmem:[#allocation4 + $0xa8] sm:$0xff] %v477
    %486 = vst [vmem:[#allocation4 + $0xb0] sm:$0xff] %v478
    %487 = vst [vmem:[#allocation4 + $0xb8] sm:$0xff] %v479
    %v488 = vld [vmem:[#allocation2 + $0x8] sm:$0xff]
    %v489 = vld [vmem:[#allocation2 + $0x10] sm:$0xff]
    %v490 = vld [vmem:[#allocation2 + $0x18] sm:$0xff]
    %v491 = vld [vmem:[#allocation2 + $0x20] sm:$0xff]
    %v492 = vld [vmem:[#allocation2 + $0x28] sm:$0xff]
    %s493 = scalar_lea.vmem [#allocation12], 518
    %v494 = vld [vmem:[%s493] ss:$8 sm:$0xf]
    %v496 = vlaneseq
    %v497 = vshrl.u32 %v496, 7
    %v498 = vsub.s32 0, %v497
    %v499 = vrot.slane %v494, %v498
    %v500 = vlaneseq
    %v501 = vshrl.u32 %v500, 7
    %v502 = vsub.s32 1, %v501
    %v503 = vrot.slane %v494, %v502
    %v504 = vlaneseq
    %v505 = vshrl.u32 %v504, 7
    %v506 = vsub.s32 2, %v505
    %v507 = vrot.slane %v494, %v506
    %v508 = vlaneseq
    %v509 = vshrl.u32 %v508, 7
    %v510 = vsub.s32 3, %v509
    %v511 = vrot.slane %v494, %v510
    %512 = vrot.lane.b32.xlu0 %v499, 15
    %v513 = vpop.permute.xlu0 %512
    %514 = vrot.lane.b32.xlu0 %v503, 15
    %v515 = vpop.permute.xlu0 %514
    %516 = vrot.lane.b32.xlu0 %v507, 15
    %v517 = vpop.permute.xlu0 %516
    %518 = vrot.lane.b32.xlu0 %v511, 15
    %v519 = vpop.permute.xlu0 %518
    %v520 = vsel %vm321, %v513, %v515
    %v521 = vsel %vm321, %v515, %v517
    %v522 = vsel %vm321, %v517, %v519
    %v528 = vmul.f32 %v488, %v513
    %v529 = vmul.f32 %v489, %v520
    %v530 = vmul.f32 %v490, %v521
    %v531 = vmul.f32 %v491, %v522
    %v532 = vmul.f32 %v492, %v519
    %538 = vrot.lane.b32.xlu0 %v528, 113
    %v539 = vpop.permute.xlu0 %538
    %540 = vrot.lane.b32.xlu0 %v529, 113
    %v541 = vpop.permute.xlu0 %540
    %542 = vrot.lane.b32.xlu0 %v530, 113
    %v543 = vpop.permute.xlu0 %542
    %544 = vrot.lane.b32.xlu0 %v531, 113
    %v545 = vpop.permute.xlu0 %544
    %546 = vrot.lane.b32.xlu0 %v532, 113
    %v547 = vpop.permute.xlu0 %546
    %v548 = vsel %vm292, %v539, %v541
    %v549 = vsel %vm292, %v541, %v543
    %v550 = vsel %vm292, %v543, %v545
    %v551 = vsel %vm292, %v545, %v547
    %556 = vst [vmem:[#allocation4 + $0xc0] sm:$0xff] %v548
    %557 = vst [vmem:[#allocation4 + $0xc8] sm:$0xff] %v549
    %558 = vst [vmem:[#allocation4 + $0xd0] sm:$0xff] %v550
    %559 = vst [vmem:[#allocation4 + $0xd8] sm:$0xff] %v551
    %v560 = vld [vmem:[#allocation2 + $0x8] sm:$0xff]
    %v561 = vld [vmem:[#allocation2 + $0x10] sm:$0xff]
    %v562 = vld [vmem:[#allocation2 + $0x18] sm:$0xff]
    %v563 = vld [vmem:[#allocation2 + $0x20] sm:$0xff]
    %v564 = vld [vmem:[#allocation2 + $0x28] sm:$0xff]
    %s565 = scalar_lea.vmem [#allocation12], 519
    %v566 = vld [vmem:[%s565] ss:$8 sm:$0xf]
    %v568 = vlaneseq
    %v569 = vshrl.u32 %v568, 7
    %v570 = vsub.s32 0, %v569
    %v571 = vrot.slane %v566, %v570
    %v572 = vlaneseq
    %v573 = vshrl.u32 %v572, 7
    %v574 = vsub.s32 1, %v573
    %v575 = vrot.slane %v566, %v574
    %v576 = vlaneseq
    %v577 = vshrl.u32 %v576, 7
    %v578 = vsub.s32 2, %v577
    %v579 = vrot.slane %v566, %v578
    %v580 = vlaneseq
    %v581 = vshrl.u32 %v580, 7
    %v582 = vsub.s32 3, %v581
    %v583 = vrot.slane %v566, %v582
    %584 = vrot.lane.b32.xlu0 %v571, 16
    %v585 = vpop.permute.xlu0 %584
    %586 = vrot.lane.b32.xlu0 %v575, 16
    %v587 = vpop.permute.xlu0 %586
    %588 = vrot.lane.b32.xlu0 %v579, 16
    %v589 = vpop.permute.xlu0 %588
    %590 = vrot.lane.b32.xlu0 %v583, 16
    %v591 = vpop.permute.xlu0 %590
    %v592 = vsel %vm247, %v585, %v587
    %v593 = vsel %vm247, %v587, %v589
    %v594 = vsel %vm247, %v589, %v591
    %v600 = vmul.f32 %v560, %v585
    %v601 = vmul.f32 %v561, %v592
    %v602 = vmul.f32 %v562, %v593
    %v603 = vmul.f32 %v563, %v594
    %v604 = vmul.f32 %v564, %v591
    %610 = vrot.lane.b32.xlu0 %v600, 112
    %v611 = vpop.permute.xlu0 %610
    %612 = vrot.lane.b32.xlu0 %v601, 112
    %v613 = vpop.permute.xlu0 %612
    %614 = vrot.lane.b32.xlu0 %v602, 112
    %v615 = vpop.permute.xlu0 %614
    %616 = vrot.lane.b32.xlu0 %v603, 112
    %v617 = vpop.permute.xlu0 %616
    %618 = vrot.lane.b32.xlu0 %v604, 112
    %v619 = vpop.permute.xlu0 %618
    %v620 = vsel %vm218, %v611, %v613
    %v621 = vsel %vm218, %v613, %v615
    %v622 = vsel %vm218, %v615, %v617
    %v623 = vsel %vm218, %v617, %v619
    %628 = vst [vmem:[#allocation4 + $0xe0] sm:$0xff] %v620
    %629 = vst [vmem:[#allocation4 + $0xe8] sm:$0xff] %v621
    %630 = vst [vmem:[#allocation4 + $0xf0] sm:$0xff] %v622
    %631 = vst [vmem:[#allocation4 + $0xf8] sm:$0xff] %v623
    %v632 = vld [vmem:[#allocation2 + $0x8] sm:$0xff]
    %v633 = vld [vmem:[#allocation2 + $0x10] sm:$0xff]
    %v634 = vld [vmem:[#allocation2 + $0x18] sm:$0xff]
    %v635 = vld [vmem:[#allocation2 + $0x20] sm:$0xff]
    %v636 = vld [vmem:[#allocation2 + $0x28] sm:$0xff]
    %s637 = scalar_lea.vmem [#allocation12], 544
    %v638 = vld [vmem:[%s637] ss:$8 sm:$0xf]
    %v640 = vlaneseq
    %v641 = vshrl.u32 %v640, 7
    %v642 = vsub.s32 0, %v641
    %v643 = vrot.slane %v638, %v642
    %v644 = vlaneseq
    %v645 = vshrl.u32 %v644, 7
    %v646 = vsub.s32 1, %v645
    %v647 = vrot.slane %v638, %v646
    %v648 = vlaneseq
    %v649 = vshrl.u32 %v648, 7
    %v650 = vsub.s32 2, %v649
    %v651 = vrot.slane %v638, %v650
    %v652 = vlaneseq
    %v653 = vshrl.u32 %v652, 7
    %v654 = vsub.s32 3, %v653
    %v655 = vrot.slane %v638, %v654
    %656 = vrot.lane.b32.xlu0 %v643, 17
    %v657 = vpop.permute.xlu0 %656
    %658 = vrot.lane.b32.xlu0 %v647, 17
    %v659 = vpop.permute.xlu0 %658
    %660 = vrot.lane.b32.xlu0 %v651, 17
    %v661 = vpop.permute.xlu0 %660
    %662 = vrot.lane.b32.xlu0 %v655, 17
    %v663 = vpop.permute.xlu0 %662
    %v664 = vsel %vm173, %v657, %v659
    %v665 = vsel %vm173, %v659, %v661
    %v666 = vsel %vm173, %v661, %v663
    %v672 = vmul.f32 %v632, %v657
    %v673 = vmul.f32 %v633, %v664
    %v674 = vmul.f32 %v634, %v665
    %v675 = vmul.f32 %v635, %v666
    %v676 = vmul.f32 %v636, %v663
    %682 = vrot.lane.b32.xlu0 %v672, 111
    %v683 = vpop.permute.xlu0 %682
    %684 = vrot.lane.b32.xlu0 %v673, 111
    %v685 = vpop.permute.xlu0 %684
    %686 = vrot.lane.b32.xlu0 %v674, 111
    %v687 = vpop.permute.xlu0 %686
    %688 = vrot.lane.b32.xlu0 %v675, 111
    %v689 = vpop.permute.xlu0 %688
    %690 = vrot.lane.b32.xlu0 %v676, 111
    %v691 = vpop.permute.xlu0 %690
    %v692 = vsel %vm144, %v683, %v685
    %v693 = vsel %vm144, %v685, %v687
    %v694 = vsel %vm144, %v687, %v689
    %v695 = vsel %vm144, %v689, %v691
    %700 = vst [vmem:[#allocation4 + $0x100] sm:$0xff] %v692
    %701 = vst [vmem:[#allocation4 + $0x108] sm:$0xff] %v693
    %702 = vst [vmem:[#allocation4 + $0x110] sm:$0xff] %v694
    %703 = vst [vmem:[#allocation4 + $0x118] sm:$0xff] %v695
    %v704 = vld [vmem:[#allocation11] sm:$0xff]
    %v705 = vld [vmem:[#allocation4] sm:$0xff]
    %v706 = vld [vmem:[#allocation4 + $0x8] sm:$0xff]
    %v707 = vld [vmem:[#allocation4 + $0x10] sm:$0xff]
    %v708 = vld [vmem:[#allocation4 + $0x18] sm:$0xff]
    %v709 = vld [vmem:[#allocation4 + $0x20] sm:$0xff]
    %v710 = vld [vmem:[#allocation4 + $0x28] sm:$0xff]
    %v711 = vld [vmem:[#allocation4 + $0x30] sm:$0xff]
    %v712 = vld [vmem:[#allocation4 + $0x38] sm:$0xff]
    %v713 = vld [vmem:[#allocation4 + $0x40] sm:$0xff]
    %v714 = vld [vmem:[#allocation4 + $0x48] sm:$0xff]
    %v715 = vld [vmem:[#allocation4 + $0x50] sm:$0xff]
    %v716 = vld [vmem:[#allocation4 + $0x58] sm:$0xff]
    %v717 = vld [vmem:[#allocation4 + $0x60] sm:$0xff]
    %v718 = vld [vmem:[#allocation4 + $0x68] sm:$0xff]
    %v719 = vld [vmem:[#allocation4 + $0x70] sm:$0xff]
    %v720 = vld [vmem:[#allocation4 + $0x78] sm:$0xff]
    %v721 = vld [vmem:[#allocation4 + $0x80] sm:$0xff]
    %v722 = vld [vmem:[#allocation4 + $0x88] sm:$0xff]
    %v723 = vld [vmem:[#allocation4 + $0x90] sm:$0xff]
    %v724 = vld [vmem:[#allocation4 + $0x98] sm:$0xff]
    %v725 = vld [vmem:[#allocation4 + $0xa0] sm:$0xff]
    %v726 = vld [vmem:[#allocation4 + $0xa8] sm:$0xff]
    %v727 = vld [vmem:[#allocation4 + $0xb0] sm:$0xff]
    %v728 = vld [vmem:[#allocation4 + $0xb8] sm:$0xff]
    %v729 = vld [vmem:[#allocation4 + $0xc0] sm:$0xff]
    %v730 = vld [vmem:[#allocation4 + $0xc8] sm:$0xff]
    %v731 = vld [vmem:[#allocation4 + $0xd0] sm:$0xff]
    %v732 = vld [vmem:[#allocation4 + $0xd8] sm:$0xff]
    %v733 = vld [vmem:[#allocation4 + $0xe0] sm:$0xff]
    %v734 = vld [vmem:[#allocation4 + $0xe8] sm:$0xff]
    %v735 = vld [vmem:[#allocation4 + $0xf0] sm:$0xff]
    %v736 = vld [vmem:[#allocation4 + $0xf8] sm:$0xff]
    %v737 = vld [vmem:[#allocation4 + $0x100] sm:$0xff]
    %v738 = vld [vmem:[#allocation4 + $0x108] sm:$0xff]
    %v739 = vld [vmem:[#allocation4 + $0x110] sm:$0xff]
    %v740 = vld [vmem:[#allocation4 + $0x118] sm:$0xff]
    %v741 = vld [vmem:[#allocation4 + $0x120] sm:$0x1]
    %v742 = vld [vmem:[#allocation4 + $0x128] sm:$0x1]
    %v743 = vld [vmem:[#allocation4 + $0x130] sm:$0x1]
    %v744 = vld [vmem:[#allocation4 + $0x138] sm:$0x1]
    %vm745 = vcmask 596992
    %v747 = vsel %vm745, %v704, 0
    %vm749 = vcmask 1040384
    %v751 = vsel %vm749, %v741, 0
    %v754 = vsel %vm749, %v742, 0
    %v757 = vsel %vm749, %v743, 0
    %v760 = vsel %vm749, %v744, 0
    %762 = vmatprep.subr.mxu0 0.0
    %763 = vmatpush1.msra.mxu0 0.0
    %764 = vmatprep.subr.mxu0 0.0
    %765 = vmatpush1.msra.mxu0 0.0
    %766 = vmatprep.subr.mxu0 0.0
    %767 = vmatpush1.msra.mxu0 0.0
    %768 = vmatprep.subr.mxu0 0.0
    %769 = vmatpush1.msra.mxu0 0.0
    %770 = vmatprep.subr.mxu0 0.0
    %771 = vmatpush1.msra.mxu0 0.0
    %772 = vmatprep.subr.mxu0 0.0
    %773 = vmatpush1.msra.mxu0 0.0
    %774 = vmatprep.subr.mxu0 %v754
    %775 = vmatpush1.msra.mxu0 %v751
    %776 = vmatprep.subr.mxu0 %v738
    %777 = vmatpush1.msra.mxu0 %v737
    %778 = vmatprep.subr.mxu0 %v734
    %779 = vmatpush1.msra.mxu0 %v733
    %780 = vmatprep.subr.mxu0 %v730
    %781 = vmatpush1.msra.mxu0 %v729
    %782 = vmatprep.subr.mxu0 %v726
    %783 = vmatpush1.msra.mxu0 %v725
    %784 = vmatprep.subr.mxu0 %v722
    %785 = vmatpush1.msra.mxu0 %v721
    %786 = vmatprep.subr.mxu0 %v718
    %787 = vmatpush1.msra.mxu0 %v717
    %788 = vmatprep.subr.mxu0 %v714
    %789 = vmatpush1.msra.mxu0 %v713
    %790 = vmatprep.subr.mxu0 %v710
    %791 = vmatpush1.msra.mxu0 %v709
    %792 = vmatprep.subr.mxu0 %v706
    %793 = vmatpush1.msra.mxu0 %v705
    %794 = vmatprep.subr.mxu0 0.0
    %795 = vmatpush2.msra.mxu0 0.0
    %796 = vmatprep.subr.mxu0 0.0
    %797 = vmatpush2.msra.mxu0 0.0
    %798 = vmatprep.subr.mxu0 0.0
    %799 = vmatpush2.msra.mxu0 0.0
    %800 = vmatprep.subr.mxu0 0.0
    %801 = vmatpush2.msra.mxu0 0.0
    %802 = vmatprep.subr.mxu0 0.0
    %803 = vmatpush2.msra.mxu0 0.0
    %804 = vmatprep.subr.mxu0 0.0
    %805 = vmatpush2.msra.mxu0 0.0
    %806 = vmatprep.subr.mxu0 0.0
    %807 = vmatpush2.msra.mxu0 0.0
    %808 = vmatprep.subr.mxu0 0.0
    %809 = vmatpush2.msra.mxu0 0.0
    %810 = vmatprep.subr.mxu0 0.0
    %811 = vmatpush2.msra.mxu0 0.0
    %812 = vmatprep.subr.mxu0 0.0
    %813 = vmatpush2.msra.mxu0 0.0
    %814 = vmatprep.subr.mxu0 0.0
    %815 = vmatpush2.msra.mxu0 0.0
    %816 = vmatprep.subr.mxu0 0.0
    %817 = vmatpush2.msra.mxu0 0.0
    %818 = vmatprep.subr.mxu0 0.0
    %819 = vmatpush2.msra.mxu0 0.0
    %820 = vmatprep.subr.mxu0 0.0
    %821 = vmatpush2.msra.mxu0 0.0
    %822 = vmatprep.subr.mxu0 0.0
    %823 = vmatpush2.msra.mxu0 0.0
    %824 = vmatprep.subr.mxu0 0.0
    %825 = vmatpush2.msra.mxu0 0.0
    %826 = vmatprep.mubr.f32.mxu0 0.0
    %827 = vmatmul.mubr.f32.gmra.mxu0 %v747
    %v828 = vpop.f32.mrf.mxu0
    %v829 = vadd.f32 0.0, %v828
    %v830 = vpop.f32.mrf.mxu0
    %v831 = vadd.f32 0.0, %v830
    %832 = vdwg.mxu0
    %833 = vmatprep.subr.mxu0 0.0
    %834 = vmatpush1.msra.mxu0 0.0
    %835 = vmatprep.subr.mxu0 0.0
    %836 = vmatpush1.msra.mxu0 0.0
    %837 = vmatprep.subr.mxu0 0.0
    %838 = vmatpush1.msra.mxu0 0.0
    %839 = vmatprep.subr.mxu0 0.0
    %840 = vmatpush1.msra.mxu0 0.0
    %841 = vmatprep.subr.mxu0 0.0
    %842 = vmatpush1.msra.mxu0 0.0
    %843 = vmatprep.subr.mxu0 0.0
    %844 = vmatpush1.msra.mxu0 0.0
    %845 = vmatprep.subr.mxu0 %v760
    %846 = vmatpush1.msra.mxu0 %v757
    %847 = vmatprep.subr.mxu0 %v740
    %848 = vmatpush1.msra.mxu0 %v739
    %849 = vmatprep.subr.mxu0 %v736
    %850 = vmatpush1.msra.mxu0 %v735
    %851 = vmatprep.subr.mxu0 %v732
    %852 = vmatpush1.msra.mxu0 %v731
    %853 = vmatprep.subr.mxu0 %v728
    %854 = vmatpush1.msra.mxu0 %v727
    %855 = vmatprep.subr.mxu0 %v724
    %856 = vmatpush1.msra.mxu0 %v723
    %857 = vmatprep.subr.mxu0 %v720
    %858 = vmatpush1.msra.mxu0 %v719
    %859 = vmatprep.subr.mxu0 %v716
    %860 = vmatpush1.msra.mxu0 %v715
    %861 = vmatprep.subr.mxu0 %v712
    %862 = vmatpush1.msra.mxu0 %v711
    %863 = vmatprep.subr.mxu0 %v708
    %864 = vmatpush1.msra.mxu0 %v707
    %865 = vmatprep.subr.mxu0 0.0
    %866 = vmatpush2.msra.mxu0 0.0
    %867 = vmatprep.subr.mxu0 0.0
    %868 = vmatpush2.msra.mxu0 0.0
    %869 = vmatprep.subr.mxu0 0.0
    %870 = vmatpush2.msra.mxu0 0.0
    %871 = vmatprep.subr.mxu0 0.0
    %872 = vmatpush2.msra.mxu0 0.0
    %873 = vmatprep.subr.mxu0 0.0
    %874 = vmatpush2.msra.mxu0 0.0
    %875 = vmatprep.subr.mxu0 0.0
    %876 = vmatpush2.msra.mxu0 0.0
    %877 = vmatprep.subr.mxu0 0.0
    %878 = vmatpush2.msra.mxu0 0.0
    %879 = vmatprep.subr.mxu0 0.0
    %880 = vmatpush2.msra.mxu0 0.0
    %881 = vmatprep.subr.mxu0 0.0
    %882 = vmatpush2.msra.mxu0 0.0
    %883 = vmatprep.subr.mxu0 0.0
    %884 = vmatpush2.msra.mxu0 0.0
    %885 = vmatprep.subr.mxu0 0.0
    %886 = vmatpush2.msra.mxu0 0.0
    %887 = vmatprep.subr.mxu0 0.0
    %888 = vmatpush2.msra.mxu0 0.0
    %889 = vmatprep.subr.mxu0 0.0
    %890 = vmatpush2.msra.mxu0 0.0
    %891 = vmatprep.subr.mxu0 0.0
    %892 = vmatpush2.msra.mxu0 0.0
    %893 = vmatprep.subr.mxu0 0.0
    %894 = vmatpush2.msra.mxu0 0.0
    %895 = vmatprep.subr.mxu0 0.0
    %896 = vmatpush2.msra.mxu0 0.0
    %897 = vmatprep.mubr.f32.mxu0 0.0
    %898 = vmatmul.mubr.f32.gmra.mxu0 %v747
    %v899 = vpop.f32.mrf.mxu0
    %v900 = vadd.f32 0.0, %v899
    %v901 = vpop.f32.mrf.mxu0
    %v902 = vadd.f32 0.0, %v901
    %903 = vdwg.mxu0
    %v904 = vmax.f32 %v829, 0.0
    %v905 = vmax.f32 %v831, 0.0
    %v906 = vmax.f32 %v900, 0.0
    %v907 = vmax.f32 %v902, 0.0
    %908 = vst [vmem:[#allocation2 + $0x8] sm:$0xff] %v904
    %909 = vst [vmem:[#allocation2 + $0x10] sm:$0xff] %v905
    %910 = vst [vmem:[#allocation2 + $0x18] sm:$0xff] %v906
    %911 = vst [vmem:[#allocation2 + $0x20] sm:$0xff] %v907
    %v912 = vld [vmem:[#allocation2] sm:$0xff]
    %v913 = vld [vmem:[#allocation2 + $0x8] sm:$0xff]
    %v914 = vld [vmem:[#allocation2 + $0x10] sm:$0xff]
    %v915 = vld [vmem:[#allocation2 + $0x18] sm:$0xff]
    %v916 = vld [vmem:[#allocation2 + $0x20] sm:$0xff]
    %v917 = vld [vmem:[%s117] ss:$8 sm:$0xf]
    %v919 = vlaneseq
    %v920 = vshrl.u32 %v919, 7
    %v921 = vsub.s32 0, %v920
    %v922 = vrot.slane %v917, %v921
    %v923 = vlaneseq
    %v924 = vshrl.u32 %v923, 7
    %v925 = vsub.s32 1, %v924
    %v926 = vrot.slane %v917, %v925
    %v927 = vlaneseq
    %v928 = vshrl.u32 %v927, 7
    %v929 = vsub.s32 2, %v928
    %v930 = vrot.slane %v917, %v929
    %v931 = vlaneseq
    %v932 = vshrl.u32 %v931, 7
    %v933 = vsub.s32 3, %v932
    %v934 = vrot.slane %v917, %v933
    %935 = vrot.lane.b32.xlu0 %v922, 111
    %v936 = vpop.permute.xlu0 %935
    %937 = vrot.lane.b32.xlu0 %v926, 111
    %v938 = vpop.permute.xlu0 %937
    %939 = vrot.lane.b32.xlu0 %v930, 111
    %v940 = vpop.permute.xlu0 %939
    %941 = vrot.lane.b32.xlu0 %v934, 111
    %v942 = vpop.permute.xlu0 %941
    %v943 = vsel %vm144, %v936, %v938
    %v944 = vsel %vm144, %v938, %v940
    %v945 = vsel %vm144, %v940, %v942
    %v951 = vmul.f32 %v912, %v936
    %v952 = vmul.f32 %v913, %v943
    %v953 = vmul.f32 %v914, %v944
    %v954 = vmul.f32 %v915, %v945
    %v955 = vmul.f32 %v916, %v942
    %961 = vrot.lane.b32.xlu0 %v951, 17
    %v962 = vpop.permute.xlu0 %961
    %963 = vrot.lane.b32.xlu0 %v952, 17
    %v964 = vpop.permute.xlu0 %963
    %965 = vrot.lane.b32.xlu0 %v953, 17
    %v966 = vpop.permute.xlu0 %965
    %967 = vrot.lane.b32.xlu0 %v954, 17
    %v968 = vpop.permute.xlu0 %967
    %969 = vrot.lane.b32.xlu0 %v955, 17
    %v970 = vpop.permute.xlu0 %969
    %v971 = vsel %vm173, %v962, %v964
    %v972 = vsel %vm173, %v964, %v966
    %v973 = vsel %vm173, %v966, %v968
    %v974 = vsel %vm173, %v968, %v970
    %979 = vst [vmem:[#allocation4] sm:$0xff] %v971
    %980 = vst [vmem:[#allocation4 + $0x8] sm:$0xff] %v972
    %981 = vst [vmem:[#allocation4 + $0x10] sm:$0xff] %v973
    %982 = vst [vmem:[#allocation4 + $0x18] sm:$0xff] %v974
    %v983 = vld [vmem:[#allocation2] sm:$0xff]
    %v984 = vld [vmem:[#allocation2 + $0x8] sm:$0xff]
    %v985 = vld [vmem:[#allocation2 + $0x10] sm:$0xff]
    %v986 = vld [vmem:[#allocation2 + $0x18] sm:$0xff]
    %v987 = vld [vmem:[#allocation2 + $0x20] sm:$0xff]
    %v988 = vld [vmem:[%s191] ss:$8 sm:$0xf]
    %v990 = vlaneseq
    %v991 = vshrl.u32 %v990, 7
    %v992 = vsub.s32 0, %v991
    %v993 = vrot.slane %v988, %v992
    %v994 = vlaneseq
    %v995 = vshrl.u32 %v994, 7
    %v996 = vsub.s32 1, %v995
    %v997 = vrot.slane %v988, %v996
    %v998 = vlaneseq
    %v999 = vshrl.u32 %v998, 7
    %v1000 = vsub.s32 2, %v999
    %v1001 = vrot.slane %v988, %v1000
    %v1002 = vlaneseq
    %v1003 = vshrl.u32 %v1002, 7
    %v1004 = vsub.s32 3, %v1003
    %v1005 = vrot.slane %v988, %v1004
    %1006 = vrot.lane.b32.xlu0 %v993, 112
    %v1007 = vpop.permute.xlu0 %1006
    %1008 = vrot.lane.b32.xlu0 %v997, 112
    %v1009 = vpop.permute.xlu0 %1008
    %1010 = vrot.lane.b32.xlu0 %v1001, 112
    %v1011 = vpop.permute.xlu0 %1010
    %1012 = vrot.lane.b32.xlu0 %v1005, 112
    %v1013 = vpop.permute.xlu0 %1012
    %v1014 = vsel %vm218, %v1007, %v1009
    %v1015 = vsel %vm218, %v1009, %v1011
    %v1016 = vsel %vm218, %v1011, %v1013
    %v1022 = vmul.f32 %v983, %v1007
    %v1023 = vmul.f32 %v984, %v1014
    %v1024 = vmul.f32 %v985, %v1015
    %v1025 = vmul.f32 %v986, %v1016
    %v1026 = vmul.f32 %v987, %v1013
    %1032 = vrot.lane.b32.xlu0 %v1022, 16
    %v1033 = vpop.permute.xlu0 %1032
    %1034 = vrot.lane.b32.xlu0 %v1023, 16
    %v1035 = vpop.permute.xlu0 %1034
    %1036 = vrot.lane.b32.xlu0 %v1024, 16
    %v1037 = vpop.permute.xlu0 %1036
    %1038 = vrot.lane.b32.xlu0 %v1025, 16
    %v1039 = vpop.permute.xlu0 %1038
    %1040 = vrot.lane.b32.xlu0 %v1026, 16
    %v1041 = vpop.permute.xlu0 %1040
    %v1042 = vsel %vm247, %v1033, %v1035
    %v1043 = vsel %vm247, %v1035, %v1037
    %v1044 = vsel %vm247, %v1037, %v1039
    %v1045 = vsel %vm247, %v1039, %v1041
    %1050 = vst [vmem:[#allocation4 + $0x20] sm:$0xff] %v1042
    %1051 = vst [vmem:[#allocation4 + $0x28] sm:$0xff] %v1043
    %1052 = vst [vmem:[#allocation4 + $0x30] sm:$0xff] %v1044
    %1053 = vst [vmem:[#allocation4 + $0x38] sm:$0xff] %v1045
    %v1054 = vld [vmem:[#allocation2] sm:$0xff]
    %v1055 = vld [vmem:[#allocation2 + $0x8] sm:$0xff]
    %v1056 = vld [vmem:[#allocation2 + $0x10] sm:$0xff]
    %v1057 = vld [vmem:[#allocation2 + $0x18] sm:$0xff]
    %v1058 = vld [vmem:[#allocation2 + $0x20] sm:$0xff]
    %v1059 = vld [vmem:[%s265] ss:$8 sm:$0xf]
    %v1061 = vlaneseq
    %v1062 = vshrl.u32 %v1061, 7
    %v1063 = vsub.s32 0, %v1062
    %v1064 = vrot.slane %v1059, %v1063
    %v1065 = vlaneseq
    %v1066 = vshrl.u32 %v1065, 7
    %v1067 = vsub.s32 1, %v1066
    %v1068 = vrot.slane %v1059, %v1067
    %v1069 = vlaneseq
    %v1070 = vshrl.u32 %v1069, 7
    %v1071 = vsub.s32 2, %v1070
    %v1072 = vrot.slane %v1059, %v1071
    %v1073 = vlaneseq
    %v1074 = vshrl.u32 %v1073, 7
    %v1075 = vsub.s32 3, %v1074
    %v1076 = vrot.slane %v1059, %v1075
    %1077 = vrot.lane.b32.xlu0 %v1064, 113
    %v1078 = vpop.permute.xlu0 %1077
    %1079 = vrot.lane.b32.xlu0 %v1068, 113
    %v1080 = vpop.permute.xlu0 %1079
    %1081 = vrot.lane.b32.xlu0 %v1072, 113
    %v1082 = vpop.permute.xlu0 %1081
    %1083 = vrot.lane.b32.xlu0 %v1076, 113
    %v1084 = vpop.permute.xlu0 %1083
    %v1085 = vsel %vm292, %v1078, %v1080
    %v1086 = vsel %vm292, %v1080, %v1082
    %v1087 = vsel %vm292, %v1082, %v1084
    %v1093 = vmul.f32 %v1054, %v1078
    %v1094 = vmul.f32 %v1055, %v1085
    %v1095 = vmul.f32 %v1056, %v1086
    %v1096 = vmul.f32 %v1057, %v1087
    %v1097 = vmul.f32 %v1058, %v1084
    %1103 = vrot.lane.b32.xlu0 %v1093, 15
    %v1104 = vpop.permute.xlu0 %1103
    %1105 = vrot.lane.b32.xlu0 %v1094, 15
    %v1106 = vpop.permute.xlu0 %1105
    %1107 = vrot.lane.b32.xlu0 %v1095, 15
    %v1108 = vpop.permute.xlu0 %1107
    %1109 = vrot.lane.b32.xlu0 %v1096, 15
    %v1110 = vpop.permute.xlu0 %1109
    %1111 = vrot.lane.b32.xlu0 %v1097, 15
    %v1112 = vpop.permute.xlu0 %1111
    %v1113 = vsel %vm321, %v1104, %v1106
    %v1114 = vsel %vm321, %v1106, %v1108
    %v1115 = vsel %vm321, %v1108, %v1110
    %v1116 = vsel %vm321, %v1110, %v1112
    %1121 = vst [vmem:[#allocation4 + $0x40] sm:$0xff] %v1113
    %1122 = vst [vmem:[#allocation4 + $0x48] sm:$0xff] %v1114
    %1123 = vst [vmem:[#allocation4 + $0x50] sm:$0xff] %v1115
    %1124 = vst [vmem:[#allocation4 + $0x58] sm:$0xff] %v1116
    %v1125 = vld [vmem:[#allocation2] sm:$0xff]
    %v1126 = vld [vmem:[#allocation2 + $0x8] sm:$0xff]
    %v1127 = vld [vmem:[#allocation2 + $0x10] sm:$0xff]
    %v1128 = vld [vmem:[#allocation2 + $0x18] sm:$0xff]
    %v1129 = vld [vmem:[#allocation2 + $0x20] sm:$0xff]
    %v1130 = vld [vmem:[%s339] ss:$8 sm:$0xf]
    %v1132 = vlaneseq
    %v1133 = vshrl.u32 %v1132, 7
    %v1134 = vsub.s32 0, %v1133
    %v1135 = vrot.slane %v1130, %v1134
    %v1136 = vlaneseq
    %v1137 = vshrl.u32 %v1136, 7
    %v1138 = vsub.s32 1, %v1137
    %v1139 = vrot.slane %v1130, %v1138
    %v1140 = vlaneseq
    %v1141 = vshrl.u32 %v1140, 7
    %v1142 = vsub.s32 2, %v1141
    %v1143 = vrot.slane %v1130, %v1142
    %v1144 = vlaneseq
    %v1145 = vshrl.u32 %v1144, 7
    %v1146 = vsub.s32 3, %v1145
    %v1147 = vrot.slane %v1130, %v1146
    %1148 = vrot.lane.b32.xlu0 %v1135, 127
    %v1149 = vpop.permute.xlu0 %1148
    %1150 = vrot.lane.b32.xlu0 %v1139, 127
    %v1151 = vpop.permute.xlu0 %1150
    %1152 = vrot.lane.b32.xlu0 %v1143, 127
    %v1153 = vpop.permute.xlu0 %1152
    %1154 = vrot.lane.b32.xlu0 %v1147, 127
    %v1155 = vpop.permute.xlu0 %1154
    %v1156 = vsel %vm366, %v1149, %v1151
    %v1157 = vsel %vm366, %v1151, %v1153
    %v1158 = vsel %vm366, %v1153, %v1155
    %v1164 = vmul.f32 %v1125, %v1149
    %v1165 = vmul.f32 %v1126, %v1156
    %v1166 = vmul.f32 %v1127, %v1157
    %v1167 = vmul.f32 %v1128, %v1158
    %v1168 = vmul.f32 %v1129, %v1155
    %1174 = vrot.lane.b32.xlu0 %v1164, 1
    %v1175 = vpop.permute.xlu0 %1174
    %1176 = vrot.lane.b32.xlu0 %v1165, 1
    %v1177 = vpop.permute.xlu0 %1176
    %1178 = vrot.lane.b32.xlu0 %v1166, 1
    %v1179 = vpop.permute.xlu0 %1178
    %1180 = vrot.lane.b32.xlu0 %v1167, 1
    %v1181 = vpop.permute.xlu0 %1180
    %1182 = vrot.lane.b32.xlu0 %v1168, 1
    %v1183 = vpop.permute.xlu0 %1182
    %v1184 = vsel %vm395, %v1175, %v1177
    %v1185 = vsel %vm395, %v1177, %v1179
    %v1186 = vsel %vm395, %v1179, %v1181
    %v1187 = vsel %vm395, %v1181, %v1183
    %1192 = vst [vmem:[#allocation4 + $0x60] sm:$0xff] %v1184
    %1193 = vst [vmem:[#allocation4 + $0x68] sm:$0xff] %v1185
    %1194 = vst [vmem:[#allocation4 + $0x70] sm:$0xff] %v1186
    %1195 = vst [vmem:[#allocation4 + $0x78] sm:$0xff] %v1187
    %v1196 = vld [vmem:[#allocation2 + $0x8] sm:$0xff]
    %v1197 = vld [vmem:[#allocation2 + $0x10] sm:$0xff]
    %v1198 = vld [vmem:[#allocation2 + $0x18] sm:$0xff]
    %v1199 = vld [vmem:[#allocation2 + $0x20] sm:$0xff]
    %1200 = vst [vmem:[#allocation4 + $0x80] sm:$0xff] %v1196
    %1201 = vst [vmem:[#allocation4 + $0x88] sm:$0xff] %v1197
    %1202 = vst [vmem:[#allocation4 + $0x90] sm:$0xff] %v1198
    %1203 = vst [vmem:[#allocation4 + $0x98] sm:$0xff] %v1199
    %v1204 = vld [vmem:[#allocation2 + $0x8] sm:$0xff]
    %v1205 = vld [vmem:[#allocation2 + $0x10] sm:$0xff]
    %v1206 = vld [vmem:[#allocation2 + $0x18] sm:$0xff]
    %v1207 = vld [vmem:[#allocation2 + $0x20] sm:$0xff]
    %v1208 = vld [vmem:[#allocation2 + $0x28] sm:$0xff]
    %v1209 = vld [vmem:[%s421] ss:$8 sm:$0xf]
    %v1211 = vlaneseq
    %v1212 = vshrl.u32 %v1211, 7
    %v1213 = vsub.s32 0, %v1212
    %v1214 = vrot.slane %v1209, %v1213
    %v1215 = vlaneseq
    %v1216 = vshrl.u32 %v1215, 7
    %v1217 = vsub.s32 1, %v1216
    %v1218 = vrot.slane %v1209, %v1217
    %v1219 = vlaneseq
    %v1220 = vshrl.u32 %v1219, 7
    %v1221 = vsub.s32 2, %v1220
    %v1222 = vrot.slane %v1209, %v1221
    %v1223 = vlaneseq
    %v1224 = vshrl.u32 %v1223, 7
    %v1225 = vsub.s32 3, %v1224
    %v1226 = vrot.slane %v1209, %v1225
    %1227 = vrot.lane.b32.xlu0 %v1214, 1
    %v1228 = vpop.permute.xlu0 %1227
    %1229 = vrot.lane.b32.xlu0 %v1218, 1
    %v1230 = vpop.permute.xlu0 %1229
    %1231 = vrot.lane.b32.xlu0 %v1222, 1
    %v1232 = vpop.permute.xlu0 %1231
    %1233 = vrot.lane.b32.xlu0 %v1226, 1
    %v1234 = vpop.permute.xlu0 %1233
    %v1235 = vsel %vm395, %v1228, %v1230
    %v1236 = vsel %vm395, %v1230, %v1232
    %v1237 = vsel %vm395, %v1232, %v1234
    %v1243 = vmul.f32 %v1204, %v1228
    %v1244 = vmul.f32 %v1205, %v1235
    %v1245 = vmul.f32 %v1206, %v1236
    %v1246 = vmul.f32 %v1207, %v1237
    %v1247 = vmul.f32 %v1208, %v1234
    %1253 = vrot.lane.b32.xlu0 %v1243, 127
    %v1254 = vpop.permute.xlu0 %1253
    %1255 = vrot.lane.b32.xlu0 %v1244, 127
    %v1256 = vpop.permute.xlu0 %1255
    %1257 = vrot.lane.b32.xlu0 %v1245, 127
    %v1258 = vpop.permute.xlu0 %1257
    %1259 = vrot.lane.b32.xlu0 %v1246, 127
    %v1260 = vpop.permute.xlu0 %1259
    %1261 = vrot.lane.b32.xlu0 %v1247, 127
    %v1262 = vpop.permute.xlu0 %1261
    %v1263 = vsel %vm366, %v1254, %v1256
    %v1264 = vsel %vm366, %v1256, %v1258
    %v1265 = vsel %vm366, %v1258, %v1260
    %v1266 = vsel %vm366, %v1260, %v1262
    %1271 = vst [vmem:[#allocation4 + $0xa0] sm:$0xff] %v1263
    %1272 = vst [vmem:[#allocation4 + $0xa8] sm:$0xff] %v1264
    %1273 = vst [vmem:[#allocation4 + $0xb0] sm:$0xff] %v1265
    %1274 = vst [vmem:[#allocation4 + $0xb8] sm:$0xff] %v1266
    %v1275 = vld [vmem:[#allocation2 + $0x8] sm:$0xff]
    %v1276 = vld [vmem:[#allocation2 + $0x10] sm:$0xff]
    %v1277 = vld [vmem:[#allocation2 + $0x18] sm:$0xff]
    %v1278 = vld [vmem:[#allocation2 + $0x20] sm:$0xff]
    %v1279 = vld [vmem:[#allocation2 + $0x28] sm:$0xff]
    %v1280 = vld [vmem:[%s493] ss:$8 sm:$0xf]
    %v1282 = vlaneseq
    %v1283 = vshrl.u32 %v1282, 7
    %v1284 = vsub.s32 0, %v1283
    %v1285 = vrot.slane %v1280, %v1284
    %v1286 = vlaneseq
    %v1287 = vshrl.u32 %v1286, 7
    %v1288 = vsub.s32 1, %v1287
    %v1289 = vrot.slane %v1280, %v1288
    %v1290 = vlaneseq
    %v1291 = vshrl.u32 %v1290, 7
    %v1292 = vsub.s32 2, %v1291
    %v1293 = vrot.slane %v1280, %v1292
    %v1294 = vlaneseq
    %v1295 = vshrl.u32 %v1294, 7
    %v1296 = vsub.s32 3, %v1295
    %v1297 = vrot.slane %v1280, %v1296
    %1298 = vrot.lane.b32.xlu0 %v1285, 15
    %v1299 = vpop.permute.xlu0 %1298
    %1300 = vrot.lane.b32.xlu0 %v1289, 15
    %v1301 = vpop.permute.xlu0 %1300
    %1302 = vrot.lane.b32.xlu0 %v1293, 15
    %v1303 = vpop.permute.xlu0 %1302
    %1304 = vrot.lane.b32.xlu0 %v1297, 15
    %v1305 = vpop.permute.xlu0 %1304
    %v1306 = vsel %vm321, %v1299, %v1301
    %v1307 = vsel %vm321, %v1301, %v1303
    %v1308 = vsel %vm321, %v1303, %v1305
    %v1314 = vmul.f32 %v1275, %v1299
    %v1315 = vmul.f32 %v1276, %v1306
    %v1316 = vmul.f32 %v1277, %v1307
    %v1317 = vmul.f32 %v1278, %v1308
    %v1318 = vmul.f32 %v1279, %v1305
    %1324 = vrot.lane.b32.xlu0 %v1314, 113
    %v1325 = vpop.permute.xlu0 %1324
    %1326 = vrot.lane.b32.xlu0 %v1315, 113
    %v1327 = vpop.permute.xlu0 %1326
    %1328 = vrot.lane.b32.xlu0 %v1316, 113
    %v1329 = vpop.permute.xlu0 %1328
    %1330 = vrot.lane.b32.xlu0 %v1317, 113
    %v1331 = vpop.permute.xlu0 %1330
    %1332 = vrot.lane.b32.xlu0 %v1318, 113
    %v1333 = vpop.permute.xlu0 %1332
    %v1334 = vsel %vm292, %v1325, %v1327
    %v1335 = vsel %vm292, %v1327, %v1329
    %v1336 = vsel %vm292, %v1329, %v1331
    %v1337 = vsel %vm292, %v1331, %v1333
    %1342 = vst [vmem:[#allocation4 + $0xc0] sm:$0xff] %v1334
    %1343 = vst [vmem:[#allocation4 + $0xc8] sm:$0xff] %v1335
    %1344 = vst [vmem:[#allocation4 + $0xd0] sm:$0xff] %v1336
    %1345 = vst [vmem:[#allocation4 + $0xd8] sm:$0xff] %v1337
    %v1346 = vld [vmem:[#allocation2 + $0x8] sm:$0xff]
    %v1347 = vld [vmem:[#allocation2 + $0x10] sm:$0xff]
    %v1348 = vld [vmem:[#allocation2 + $0x18] sm:$0xff]
    %v1349 = vld [vmem:[#allocation2 + $0x20] sm:$0xff]
    %v1350 = vld [vmem:[#allocation2 + $0x28] sm:$0xff]
    %v1351 = vld [vmem:[%s565] ss:$8 sm:$0xf]
    %v1353 = vlaneseq
    %v1354 = vshrl.u32 %v1353, 7
    %v1355 = vsub.s32 0, %v1354
    %v1356 = vrot.slane %v1351, %v1355
    %v1357 = vlaneseq
    %v1358 = vshrl.u32 %v1357, 7
    %v1359 = vsub.s32 1, %v1358
    %v1360 = vrot.slane %v1351, %v1359
    %v1361 = vlaneseq
    %v1362 = vshrl.u32 %v1361, 7
    %v1363 = vsub.s32 2, %v1362
    %v1364 = vrot.slane %v1351, %v1363
    %v1365 = vlaneseq
    %v1366 = vshrl.u32 %v1365, 7
    %v1367 = vsub.s32 3, %v1366
    %v1368 = vrot.slane %v1351, %v1367
    %1369 = vrot.lane.b32.xlu0 %v1356, 16
    %v1370 = vpop.permute.xlu0 %1369
    %1371 = vrot.lane.b32.xlu0 %v1360, 16
    %v1372 = vpop.permute.xlu0 %1371
    %1373 = vrot.lane.b32.xlu0 %v1364, 16
    %v1374 = vpop.permute.xlu0 %1373
    %1375 = vrot.lane.b32.xlu0 %v1368, 16
    %v1376 = vpop.permute.xlu0 %1375
    %v1377 = vsel %vm247, %v1370, %v1372
    %v1378 = vsel %vm247, %v1372, %v1374
    %v1379 = vsel %vm247, %v1374, %v1376
    %v1385 = vmul.f32 %v1346, %v1370
    %v1386 = vmul.f32 %v1347, %v1377
    %v1387 = vmul.f32 %v1348, %v1378
    %v1388 = vmul.f32 %v1349, %v1379
    %v1389 = vmul.f32 %v1350, %v1376
    %1395 = vrot.lane.b32.xlu0 %v1385, 112
    %v1396 = vpop.permute.xlu0 %1395
    %1397 = vrot.lane.b32.xlu0 %v1386, 112
    %v1398 = vpop.permute.xlu0 %1397
    %1399 = vrot.lane.b32.xlu0 %v1387, 112
    %v1400 = vpop.permute.xlu0 %1399
    %1401 = vrot.lane.b32.xlu0 %v1388, 112
    %v1402 = vpop.permute.xlu0 %1401
    %1403 = vrot.lane.b32.xlu0 %v1389, 112
    %v1404 = vpop.permute.xlu0 %1403
    %v1405 = vsel %vm218, %v1396, %v1398
    %v1406 = vsel %vm218, %v1398, %v1400
    %v1407 = vsel %vm218, %v1400, %v1402
    %v1408 = vsel %vm218, %v1402, %v1404
    %1413 = vst [vmem:[#allocation4 + $0xe0] sm:$0xff] %v1405
    %1414 = vst [vmem:[#allocation4 + $0xe8] sm:$0xff] %v1406
    %1415 = vst [vmem:[#allocation4 + $0xf0] sm:$0xff] %v1407
    %1416 = vst [vmem:[#allocation4 + $0xf8] sm:$0xff] %v1408
    %v1417 = vld [vmem:[#allocation2 + $0x8] sm:$0xff]
    %v1418 = vld [vmem:[#allocation2 + $0x10] sm:$0xff]
    %v1419 = vld [vmem:[#allocation2 + $0x18] sm:$0xff]
    %v1420 = vld [vmem:[#allocation2 + $0x20] sm:$0xff]
    %v1421 = vld [vmem:[#allocation2 + $0x28] sm:$0xff]
    %v1422 = vld [vmem:[%s637] ss:$8 sm:$0xf]
    %v1424 = vlaneseq
    %v1425 = vshrl.u32 %v1424, 7
    %v1426 = vsub.s32 0, %v1425
    %v1427 = vrot.slane %v1422, %v1426
    %v1428 = vlaneseq
    %v1429 = vshrl.u32 %v1428, 7
    %v1430 = vsub.s32 1, %v1429
    %v1431 = vrot.slane %v1422, %v1430
    %v1432 = vlaneseq
    %v1433 = vshrl.u32 %v1432, 7
    %v1434 = vsub.s32 2, %v1433
    %v1435 = vrot.slane %v1422, %v1434
    %v1436 = vlaneseq
    %v1437 = vshrl.u32 %v1436, 7
    %v1438 = vsub.s32 3, %v1437
    %v1439 = vrot.slane %v1422, %v1438
    %1440 = vrot.lane.b32.xlu0 %v1427, 17
    %v1441 = vpop.permute.xlu0 %1440
    %1442 = vrot.lane.b32.xlu0 %v1431, 17
    %v1443 = vpop.permute.xlu0 %1442
    %1444 = vrot.lane.b32.xlu0 %v1435, 17
    %v1445 = vpop.permute.xlu0 %1444
    %1446 = vrot.lane.b32.xlu0 %v1439, 17
    %v1447 = vpop.permute.xlu0 %1446
    %v1448 = vsel %vm173, %v1441, %v1443
    %v1449 = vsel %vm173, %v1443, %v1445
    %v1450 = vsel %vm173, %v1445, %v1447
    %v1456 = vmul.f32 %v1417, %v1441
    %v1457 = vmul.f32 %v1418, %v1448
    %v1458 = vmul.f32 %v1419, %v1449
    %v1459 = vmul.f32 %v1420, %v1450
    %v1460 = vmul.f32 %v1421, %v1447
    %1466 = vrot.lane.b32.xlu0 %v1456, 111
    %v1467 = vpop.permute.xlu0 %1466
    %1468 = vrot.lane.b32.xlu0 %v1457, 111
    %v1469 = vpop.permute.xlu0 %1468
    %1470 = vrot.lane.b32.xlu0 %v1458, 111
    %v1471 = vpop.permute.xlu0 %1470
    %1472 = vrot.lane.b32.xlu0 %v1459, 111
    %v1473 = vpop.permute.xlu0 %1472
    %1474 = vrot.lane.b32.xlu0 %v1460, 111
    %v1475 = vpop.permute.xlu0 %1474
    %v1476 = vsel %vm144, %v1467, %v1469
    %v1477 = vsel %vm144, %v1469, %v1471
    %v1478 = vsel %vm144, %v1471, %v1473
    %v1479 = vsel %vm144, %v1473, %v1475
    %1484 = vst [vmem:[#allocation4 + $0x100] sm:$0xff] %v1476
    %1485 = vst [vmem:[#allocation4 + $0x108] sm:$0xff] %v1477
    %1486 = vst [vmem:[#allocation4 + $0x110] sm:$0xff] %v1478
    %1487 = vst [vmem:[#allocation4 + $0x118] sm:$0xff] %v1479
    %v1488 = vld [vmem:[#allocation11 + $0x10] sm:$0xff]
    %v1489 = vld [vmem:[#allocation4] sm:$0xff]
    %v1490 = vld [vmem:[#allocation4 + $0x8] sm:$0xff]
    %v1491 = vld [vmem:[#allocation4 + $0x10] sm:$0xff]
    %v1492 = vld [vmem:[#allocation4 + $0x18] sm:$0xff]
    %v1493 = vld [vmem:[#allocation4 + $0x20] sm:$0xff]
    %v1494 = vld [vmem:[#allocation4 + $0x28] sm:$0xff]
    %v1495 = vld [vmem:[#allocation4 + $0x30] sm:$0xff]
    %v1496 = vld [vmem:[#allocation4 + $0x38] sm:$0xff]
    %v1497 = vld [vmem:[#allocation4 + $0x40] sm:$0xff]
    %v1498 = vld [vmem:[#allocation4 + $0x48] sm:$0xff]
    %v1499 = vld [vmem:[#allocation4 + $0x50] sm:$0xff]
    %v1500 = vld [vmem:[#allocation4 + $0x58] sm:$0xff]
    %v1501 = vld [vmem:[#allocation4 + $0x60] sm:$0xff]
    %v1502 = vld [vmem:[#allocation4 + $0x68] sm:$0xff]
    %v1503 = vld [vmem:[#allocation4 + $0x70] sm:$0xff]
    %v1504 = vld [vmem:[#allocation4 + $0x78] sm:$0xff]
    %v1505 = vld [vmem:[#allocation4 + $0x80] sm:$0xff]
    %v1506 = vld [vmem:[#allocation4 + $0x88] sm:$0xff]
    %v1507 = vld [vmem:[#allocation4 + $0x90] sm:$0xff]
    %v1508 = vld [vmem:[#allocation4 + $0x98] sm:$0xff]
    %v1509 = vld [vmem:[#allocation4 + $0xa0] sm:$0xff]
    %v1510 = vld [vmem:[#allocation4 + $0xa8] sm:$0xff]
    %v1511 = vld [vmem:[#allocation4 + $0xb0] sm:$0xff]
    %v1512 = vld [vmem:[#allocation4 + $0xb8] sm:$0xff]
    %v1513 = vld [vmem:[#allocation4 + $0xc0] sm:$0xff]
    %v1514 = vld [vmem:[#allocation4 + $0xc8] sm:$0xff]
    %v1515 = vld [vmem:[#allocation4 + $0xd0] sm:$0xff]
    %v1516 = vld [vmem:[#allocation4 + $0xd8] sm:$0xff]
    %v1517 = vld [vmem:[#allocation4 + $0xe0] sm:$0xff]
    %v1518 = vld [vmem:[#allocation4 + $0xe8] sm:$0xff]
    %v1519 = vld [vmem:[#allocation4 + $0xf0] sm:$0xff]
    %v1520 = vld [vmem:[#allocation4 + $0xf8] sm:$0xff]
    %v1521 = vld [vmem:[#allocation4 + $0x100] sm:$0xff]
    %v1522 = vld [vmem:[#allocation4 + $0x108] sm:$0xff]
    %v1523 = vld [vmem:[#allocation4 + $0x110] sm:$0xff]
    %v1524 = vld [vmem:[#allocation4 + $0x118] sm:$0xff]
    %v1525 = vld [vmem:[#allocation4 + $0x120] sm:$0x1]
    %v1526 = vld [vmem:[#allocation4 + $0x128] sm:$0x1]
    %v1527 = vld [vmem:[#allocation4 + $0x130] sm:$0x1]
    %v1528 = vld [vmem:[#allocation4 + $0x138] sm:$0x1]
    %v1530 = vsel %vm745, %v1488, 0
    %v1533 = vsel %vm749, %v1525, 0
    %v1536 = vsel %vm749, %v1526, 0
    %v1539 = vsel %vm749, %v1527, 0
    %v1542 = vsel %vm749, %v1528, 0
    %1544 = vmatprep.subr.mxu0 0.0
    %1545 = vmatpush1.msra.mxu0 0.0
    %1546 = vmatprep.subr.mxu0 0.0
    %1547 = vmatpush1.msra.mxu0 0.0
    %1548 = vmatprep.subr.mxu0 0.0
    %1549 = vmatpush1.msra.mxu0 0.0
    %1550 = vmatprep.subr.mxu0 0.0
    %1551 = vmatpush1.msra.mxu0 0.0
    %1552 = vmatprep.subr.mxu0 0.0
    %1553 = vmatpush1.msra.mxu0 0.0
    %1554 = vmatprep.subr.mxu0 0.0
    %1555 = vmatpush1.msra.mxu0 0.0
    %1556 = vmatprep.subr.mxu0 %v1536
    %1557 = vmatpush1.msra.mxu0 %v1533
    %1558 = vmatprep.subr.mxu0 %v1522
    %1559 = vmatpush1.msra.mxu0 %v1521
    %1560 = vmatprep.subr.mxu0 %v1518
    %1561 = vmatpush1.msra.mxu0 %v1517
    %1562 = vmatprep.subr.mxu0 %v1514
    %1563 = vmatpush1.msra.mxu0 %v1513
    %1564 = vmatprep.subr.mxu0 %v1510
    %1565 = vmatpush1.msra.mxu0 %v1509
    %1566 = vmatprep.subr.mxu0 %v1506
    %1567 = vmatpush1.msra.mxu0 %v1505
    %1568 = vmatprep.subr.mxu0 %v1502
    %1569 = vmatpush1.msra.mxu0 %v1501
    %1570 = vmatprep.subr.mxu0 %v1498
    %1571 = vmatpush1.msra.mxu0 %v1497
    %1572 = vmatprep.subr.mxu0 %v1494
    %1573 = vmatpush1.msra.mxu0 %v1493
    %1574 = vmatprep.subr.mxu0 %v1490
    %1575 = vmatpush1.msra.mxu0 %v1489
    %1576 = vmatprep.subr.mxu0 0.0
    %1577 = vmatpush2.msra.mxu0 0.0
    %1578 = vmatprep.subr.mxu0 0.0
    %1579 = vmatpush2.msra.mxu0 0.0
    %1580 = vmatprep.subr.mxu0 0.0
    %1581 = vmatpush2.msra.mxu0 0.0
    %1582 = vmatprep.subr.mxu0 0.0
    %1583 = vmatpush2.msra.mxu0 0.0
    %1584 = vmatprep.subr.mxu0 0.0
    %1585 = vmatpush2.msra.mxu0 0.0
    %1586 = vmatprep.subr.mxu0 0.0
    %1587 = vmatpush2.msra.mxu0 0.0
    %1588 = vmatprep.subr.mxu0 0.0
    %1589 = vmatpush2.msra.mxu0 0.0
    %1590 = vmatprep.subr.mxu0 0.0
    %1591 = vmatpush2.msra.mxu0 0.0
    %1592 = vmatprep.subr.mxu0 0.0
    %1593 = vmatpush2.msra.mxu0 0.0
    %1594 = vmatprep.subr.mxu0 0.0
    %1595 = vmatpush2.msra.mxu0 0.0
    %1596 = vmatprep.subr.mxu0 0.0
    %1597 = vmatpush2.msra.mxu0 0.0
    %1598 = vmatprep.subr.mxu0 0.0
    %1599 = vmatpush2.msra.mxu0 0.0
    %1600 = vmatprep.subr.mxu0 0.0
    %1601 = vmatpush2.msra.mxu0 0.0
    %1602 = vmatprep.subr.mxu0 0.0
    %1603 = vmatpush2.msra.mxu0 0.0
    %1604 = vmatprep.subr.mxu0 0.0
    %1605 = vmatpush2.msra.mxu0 0.0
    %1606 = vmatprep.subr.mxu0 0.0
    %1607 = vmatpush2.msra.mxu0 0.0
    %1608 = vmatprep.mubr.f32.mxu0 0.0
    %1609 = vmatmul.mubr.f32.gmra.mxu0 %v1530
    %v1610 = vpop.f32.mrf.mxu0
    %v1611 = vadd.f32 %v104, %v1610
    %v1612 = vpop.f32.mrf.mxu0
    %v1613 = vadd.f32 %v105, %v1612
    %1614 = vdwg.mxu0
    %1615 = vmatprep.subr.mxu0 0.0
    %1616 = vmatpush1.msra.mxu0 0.0
    %1617 = vmatprep.subr.mxu0 0.0
    %1618 = vmatpush1.msra.mxu0 0.0
    %1619 = vmatprep.subr.mxu0 0.0
    %1620 = vmatpush1.msra.mxu0 0.0
    %1621 = vmatprep.subr.mxu0 0.0
    %1622 = vmatpush1.msra.mxu0 0.0
    %1623 = vmatprep.subr.mxu0 0.0
    %1624 = vmatpush1.msra.mxu0 0.0
    %1625 = vmatprep.subr.mxu0 0.0
    %1626 = vmatpush1.msra.mxu0 0.0
    %1627 = vmatprep.subr.mxu0 %v1542
    %1628 = vmatpush1.msra.mxu0 %v1539
    %1629 = vmatprep.subr.mxu0 %v1524
    %1630 = vmatpush1.msra.mxu0 %v1523
    %1631 = vmatprep.subr.mxu0 %v1520
    %1632 = vmatpush1.msra.mxu0 %v1519
    %1633 = vmatprep.subr.mxu0 %v1516
    %1634 = vmatpush1.msra.mxu0 %v1515
    %1635 = vmatprep.subr.mxu0 %v1512
    %1636 = vmatpush1.msra.mxu0 %v1511
    %1637 = vmatprep.subr.mxu0 %v1508
    %1638 = vmatpush1.msra.mxu0 %v1507
    %1639 = vmatprep.subr.mxu0 %v1504
    %1640 = vmatpush1.msra.mxu0 %v1503
    %1641 = vmatprep.subr.mxu0 %v1500
    %1642 = vmatpush1.msra.mxu0 %v1499
    %1643 = vmatprep.subr.mxu0 %v1496
    %1644 = vmatpush1.msra.mxu0 %v1495
    %1645 = vmatprep.subr.mxu0 %v1492
    %1646 = vmatpush1.msra.mxu0 %v1491
    %1647 = vmatprep.subr.mxu0 0.0
    %1648 = vmatpush2.msra.mxu0 0.0
    %1649 = vmatprep.subr.mxu0 0.0
    %1650 = vmatpush2.msra.mxu0 0.0
    %1651 = vmatprep.subr.mxu0 0.0
    %1652 = vmatpush2.msra.mxu0 0.0
    %1653 = vmatprep.subr.mxu0 0.0
    %1654 = vmatpush2.msra.mxu0 0.0
    %1655 = vmatprep.subr.mxu0 0.0
    %1656 = vmatpush2.msra.mxu0 0.0
    %1657 = vmatprep.subr.mxu0 0.0
    %1658 = vmatpush2.msra.mxu0 0.0
    %1659 = vmatprep.subr.mxu0 0.0
    %1660 = vmatpush2.msra.mxu0 0.0
    %1661 = vmatprep.subr.mxu0 0.0
    %1662 = vmatpush2.msra.mxu0 0.0
    %1663 = vmatprep.subr.mxu0 0.0
    %1664 = vmatpush2.msra.mxu0 0.0
    %1665 = vmatprep.subr.mxu0 0.0
    %1666 = vmatpush2.msra.mxu0 0.0
    %1667 = vmatprep.subr.mxu0 0.0
    %1668 = vmatpush2.msra.mxu0 0.0
    %1669 = vmatprep.subr.mxu0 0.0
    %1670 = vmatpush2.msra.mxu0 0.0
    %1671 = vmatprep.subr.mxu0 0.0
    %1672 = vmatpush2.msra.mxu0 0.0
    %1673 = vmatprep.subr.mxu0 0.0
    %1674 = vmatpush2.msra.mxu0 0.0
    %1675 = vmatprep.subr.mxu0 0.0
    %1676 = vmatpush2.msra.mxu0 0.0
    %1677 = vmatprep.subr.mxu0 0.0
    %1678 = vmatpush2.msra.mxu0 0.0
    %1679 = vmatprep.mubr.f32.mxu0 0.0
    %1680 = vmatmul.mubr.f32.gmra.mxu0 %v1530
    %v1681 = vpop.f32.mrf.mxu0
    %v1682 = vadd.f32 %v106, %v1681
    %v1683 = vpop.f32.mrf.mxu0
    %v1684 = vadd.f32 %v107, %v1683
    %1685 = vdwg.mxu0
    %v1686 = vmax.f32 %v1611, 0.0
    %v1687 = vmax.f32 %v1613, 0.0
    %v1688 = vmax.f32 %v1682, 0.0
    %v1689 = vmax.f32 %v1684, 0.0
    %1690 = vst [vmem:[#allocation2 + $0x8] sm:$0xff] %v1686
    %1691 = vst [vmem:[#allocation2 + $0x10] sm:$0xff] %v1687
    %1692 = vst [vmem:[#allocation2 + $0x18] sm:$0xff] %v1688
    %1693 = vst [vmem:[#allocation2 + $0x20] sm:$0xff] %v1689
    %v1694 = vld [vmem:[#allocation9] sm:$0xff]
    %v1695 = vld [vmem:[#allocation9 + $0x8] sm:$0xff]
    %1696 = vst [vmem:[#allocation3 + $0x8] sm:$0xff] %v1694
    %1697 = vst [vmem:[#allocation3 + $0x20] sm:$0xff] %v1695
    %v1698 = vld [vmem:[#allocation3] sm:$0xff]
    %v1699 = vld [vmem:[#allocation3 + $0x8] sm:$0xff]
    %v1700 = vld [vmem:[#allocation3 + $0x18] sm:$0xff]
    %v1701 = vld [vmem:[#allocation3 + $0x20] sm:$0xff]
    %v1702 = vld [vmem:[#allocation14 + $0x200] sm:$0x1]
    %v1703 = vlaneseq
    %v1704 = vshrl.u32 %v1703, 7
    %v1705 = vsub.s32 0, %v1704
    %v1706 = vrot.slane %v1702, %v1705
    %1708 = vrot.lane.b32.xlu0 %v1706, 119
    %v1709 = vpop.permute.xlu0 %1708
    %v1711 = vmul.f32 %v1698, %v1709
    %v1712 = vmul.f32 %v1699, %v1709
    %v1713 = vmul.f32 %v1700, %v1709
    %v1714 = vmul.f32 %v1701, %v1709
    %1719 = vrot.lane.b32.xlu0 %v1711, 9
    %v1720 = vpop.permute.xlu0 %1719
    %1721 = vrot.lane.b32.xlu0 %v1712, 9
    %v1722 = vpop.permute.xlu0 %1721
    %1723 = vrot.lane.b32.xlu0 %v1713, 9
    %v1724 = vpop.permute.xlu0 %1723
    %1725 = vrot.lane.b32.xlu0 %v1714, 9
    %v1726 = vpop.permute.xlu0 %1725
    %vm1727 = vcmask 72704
    %v1728 = vsel %vm1727, %v1720, %v1722
    %v1729 = vsel %vm1727, %v1724, %v1726
    %1732 = vst [vmem:[#allocation5] sm:$0xff] %v1728
    %1733 = vst [vmem:[#allocation5 + $0x8] sm:$0xff] %v1729
    %v1734 = vld [vmem:[#allocation3] sm:$0xff]
    %v1735 = vld [vmem:[#allocation3 + $0x8] sm:$0xff]
    %v1736 = vld [vmem:[#allocation3 + $0x18] sm:$0xff]
    %v1737 = vld [vmem:[#allocation3 + $0x20] sm:$0xff]
    %v1738 = vld [vmem:[#allocation14 + $0x201] sm:$0x1]
    %v1739 = vlaneseq
    %v1740 = vshrl.u32 %v1739, 7
    %v1741 = vsub.s32 0, %v1740
    %v1742 = vrot.slane %v1738, %v1741
    %1744 = vrot.lane.b32.xlu0 %v1742, 120
    %v1745 = vpop.permute.xlu0 %1744
    %v1747 = vmul.f32 %v1734, %v1745
    %v1748 = vmul.f32 %v1735, %v1745
    %v1749 = vmul.f32 %v1736, %v1745
    %v1750 = vmul.f32 %v1737, %v1745
    %1755 = vrot.lane.b32.xlu0 %v1747, 8
    %v1756 = vpop.permute.xlu0 %1755
    %1757 = vrot.lane.b32.xlu0 %v1748, 8
    %v1758 = vpop.permute.xlu0 %1757
    %1759 = vrot.lane.b32.xlu0 %v1749, 8
    %v1760 = vpop.permute.xlu0 %1759
    %1761 = vrot.lane.b32.xlu0 %v1750, 8
    %v1762 = vpop.permute.xlu0 %1761
    %vm1763 = vcmask 64512
    %v1764 = vsel %vm1763, %v1756, %v1758
    %v1765 = vsel %vm1763, %v1760, %v1762
    %1768 = vst [vmem:[#allocation5 + $0x10] sm:$0xff] %v1764
    %1769 = vst [vmem:[#allocation5 + $0x18] sm:$0xff] %v1765
    %v1770 = vld [vmem:[#allocation3] sm:$0xff]
    %v1771 = vld [vmem:[#allocation3 + $0x8] sm:$0xff]
    %v1772 = vld [vmem:[#allocation3 + $0x18] sm:$0xff]
    %v1773 = vld [vmem:[#allocation3 + $0x20] sm:$0xff]
    %v1774 = vld [vmem:[#allocation14 + $0x202] sm:$0x1]
    %v1775 = vlaneseq
    %v1776 = vshrl.u32 %v1775, 7
    %v1777 = vsub.s32 0, %v1776
    %v1778 = vrot.slane %v1774, %v1777
    %1780 = vrot.lane.b32.xlu0 %v1778, 121
    %v1781 = vpop.permute.xlu0 %1780
    %v1783 = vmul.f32 %v1770, %v1781
    %v1784 = vmul.f32 %v1771, %v1781
    %v1785 = vmul.f32 %v1772, %v1781
    %v1786 = vmul.f32 %v1773, %v1781
    %1791 = vrot.lane.b32.xlu0 %v1783, 7
    %v1792 = vpop.permute.xlu0 %1791
    %1793 = vrot.lane.b32.xlu0 %v1784, 7
    %v1794 = vpop.permute.xlu0 %1793
    %1795 = vrot.lane.b32.xlu0 %v1785, 7
    %v1796 = vpop.permute.xlu0 %1795
    %1797 = vrot.lane.b32.xlu0 %v1786, 7
    %v1798 = vpop.permute.xlu0 %1797
    %vm1799 = vcmask 56320
    %v1800 = vsel %vm1799, %v1792, %v1794
    %v1801 = vsel %vm1799, %v1796, %v1798
    %1804 = vst [vmem:[#allocation5 + $0x20] sm:$0xff] %v1800
    %1805 = vst [vmem:[#allocation5 + $0x28] sm:$0xff] %v1801
    %v1806 = vld [vmem:[#allocation3] sm:$0xff]
    %v1807 = vld [vmem:[#allocation3 + $0x8] sm:$0xff]
    %v1808 = vld [vmem:[#allocation3 + $0x18] sm:$0xff]
    %v1809 = vld [vmem:[#allocation3 + $0x20] sm:$0xff]
    %v1810 = vld [vmem:[#allocation14 + $0x203] sm:$0x1]
    %v1811 = vlaneseq
    %v1812 = vshrl.u32 %v1811, 7
    %v1813 = vsub.s32 0, %v1812
    %v1814 = vrot.slane %v1810, %v1813
    %1816 = vrot.lane.b32.xlu0 %v1814, 127
    %v1817 = vpop.permute.xlu0 %1816
    %v1819 = vmul.f32 %v1806, %v1817
    %v1820 = vmul.f32 %v1807, %v1817
    %v1821 = vmul.f32 %v1808, %v1817
    %v1822 = vmul.f32 %v1809, %v1817
    %1827 = vrot.lane.b32.xlu0 %v1819, 1
    %v1828 = vpop.permute.xlu0 %1827
    %1829 = vrot.lane.b32.xlu0 %v1820, 1
    %v1830 = vpop.permute.xlu0 %1829
    %1831 = vrot.lane.b32.xlu0 %v1821, 1
    %v1832 = vpop.permute.xlu0 %1831
    %1833 = vrot.lane.b32.xlu0 %v1822, 1
    %v1834 = vpop.permute.xlu0 %1833
    %v1835 = vsel %vm395, %v1828, %v1830
    %v1836 = vsel %vm395, %v1832, %v1834
    %1839 = vst [vmem:[#allocation5 + $0x30] sm:$0xff] %v1835
    %1840 = vst [vmem:[#allocation5 + $0x38] sm:$0xff] %v1836
    %v1841 = vld [vmem:[#allocation3 + $0x8] sm:$0xff]
    %v1842 = vld [vmem:[#allocation3 + $0x20] sm:$0xff]
    %1843 = vst [vmem:[#allocation5 + $0x40] sm:$0xff] %v1841
    %1844 = vst [vmem:[#allocation5 + $0x48] sm:$0xff] %v1842
    %v1845 = vld [vmem:[#allocation3 + $0x8] sm:$0xff]
    %v1846 = vld [vmem:[#allocation3 + $0x10] sm:$0xff]
    %v1847 = vld [vmem:[#allocation3 + $0x20] sm:$0xff]
    %v1848 = vld [vmem:[#allocation3 + $0x28] sm:$0xff]
    %v1849 = vld [vmem:[#allocation14 + $0x205] sm:$0x1]
    %v1850 = vlaneseq
    %v1851 = vshrl.u32 %v1850, 7
    %v1852 = vsub.s32 0, %v1851
    %v1853 = vrot.slane %v1849, %v1852
    %1855 = vrot.lane.b32.xlu0 %v1853, 1
    %v1856 = vpop.permute.xlu0 %1855
    %v1858 = vmul.f32 %v1845, %v1856
    %v1859 = vmul.f32 %v1846, %v1856
    %v1860 = vmul.f32 %v1847, %v1856
    %v1861 = vmul.f32 %v1848, %v1856
    %1866 = vrot.lane.b32.xlu0 %v1858, 127
    %v1867 = vpop.permute.xlu0 %1866
    %1868 = vrot.lane.b32.xlu0 %v1859, 127
    %v1869 = vpop.permute.xlu0 %1868
    %1870 = vrot.lane.b32.xlu0 %v1860, 127
    %v1871 = vpop.permute.xlu0 %1870
    %1872 = vrot.lane.b32.xlu0 %v1861, 127
    %v1873 = vpop.permute.xlu0 %1872
    %v1874 = vsel %vm366, %v1867, %v1869
    %v1875 = vsel %vm366, %v1871, %v1873
    %1878 = vst [vmem:[#allocation5 + $0x50] sm:$0xff] %v1874
    %1879 = vst [vmem:[#allocation5 + $0x58] sm:$0xff] %v1875
    %v1880 = vld [vmem:[#allocation3 + $0x8] sm:$0xff]
    %v1881 = vld [vmem:[#allocation3 + $0x10] sm:$0xff]
    %v1882 = vld [vmem:[#allocation3 + $0x20] sm:$0xff]
    %v1883 = vld [vmem:[#allocation3 + $0x28] sm:$0xff]
    %v1884 = vld [vmem:[#allocation14 + $0x206] sm:$0x1]
    %v1885 = vlaneseq
    %v1886 = vshrl.u32 %v1885, 7
    %v1887 = vsub.s32 0, %v1886
    %v1888 = vrot.slane %v1884, %v1887
    %1890 = vrot.lane.b32.xlu0 %v1888, 7
    %v1891 = vpop.permute.xlu0 %1890
    %v1893 = vmul.f32 %v1880, %v1891
    %v1894 = vmul.f32 %v1881, %v1891
    %v1895 = vmul.f32 %v1882, %v1891
    %v1896 = vmul.f32 %v1883, %v1891
    %1901 = vrot.lane.b32.xlu0 %v1893, 121
    %v1902 = vpop.permute.xlu0 %1901
    %1903 = vrot.lane.b32.xlu0 %v1894, 121
    %v1904 = vpop.permute.xlu0 %1903
    %1905 = vrot.lane.b32.xlu0 %v1895, 121
    %v1906 = vpop.permute.xlu0 %1905
    %1907 = vrot.lane.b32.xlu0 %v1896, 121
    %v1908 = vpop.permute.xlu0 %1907
    %vm1909 = vcmask 990208
    %v1910 = vsel %vm1909, %v1902, %v1904
    %v1911 = vsel %vm1909, %v1906, %v1908
    %1914 = vst [vmem:[#allocation5 + $0x60] sm:$0xff] %v1910
    %1915 = vst [vmem:[#allocation5 + $0x68] sm:$0xff] %v1911
    %v1916 = vld [vmem:[#allocation3 + $0x8] sm:$0xff]
    %v1917 = vld [vmem:[#allocation3 + $0x10] sm:$0xff]
    %v1918 = vld [vmem:[#allocation3 + $0x20] sm:$0xff]
    %v1919 = vld [vmem:[#allocation3 + $0x28] sm:$0xff]
    %v1920 = vld [vmem:[#allocation14 + $0x207] sm:$0x1]
    %v1921 = vlaneseq
    %v1922 = vshrl.u32 %v1921, 7
    %v1923 = vsub.s32 0, %v1922
    %v1924 = vrot.slane %v1920, %v1923
    %1926 = vrot.lane.b32.xlu0 %v1924, 8
    %v1927 = vpop.permute.xlu0 %1926
    %v1929 = vmul.f32 %v1916, %v1927
    %v1930 = vmul.f32 %v1917, %v1927
    %v1931 = vmul.f32 %v1918, %v1927
    %v1932 = vmul.f32 %v1919, %v1927
    %1937 = vrot.lane.b32.xlu0 %v1929, 120
    %v1938 = vpop.permute.xlu0 %1937
    %1939 = vrot.lane.b32.xlu0 %v1930, 120
    %v1940 = vpop.permute.xlu0 %1939
    %1941 = vrot.lane.b32.xlu0 %v1931, 120
    %v1942 = vpop.permute.xlu0 %1941
    %1943 = vrot.lane.b32.xlu0 %v1932, 120
    %v1944 = vpop.permute.xlu0 %1943
    %vm1945 = vcmask 982016
    %v1946 = vsel %vm1945, %v1938, %v1940
    %v1947 = vsel %vm1945, %v1942, %v1944
    %1950 = vst [vmem:[#allocation5 + $0x70] sm:$0xff] %v1946
    %1951 = vst [vmem:[#allocation5 + $0x78] sm:$0xff] %v1947
    %v1952 = vld [vmem:[#allocation3 + $0x8] sm:$0xff]
    %v1953 = vld [vmem:[#allocation3 + $0x10] sm:$0xff]
    %v1954 = vld [vmem:[#allocation3 + $0x20] sm:$0xff]
    %v1955 = vld [vmem:[#allocation3 + $0x28] sm:$0xff]
    %v1956 = vld [vmem:[#allocation14 + $0x208] sm:$0x1]
    %v1957 = vlaneseq
    %v1958 = vshrl.u32 %v1957, 7
    %v1959 = vsub.s32 0, %v1958
    %v1960 = vrot.slane %v1956, %v1959
    %1962 = vrot.lane.b32.xlu0 %v1960, 9
    %v1963 = vpop.permute.xlu0 %1962
    %v1965 = vmul.f32 %v1952, %v1963
    %v1966 = vmul.f32 %v1953, %v1963
    %v1967 = vmul.f32 %v1954, %v1963
    %v1968 = vmul.f32 %v1955, %v1963
    %1973 = vrot.lane.b32.xlu0 %v1965, 119
    %v1974 = vpop.permute.xlu0 %1973
    %1975 = vrot.lane.b32.xlu0 %v1966, 119
    %v1976 = vpop.permute.xlu0 %1975
    %1977 = vrot.lane.b32.xlu0 %v1967, 119
    %v1978 = vpop.permute.xlu0 %1977
    %1979 = vrot.lane.b32.xlu0 %v1968, 119
    %v1980 = vpop.permute.xlu0 %1979
    %vm1981 = vcmask 973824
    %v1982 = vsel %vm1981, %v1974, %v1976
    %v1983 = vsel %vm1981, %v1978, %v1980
    %1986 = vst [vmem:[#allocation5 + $0x80] sm:$0xff] %v1982
    %1987 = vst [vmem:[#allocation5 + $0x88] sm:$0xff] %v1983
    %v1988 = vld [vmem:[#allocation11 + $0x40] sm:$0xff]
    %v1989 = vld [vmem:[#allocation11 + $0x48] sm:$0xff]
    %v1990 = vld [vmem:[#allocation11 + $0x50] sm:$0xff]
    %v1991 = vld [vmem:[#allocation11 + $0x58] sm:$0xff]
    %v1992 = vld [vmem:[#allocation5] sm:$0xff]
    %v1993 = vld [vmem:[#allocation5 + $0x8] sm:$0xff]
    %v1994 = vld [vmem:[#allocation5 + $0x10] sm:$0xff]
    %v1995 = vld [vmem:[#allocation5 + $0x18] sm:$0xff]
    %v1996 = vld [vmem:[#allocation5 + $0x20] sm:$0xff]
    %v1997 = vld [vmem:[#allocation5 + $0x28] sm:$0xff]
    %v1998 = vld [vmem:[#allocation5 + $0x30] sm:$0xff]
    %v1999 = vld [vmem:[#allocation5 + $0x38] sm:$0xff]
    %v2000 = vld [vmem:[#allocation5 + $0x40] sm:$0xff]
    %v2001 = vld [vmem:[#allocation5 + $0x48] sm:$0xff]
    %v2002 = vld [vmem:[#allocation5 + $0x50] sm:$0xff]
    %v2003 = vld [vmem:[#allocation5 + $0x58] sm:$0xff]
    %v2004 = vld [vmem:[#allocation5 + $0x60] sm:$0xff]
    %v2005 = vld [vmem:[#allocation5 + $0x68] sm:$0xff]
    %v2006 = vld [vmem:[#allocation5 + $0x70] sm:$0xff]
    %v2007 = vld [vmem:[#allocation5 + $0x78] sm:$0xff]
    %v2008 = vld [vmem:[#allocation5 + $0x80] sm:$0xff]
    %v2009 = vld [vmem:[#allocation5 + $0x88] sm:$0xff]
    %v2010 = vld [vmem:[#allocation5 + $0x90] sm:$0x1]
    %v2012 = vsel %vm173, %v1989, 0
    %v2015 = vsel %vm173, %v1991, 0
    %v2018 = vsel %vm749, %v2010, 0
    %2020 = vmatprep.subr.mxu0 0.0
    %2021 = vmatpush1.msra.mxu0 %v2007
    %2022 = vmatprep.subr.mxu0 0.0
    %2023 = vmatpush1.msra.mxu0 %v2006
    %2024 = vmatprep.subr.mxu0 0.0
    %2025 = vmatpush1.msra.mxu0 %v2005
    %2026 = vmatprep.subr.mxu0 0.0
    %2027 = vmatpush1.msra.mxu0 %v2004
    %2028 = vmatprep.subr.mxu0 0.0
    %2029 = vmatpush1.msra.mxu0 %v2003
    %2030 = vmatprep.subr.mxu0 0.0
    %2031 = vmatpush1.msra.mxu0 %v2002
    %2032 = vmatprep.subr.mxu0 0.0
    %2033 = vmatpush1.msra.mxu0 %v2001
    %2034 = vmatprep.subr.mxu0 0.0
    %2035 = vmatpush1.msra.mxu0 %v2000
    %2036 = vmatprep.subr.mxu0 0.0
    %2037 = vmatpush1.msra.mxu0 %v1999
    %2038 = vmatprep.subr.mxu0 0.0
    %2039 = vmatpush1.msra.mxu0 %v1998
    %2040 = vmatprep.subr.mxu0 0.0
    %2041 = vmatpush1.msra.mxu0 %v1997
    %2042 = vmatprep.subr.mxu0 0.0
    %2043 = vmatpush1.msra.mxu0 %v1996
    %2044 = vmatprep.subr.mxu0 0.0
    %2045 = vmatpush1.msra.mxu0 %v1995
    %2046 = vmatprep.subr.mxu0 0.0
    %2047 = vmatpush1.msra.mxu0 %v1994
    %2048 = vmatprep.subr.mxu0 0.0
    %2049 = vmatpush1.msra.mxu0 %v1993
    %2050 = vmatprep.subr.mxu0 0.0
    %2051 = vmatpush1.msra.mxu0 %v1992
    %2052 = vmatprep.subr.mxu0 0.0
    %2053 = vmatpush2.msra.mxu0 0.0
    %2054 = vmatprep.subr.mxu0 0.0
    %2055 = vmatpush2.msra.mxu0 0.0
    %2056 = vmatprep.subr.mxu0 0.0
    %2057 = vmatpush2.msra.mxu0 0.0
    %2058 = vmatprep.subr.mxu0 0.0
    %2059 = vmatpush2.msra.mxu0 0.0
    %2060 = vmatprep.subr.mxu0 0.0
    %2061 = vmatpush2.msra.mxu0 0.0
    %2062 = vmatprep.subr.mxu0 0.0
    %2063 = vmatpush2.msra.mxu0 0.0
    %2064 = vmatprep.subr.mxu0 0.0
    %2065 = vmatpush2.msra.mxu0 0.0
    %2066 = vmatprep.subr.mxu0 0.0
    %2067 = vmatpush2.msra.mxu0 0.0
    %2068 = vmatprep.subr.mxu0 0.0
    %2069 = vmatpush2.msra.mxu0 0.0
    %2070 = vmatprep.subr.mxu0 0.0
    %2071 = vmatpush2.msra.mxu0 0.0
    %2072 = vmatprep.subr.mxu0 0.0
    %2073 = vmatpush2.msra.mxu0 0.0
    %2074 = vmatprep.subr.mxu0 0.0
    %2075 = vmatpush2.msra.mxu0 0.0
    %2076 = vmatprep.subr.mxu0 0.0
    %2077 = vmatpush2.msra.mxu0 0.0
    %2078 = vmatprep.subr.mxu0 0.0
    %2079 = vmatpush2.msra.mxu0 %v2018
    %2080 = vmatprep.subr.mxu0 0.0
    %2081 = vmatpush2.msra.mxu0 %v2009
    %2082 = vmatprep.subr.mxu0 0.0
    %2083 = vmatpush2.msra.mxu0 %v2008
    %2084 = vmatprep.mubr.f32.mxu0 %v2012
    %2085 = vmatmul.mubr.f32.gmra.mxu0 %v1988
    %v2086 = vpop.f32.mrf.mxu0
    %v2087 = vadd.f32 0.0, %v2086
    %v2088 = vpop.f32.mrf.mxu0
    %2089 = vmatprep.mubr.f32.mxu0 %v2015
    %2090 = vmatmul.mubr.f32.gmra.mxu0 %v1990
    %v2091 = vpop.f32.mrf.mxu0
    %v2092 = vadd.f32 0.0, %v2091
    %v2093 = vpop.f32.mrf.mxu0
    %2094 = vdwg.mxu0
    %v2095 = vmax.f32 %v2087, 0.0
    %v2096 = vmax.f32 %v2092, 0.0
    %2097 = vst [vmem:[#allocation3 + $0x8] sm:$0xff] %v2095
    %2098 = vst [vmem:[#allocation3 + $0x20] sm:$0xff] %v2096
    %v2099 = vld [vmem:[#allocation3] sm:$0xff]
    %v2100 = vld [vmem:[#allocation3 + $0x8] sm:$0xff]
    %v2101 = vld [vmem:[#allocation3 + $0x18] sm:$0xff]
    %v2102 = vld [vmem:[#allocation3 + $0x20] sm:$0xff]
    %v2103 = vld [vmem:[#allocation14 + $0x200] sm:$0x1]
    %v2104 = vlaneseq
    %v2105 = vshrl.u32 %v2104, 7
    %v2106 = vsub.s32 0, %v2105
    %v2107 = vrot.slane %v2103, %v2106
    %2109 = vrot.lane.b32.xlu0 %v2107, 119
    %v2110 = vpop.permute.xlu0 %2109
    %v2112 = vmul.f32 %v2099, %v2110
    %v2113 = vmul.f32 %v2100, %v2110
    %v2114 = vmul.f32 %v2101, %v2110
    %v2115 = vmul.f32 %v2102, %v2110
    %2120 = vrot.lane.b32.xlu0 %v2112, 9
    %v2121 = vpop.permute.xlu0 %2120
    %2122 = vrot.lane.b32.xlu0 %v2113, 9
    %v2123 = vpop.permute.xlu0 %2122
    %2124 = vrot.lane.b32.xlu0 %v2114, 9
    %v2125 = vpop.permute.xlu0 %2124
    %2126 = vrot.lane.b32.xlu0 %v2115, 9
    %v2127 = vpop.permute.xlu0 %2126
    %v2128 = vsel %vm1727, %v2121, %v2123
    %v2129 = vsel %vm1727, %v2125, %v2127
    %2132 = vst [vmem:[#allocation5] sm:$0xff] %v2128
    %2133 = vst [vmem:[#allocation5 + $0x8] sm:$0xff] %v2129
    %v2134 = vld [vmem:[#allocation3] sm:$0xff]
    %v2135 = vld [vmem:[#allocation3 + $0x8] sm:$0xff]
    %v2136 = vld [vmem:[#allocation3 + $0x18] sm:$0xff]
    %v2137 = vld [vmem:[#allocation3 + $0x20] sm:$0xff]
    %v2138 = vld [vmem:[#allocation14 + $0x201] sm:$0x1]
    %v2139 = vlaneseq
    %v2140 = vshrl.u32 %v2139, 7
    %v2141 = vsub.s32 0, %v2140
    %v2142 = vrot.slane %v2138, %v2141
    %2144 = vrot.lane.b32.xlu0 %v2142, 120
    %v2145 = vpop.permute.xlu0 %2144
    %v2147 = vmul.f32 %v2134, %v2145
    %v2148 = vmul.f32 %v2135, %v2145
    %v2149 = vmul.f32 %v2136, %v2145
    %v2150 = vmul.f32 %v2137, %v2145
    %2155 = vrot.lane.b32.xlu0 %v2147, 8
    %v2156 = vpop.permute.xlu0 %2155
    %2157 = vrot.lane.b32.xlu0 %v2148, 8
    %v2158 = vpop.permute.xlu0 %2157
    %2159 = vrot.lane.b32.xlu0 %v2149, 8
    %v2160 = vpop.permute.xlu0 %2159
    %2161 = vrot.lane.b32.xlu0 %v2150, 8
    %v2162 = vpop.permute.xlu0 %2161
    %v2163 = vsel %vm1763, %v2156, %v2158
    %v2164 = vsel %vm1763, %v2160, %v2162
    %2167 = vst [vmem:[#allocation5 + $0x10] sm:$0xff] %v2163
    %2168 = vst [vmem:[#allocation5 + $0x18] sm:$0xff] %v2164
    %v2169 = vld [vmem:[#allocation3] sm:$0xff]
    %v2170 = vld [vmem:[#allocation3 + $0x8] sm:$0xff]
    %v2171 = vld [vmem:[#allocation3 + $0x18] sm:$0xff]
    %v2172 = vld [vmem:[#allocation3 + $0x20] sm:$0xff]
    %v2173 = vld [vmem:[#allocation14 + $0x202] sm:$0x1]
    %v2174 = vlaneseq
    %v2175 = vshrl.u32 %v2174, 7
    %v2176 = vsub.s32 0, %v2175
    %v2177 = vrot.slane %v2173, %v2176
    %2179 = vrot.lane.b32.xlu0 %v2177, 121
    %v2180 = vpop.permute.xlu0 %2179
    %v2182 = vmul.f32 %v2169, %v2180
    %v2183 = vmul.f32 %v2170, %v2180
    %v2184 = vmul.f32 %v2171, %v2180
    %v2185 = vmul.f32 %v2172, %v2180
    %2190 = vrot.lane.b32.xlu0 %v2182, 7
    %v2191 = vpop.permute.xlu0 %2190
    %2192 = vrot.lane.b32.xlu0 %v2183, 7
    %v2193 = vpop.permute.xlu0 %2192
    %2194 = vrot.lane.b32.xlu0 %v2184, 7
    %v2195 = vpop.permute.xlu0 %2194
    %2196 = vrot.lane.b32.xlu0 %v2185, 7
    %v2197 = vpop.permute.xlu0 %2196
    %v2198 = vsel %vm1799, %v2191, %v2193
    %v2199 = vsel %vm1799, %v2195, %v2197
    %2202 = vst [vmem:[#allocation5 + $0x20] sm:$0xff] %v2198
    %2203 = vst [vmem:[#allocation5 + $0x28] sm:$0xff] %v2199
    %v2204 = vld [vmem:[#allocation3] sm:$0xff]
    %v2205 = vld [vmem:[#allocation3 + $0x8] sm:$0xff]
    %v2206 = vld [vmem:[#allocation3 + $0x18] sm:$0xff]
    %v2207 = vld [vmem:[#allocation3 + $0x20] sm:$0xff]
    %v2208 = vld [vmem:[#allocation14 + $0x203] sm:$0x1]
    %v2209 = vlaneseq
    %v2210 = vshrl.u32 %v2209, 7
    %v2211 = vsub.s32 0, %v2210
    %v2212 = vrot.slane %v2208, %v2211
    %2214 = vrot.lane.b32.xlu0 %v2212, 127
    %v2215 = vpop.permute.xlu0 %2214
    %v2217 = vmul.f32 %v2204, %v2215
    %v2218 = vmul.f32 %v2205, %v2215
    %v2219 = vmul.f32 %v2206, %v2215
    %v2220 = vmul.f32 %v2207, %v2215
    %2225 = vrot.lane.b32.xlu0 %v2217, 1
    %v2226 = vpop.permute.xlu0 %2225
    %2227 = vrot.lane.b32.xlu0 %v2218, 1
    %v2228 = vpop.permute.xlu0 %2227
    %2229 = vrot.lane.b32.xlu0 %v2219, 1
    %v2230 = vpop.permute.xlu0 %2229
    %2231 = vrot.lane.b32.xlu0 %v2220, 1
    %v2232 = vpop.permute.xlu0 %2231
    %v2233 = vsel %vm395, %v2226, %v2228
    %v2234 = vsel %vm395, %v2230, %v2232
    %2237 = vst [vmem:[#allocation5 + $0x30] sm:$0xff] %v2233
    %2238 = vst [vmem:[#allocation5 + $0x38] sm:$0xff] %v2234
    %v2239 = vld [vmem:[#allocation3 + $0x8] sm:$0xff]
    %v2240 = vld [vmem:[#allocation3 + $0x20] sm:$0xff]
    %2241 = vst [vmem:[#allocation5 + $0x40] sm:$0xff] %v2239
    %2242 = vst [vmem:[#allocation5 + $0x48] sm:$0xff] %v2240
    %v2243 = vld [vmem:[#allocation3 + $0x8] sm:$0xff]
    %v2244 = vld [vmem:[#allocation3 + $0x10] sm:$0xff]
    %v2245 = vld [vmem:[#allocation3 + $0x20] sm:$0xff]
    %v2246 = vld [vmem:[#allocation3 + $0x28] sm:$0xff]
    %v2247 = vld [vmem:[#allocation14 + $0x205] sm:$0x1]
    %v2248 = vlaneseq
    %v2249 = vshrl.u32 %v2248, 7
    %v2250 = vsub.s32 0, %v2249
    %v2251 = vrot.slane %v2247, %v2250
    %2253 = vrot.lane.b32.xlu0 %v2251, 1
    %v2254 = vpop.permute.xlu0 %2253
    %v2256 = vmul.f32 %v2243, %v2254
    %v2257 = vmul.f32 %v2244, %v2254
    %v2258 = vmul.f32 %v2245, %v2254
    %v2259 = vmul.f32 %v2246, %v2254
    %2264 = vrot.lane.b32.xlu0 %v2256, 127
    %v2265 = vpop.permute.xlu0 %2264
    %2266 = vrot.lane.b32.xlu0 %v2257, 127
    %v2267 = vpop.permute.xlu0 %2266
    %2268 = vrot.lane.b32.xlu0 %v2258, 127
    %v2269 = vpop.permute.xlu0 %2268
    %2270 = vrot.lane.b32.xlu0 %v2259, 127
    %v2271 = vpop.permute.xlu0 %2270
    %v2272 = vsel %vm366, %v2265, %v2267
    %v2273 = vsel %vm366, %v2269, %v2271
    %2276 = vst [vmem:[#allocation5 + $0x50] sm:$0xff] %v2272
    %2277 = vst [vmem:[#allocation5 + $0x58] sm:$0xff] %v2273
    %v2278 = vld [vmem:[#allocation3 + $0x8] sm:$0xff]
    %v2279 = vld [vmem:[#allocation3 + $0x10] sm:$0xff]
    %v2280 = vld [vmem:[#allocation3 + $0x20] sm:$0xff]
    %v2281 = vld [vmem:[#allocation3 + $0x28] sm:$0xff]
    %v2282 = vld [vmem:[#allocation14 + $0x206] sm:$0x1]
    %v2283 = vlaneseq
    %v2284 = vshrl.u32 %v2283, 7
    %v2285 = vsub.s32 0, %v2284
    %v2286 = vrot.slane %v2282, %v2285
    %2288 = vrot.lane.b32.xlu0 %v2286, 7
    %v2289 = vpop.permute.xlu0 %2288
    %v2291 = vmul.f32 %v2278, %v2289
    %v2292 = vmul.f32 %v2279, %v2289
    %v2293 = vmul.f32 %v2280, %v2289
    %v2294 = vmul.f32 %v2281, %v2289
    %2299 = vrot.lane.b32.xlu0 %v2291, 121
    %v2300 = vpop.permute.xlu0 %2299
    %2301 = vrot.lane.b32.xlu0 %v2292, 121
    %v2302 = vpop.permute.xlu0 %2301
    %2303 = vrot.lane.b32.xlu0 %v2293, 121
    %v2304 = vpop.permute.xlu0 %2303
    %2305 = vrot.lane.b32.xlu0 %v2294, 121
    %v2306 = vpop.permute.xlu0 %2305
    %v2307 = vsel %vm1909, %v2300, %v2302
    %v2308 = vsel %vm1909, %v2304, %v2306
    %2311 = vst [vmem:[#allocation5 + $0x60] sm:$0xff] %v2307
    %2312 = vst [vmem:[#allocation5 + $0x68] sm:$0xff] %v2308
    %v2313 = vld [vmem:[#allocation3 + $0x8] sm:$0xff]
    %v2314 = vld [vmem:[#allocation3 + $0x10] sm:$0xff]
    %v2315 = vld [vmem:[#allocation3 + $0x20] sm:$0xff]
    %v2316 = vld [vmem:[#allocation3 + $0x28] sm:$0xff]
    %v2317 = vld [vmem:[#allocation14 + $0x207] sm:$0x1]
    %v2318 = vlaneseq
    %v2319 = vshrl.u32 %v2318, 7
    %v2320 = vsub.s32 0, %v2319
    %v2321 = vrot.slane %v2317, %v2320
    %2323 = vrot.lane.b32.xlu0 %v2321, 8
    %v2324 = vpop.permute.xlu0 %2323
    %v2326 = vmul.f32 %v2313, %v2324
    %v2327 = vmul.f32 %v2314, %v2324
    %v2328 = vmul.f32 %v2315, %v2324
    %v2329 = vmul.f32 %v2316, %v2324
    %2334 = vrot.lane.b32.xlu0 %v2326, 120
    %v2335 = vpop.permute.xlu0 %2334
    %2336 = vrot.lane.b32.xlu0 %v2327, 120
    %v2337 = vpop.permute.xlu0 %2336
    %2338 = vrot.lane.b32.xlu0 %v2328, 120
    %v2339 = vpop.permute.xlu0 %2338
    %2340 = vrot.lane.b32.xlu0 %v2329, 120
    %v2341 = vpop.permute.xlu0 %2340
    %v2342 = vsel %vm1945, %v2335, %v2337
    %v2343 = vsel %vm1945, %v2339, %v2341
    %2346 = vst [vmem:[#allocation5 + $0x70] sm:$0xff] %v2342
    %2347 = vst [vmem:[#allocation5 + $0x78] sm:$0xff] %v2343
    %v2348 = vld [vmem:[#allocation3 + $0x8] sm:$0xff]
    %v2349 = vld [vmem:[#allocation3 + $0x10] sm:$0xff]
    %v2350 = vld [vmem:[#allocation3 + $0x20] sm:$0xff]
    %v2351 = vld [vmem:[#allocation3 + $0x28] sm:$0xff]
    %v2352 = vld [vmem:[#allocation14 + $0x208] sm:$0x1]
    %v2353 = vlaneseq
    %v2354 = vshrl.u32 %v2353, 7
    %v2355 = vsub.s32 0, %v2354
    %v2356 = vrot.slane %v2352, %v2355
    %2358 = vrot.lane.b32.xlu0 %v2356, 9
    %v2359 = vpop.permute.xlu0 %2358
    %v2361 = vmul.f32 %v2348, %v2359
    %v2362 = vmul.f32 %v2349, %v2359
    %v2363 = vmul.f32 %v2350, %v2359
    %v2364 = vmul.f32 %v2351, %v2359
    %2369 = vrot.lane.b32.xlu0 %v2361, 119
    %v2370 = vpop.permute.xlu0 %2369
    %2371 = vrot.lane.b32.xlu0 %v2362, 119
    %v2372 = vpop.permute.xlu0 %2371
    %2373 = vrot.lane.b32.xlu0 %v2363, 119
    %v2374 = vpop.permute.xlu0 %2373
    %2375 = vrot.lane.b32.xlu0 %v2364, 119
    %v2376 = vpop.permute.xlu0 %2375
    %v2377 = vsel %vm1981, %v2370, %v2372
    %v2378 = vsel %vm1981, %v2374, %v2376
    %2381 = vst [vmem:[#allocation5 + $0x80] sm:$0xff] %v2377
    %2382 = vst [vmem:[#allocation5 + $0x88] sm:$0xff] %v2378
    %v2383 = vld [vmem:[#allocation11 + $0x60] sm:$0xff]
    %v2384 = vld [vmem:[#allocation11 + $0x68] sm:$0xff]
    %v2385 = vld [vmem:[#allocation11 + $0x70] sm:$0xff]
    %v2386 = vld [vmem:[#allocation11 + $0x78] sm:$0xff]
    %v2387 = vld [vmem:[#allocation5] sm:$0xff]
    %v2388 = vld [vmem:[#allocation5 + $0x8] sm:$0xff]
    %v2389 = vld [vmem:[#allocation5 + $0x10] sm:$0xff]
    %v2390 = vld [vmem:[#allocation5 + $0x18] sm:$0xff]
    %v2391 = vld [vmem:[#allocation5 + $0x20] sm:$0xff]
    %v2392 = vld [vmem:[#allocation5 + $0x28] sm:$0xff]
    %v2393 = vld [vmem:[#allocation5 + $0x30] sm:$0xff]
    %v2394 = vld [vmem:[#allocation5 + $0x38] sm:$0xff]
    %v2395 = vld [vmem:[#allocation5 + $0x40] sm:$0xff]
    %v2396 = vld [vmem:[#allocation5 + $0x48] sm:$0xff]
    %v2397 = vld [vmem:[#allocation5 + $0x50] sm:$0xff]
    %v2398 = vld [vmem:[#allocation5 + $0x58] sm:$0xff]
    %v2399 = vld [vmem:[#allocation5 + $0x60] sm:$0xff]
    %v2400 = vld [vmem:[#allocation5 + $0x68] sm:$0xff]
    %v2401 = vld [vmem:[#allocation5 + $0x70] sm:$0xff]
    %v2402 = vld [vmem:[#allocation5 + $0x78] sm:$0xff]
    %v2403 = vld [vmem:[#allocation5 + $0x80] sm:$0xff]
    %v2404 = vld [vmem:[#allocation5 + $0x88] sm:$0xff]
    %v2405 = vld [vmem:[#allocation5 + $0x90] sm:$0x1]
    %v2407 = vsel %vm173, %v2384, 0
    %v2410 = vsel %vm173, %v2386, 0
    %v2413 = vsel %vm749, %v2405, 0
    %2415 = vmatprep.subr.mxu0 0.0
    %2416 = vmatpush1.msra.mxu0 %v2402
    %2417 = vmatprep.subr.mxu0 0.0
    %2418 = vmatpush1.msra.mxu0 %v2401
    %2419 = vmatprep.subr.mxu0 0.0
    %2420 = vmatpush1.msra.mxu0 %v2400
    %2421 = vmatprep.subr.mxu0 0.0
    %2422 = vmatpush1.msra.mxu0 %v2399
    %2423 = vmatprep.subr.mxu0 0.0
    %2424 = vmatpush1.msra.mxu0 %v2398
    %2425 = vmatprep.subr.mxu0 0.0
    %2426 = vmatpush1.msra.mxu0 %v2397
    %2427 = vmatprep.subr.mxu0 0.0
    %2428 = vmatpush1.msra.mxu0 %v2396
    %2429 = vmatprep.subr.mxu0 0.0
    %2430 = vmatpush1.msra.mxu0 %v2395
    %2431 = vmatprep.subr.mxu0 0.0
    %2432 = vmatpush1.msra.mxu0 %v2394
    %2433 = vmatprep.subr.mxu0 0.0
    %2434 = vmatpush1.msra.mxu0 %v2393
    %2435 = vmatprep.subr.mxu0 0.0
    %2436 = vmatpush1.msra.mxu0 %v2392
    %2437 = vmatprep.subr.mxu0 0.0
    %2438 = vmatpush1.msra.mxu0 %v2391
    %2439 = vmatprep.subr.mxu0 0.0
    %2440 = vmatpush1.msra.mxu0 %v2390
    %2441 = vmatprep.subr.mxu0 0.0
    %2442 = vmatpush1.msra.mxu0 %v2389
    %2443 = vmatprep.subr.mxu0 0.0
    %2444 = vmatpush1.msra.mxu0 %v2388
    %2445 = vmatprep.subr.mxu0 0.0
    %2446 = vmatpush1.msra.mxu0 %v2387
    %2447 = vmatprep.subr.mxu0 0.0
    %2448 = vmatpush2.msra.mxu0 0.0
    %2449 = vmatprep.subr.mxu0 0.0
    %2450 = vmatpush2.msra.mxu0 0.0
    %2451 = vmatprep.subr.mxu0 0.0
    %2452 = vmatpush2.msra.mxu0 0.0
    %2453 = vmatprep.subr.mxu0 0.0
    %2454 = vmatpush2.msra.mxu0 0.0
    %2455 = vmatprep.subr.mxu0 0.0
    %2456 = vmatpush2.msra.mxu0 0.0
    %2457 = vmatprep.subr.mxu0 0.0
    %2458 = vmatpush2.msra.mxu0 0.0
    %2459 = vmatprep.subr.mxu0 0.0
    %2460 = vmatpush2.msra.mxu0 0.0
    %2461 = vmatprep.subr.mxu0 0.0
    %2462 = vmatpush2.msra.mxu0 0.0
    %2463 = vmatprep.subr.mxu0 0.0
    %2464 = vmatpush2.msra.mxu0 0.0
    %2465 = vmatprep.subr.mxu0 0.0
    %2466 = vmatpush2.msra.mxu0 0.0
    %2467 = vmatprep.subr.mxu0 0.0
    %2468 = vmatpush2.msra.mxu0 0.0
    %2469 = vmatprep.subr.mxu0 0.0
    %2470 = vmatpush2.msra.mxu0 0.0
    %2471 = vmatprep.subr.mxu0 0.0
    %2472 = vmatpush2.msra.mxu0 0.0
    %2473 = vmatprep.subr.mxu0 0.0
    %2474 = vmatpush2.msra.mxu0 %v2413
    %2475 = vmatprep.subr.mxu0 0.0
    %2476 = vmatpush2.msra.mxu0 %v2404
    %2477 = vmatprep.subr.mxu0 0.0
    %2478 = vmatpush2.msra.mxu0 %v2403
    %2479 = vmatprep.mubr.f32.mxu0 %v2407
    %2480 = vmatmul.mubr.f32.gmra.mxu0 %v2383
    %v2481 = vpop.f32.mrf.mxu0
    %v2482 = vadd.f32 %v1694, %v2481
    %v2483 = vpop.f32.mrf.mxu0
    %2484 = vmatprep.mubr.f32.mxu0 %v2410
    %2485 = vmatmul.mubr.f32.gmra.mxu0 %v2385
    %v2486 = vpop.f32.mrf.mxu0
    %v2487 = vadd.f32 %v1695, %v2486
    %v2488 = vpop.f32.mrf.mxu0
    %2489 = vdwg.mxu0
    %v2490 = vmax.f32 %v2482, 0.0
    %v2491 = vmax.f32 %v2487, 0.0
    %v2492 = vld [vmem:[#allocation2] sm:$0xff]
    %v2493 = vld [vmem:[#allocation2 + $0x8] sm:$0xff]
    %v2494 = vld [vmem:[#allocation2 + $0x10] sm:$0xff]
    %v2495 = vld [vmem:[#allocation2 + $0x18] sm:$0xff]
    %v2496 = vld [vmem:[#allocation2 + $0x20] sm:$0xff]
    %v2497 = vld [vmem:[%s117] ss:$8 sm:$0xf]
    %v2499 = vlaneseq
    %v2500 = vshrl.u32 %v2499, 7
    %v2501 = vsub.s32 0, %v2500
    %v2502 = vrot.slane %v2497, %v2501
    %v2503 = vlaneseq
    %v2504 = vshrl.u32 %v2503, 7
    %v2505 = vsub.s32 1, %v2504
    %v2506 = vrot.slane %v2497, %v2505
    %v2507 = vlaneseq
    %v2508 = vshrl.u32 %v2507, 7
    %v2509 = vsub.s32 2, %v2508
    %v2510 = vrot.slane %v2497, %v2509
    %v2511 = vlaneseq
    %v2512 = vshrl.u32 %v2511, 7
    %v2513 = vsub.s32 3, %v2512
    %v2514 = vrot.slane %v2497, %v2513
    %2515 = vrot.lane.b32.xlu0 %v2502, 111
    %v2516 = vpop.permute.xlu0 %2515
    %2517 = vrot.lane.b32.xlu0 %v2506, 111
    %v2518 = vpop.permute.xlu0 %2517
    %2519 = vrot.lane.b32.xlu0 %v2510, 111
    %v2520 = vpop.permute.xlu0 %2519
    %2521 = vrot.lane.b32.xlu0 %v2514, 111
    %v2522 = vpop.permute.xlu0 %2521
    %v2523 = vsel %vm144, %v2516, %v2518
    %v2524 = vsel %vm144, %v2518, %v2520
    %v2525 = vsel %vm144, %v2520, %v2522
    %v2531 = vmul.f32 %v2492, %v2516
    %v2532 = vmul.f32 %v2493, %v2523
    %v2533 = vmul.f32 %v2494, %v2524
    %v2534 = vmul.f32 %v2495, %v2525
    %v2535 = vmul.f32 %v2496, %v2522
    %2541 = vrot.lane.b32.xlu0 %v2531, 17
    %v2542 = vpop.permute.xlu0 %2541
    %2543 = vrot.lane.b32.xlu0 %v2532, 17
    %v2544 = vpop.permute.xlu0 %2543
    %2545 = vrot.lane.b32.xlu0 %v2533, 17
    %v2546 = vpop.permute.xlu0 %2545
    %2547 = vrot.lane.b32.xlu0 %v2534, 17
    %v2548 = vpop.permute.xlu0 %2547
    %2549 = vrot.lane.b32.xlu0 %v2535, 17
    %v2550 = vpop.permute.xlu0 %2549
    %v2551 = vsel %vm173, %v2542, %v2544
    %v2552 = vsel %vm173, %v2544, %v2546
    %v2553 = vsel %vm173, %v2546, %v2548
    %v2554 = vsel %vm173, %v2548, %v2550
    %2559 = vst [vmem:[#allocation4] sm:$0xff] %v2551
    %2560 = vst [vmem:[#allocation4 + $0x8] sm:$0xff] %v2552
    %2561 = vst [vmem:[#allocation4 + $0x10] sm:$0xff] %v2553
    %2562 = vst [vmem:[#allocation4 + $0x18] sm:$0xff] %v2554
    %v2563 = vld [vmem:[#allocation2] sm:$0xff]
    %v2564 = vld [vmem:[#allocation2 + $0x8] sm:$0xff]
    %v2565 = vld [vmem:[#allocation2 + $0x10] sm:$0xff]
    %v2566 = vld [vmem:[#allocation2 + $0x18] sm:$0xff]
    %v2567 = vld [vmem:[#allocation2 + $0x20] sm:$0xff]
    %v2568 = vld [vmem:[%s191] ss:$8 sm:$0xf]
    %v2570 = vlaneseq
    %v2571 = vshrl.u32 %v2570, 7
    %v2572 = vsub.s32 0, %v2571
    %v2573 = vrot.slane %v2568, %v2572
    %v2574 = vlaneseq
    %v2575 = vshrl.u32 %v2574, 7
    %v2576 = vsub.s32 1, %v2575
    %v2577 = vrot.slane %v2568, %v2576
    %v2578 = vlaneseq
    %v2579 = vshrl.u32 %v2578, 7
    %v2580 = vsub.s32 2, %v2579
    %v2581 = vrot.slane %v2568, %v2580
    %v2582 = vlaneseq
    %v2583 = vshrl.u32 %v2582, 7
    %v2584 = vsub.s32 3, %v2583
    %v2585 = vrot.slane %v2568, %v2584
    %2586 = vrot.lane.b32.xlu0 %v2573, 112
    %v2587 = vpop.permute.xlu0 %2586
    %2588 = vrot.lane.b32.xlu0 %v2577, 112
    %v2589 = vpop.permute.xlu0 %2588
    %2590 = vrot.lane.b32.xlu0 %v2581, 112
    %v2591 = vpop.permute.xlu0 %2590
    %2592 = vrot.lane.b32.xlu0 %v2585, 112
    %v2593 = vpop.permute.xlu0 %2592
    %v2594 = vsel %vm218, %v2587, %v2589
    %v2595 = vsel %vm218, %v2589, %v2591
    %v2596 = vsel %vm218, %v2591, %v2593
    %v2602 = vmul.f32 %v2563, %v2587
    %v2603 = vmul.f32 %v2564, %v2594
    %v2604 = vmul.f32 %v2565, %v2595
    %v2605 = vmul.f32 %v2566, %v2596
    %v2606 = vmul.f32 %v2567, %v2593
    %2612 = vrot.lane.b32.xlu0 %v2602, 16
    %v2613 = vpop.permute.xlu0 %2612
    %2614 = vrot.lane.b32.xlu0 %v2603, 16
    %v2615 = vpop.permute.xlu0 %2614
    %2616 = vrot.lane.b32.xlu0 %v2604, 16
    %v2617 = vpop.permute.xlu0 %2616
    %2618 = vrot.lane.b32.xlu0 %v2605, 16
    %v2619 = vpop.permute.xlu0 %2618
    %2620 = vrot.lane.b32.xlu0 %v2606, 16
    %v2621 = vpop.permute.xlu0 %2620
    %v2622 = vsel %vm247, %v2613, %v2615
    %v2623 = vsel %vm247, %v2615, %v2617
    %v2624 = vsel %vm247, %v2617, %v2619
    %v2625 = vsel %vm247, %v2619, %v2621
    %2630 = vst [vmem:[#allocation4 + $0x20] sm:$0xff] %v2622
    %2631 = vst [vmem:[#allocation4 + $0x28] sm:$0xff] %v2623
    %2632 = vst [vmem:[#allocation4 + $0x30] sm:$0xff] %v2624
    %2633 = vst [vmem:[#allocation4 + $0x38] sm:$0xff] %v2625
    %v2634 = vld [vmem:[#allocation2] sm:$0xff]
    %v2635 = vld [vmem:[#allocation2 + $0x8] sm:$0xff]
    %v2636 = vld [vmem:[#allocation2 + $0x10] sm:$0xff]
    %v2637 = vld [vmem:[#allocation2 + $0x18] sm:$0xff]
    %v2638 = vld [vmem:[#allocation2 + $0x20] sm:$0xff]
    %v2639 = vld [vmem:[%s265] ss:$8 sm:$0xf]
    %v2641 = vlaneseq
    %v2642 = vshrl.u32 %v2641, 7
    %v2643 = vsub.s32 0, %v2642
    %v2644 = vrot.slane %v2639, %v2643
    %v2645 = vlaneseq
    %v2646 = vshrl.u32 %v2645, 7
    %v2647 = vsub.s32 1, %v2646
    %v2648 = vrot.slane %v2639, %v2647
    %v2649 = vlaneseq
    %v2650 = vshrl.u32 %v2649, 7
    %v2651 = vsub.s32 2, %v2650
    %v2652 = vrot.slane %v2639, %v2651
    %v2653 = vlaneseq
    %v2654 = vshrl.u32 %v2653, 7
    %v2655 = vsub.s32 3, %v2654
    %v2656 = vrot.slane %v2639, %v2655
    %2657 = vrot.lane.b32.xlu0 %v2644, 113
    %v2658 = vpop.permute.xlu0 %2657
    %2659 = vrot.lane.b32.xlu0 %v2648, 113
    %v2660 = vpop.permute.xlu0 %2659
    %2661 = vrot.lane.b32.xlu0 %v2652, 113
    %v2662 = vpop.permute.xlu0 %2661
    %2663 = vrot.lane.b32.xlu0 %v2656, 113
    %v2664 = vpop.permute.xlu0 %2663
    %v2665 = vsel %vm292, %v2658, %v2660
    %v2666 = vsel %vm292, %v2660, %v2662
    %v2667 = vsel %vm292, %v2662, %v2664
    %v2673 = vmul.f32 %v2634, %v2658
    %v2674 = vmul.f32 %v2635, %v2665
    %v2675 = vmul.f32 %v2636, %v2666
    %v2676 = vmul.f32 %v2637, %v2667
    %v2677 = vmul.f32 %v2638, %v2664
    %2683 = vrot.lane.b32.xlu0 %v2673, 15
    %v2684 = vpop.permute.xlu0 %2683
    %2685 = vrot.lane.b32.xlu0 %v2674, 15
    %v2686 = vpop.permute.xlu0 %2685
    %2687 = vrot.lane.b32.xlu0 %v2675, 15
    %v2688 = vpop.permute.xlu0 %2687
    %2689 = vrot.lane.b32.xlu0 %v2676, 15
    %v2690 = vpop.permute.xlu0 %2689
    %2691 = vrot.lane.b32.xlu0 %v2677, 15
    %v2692 = vpop.permute.xlu0 %2691
    %v2693 = vsel %vm321, %v2684, %v2686
    %v2694 = vsel %vm321, %v2686, %v2688
    %v2695 = vsel %vm321, %v2688, %v2690
    %v2696 = vsel %vm321, %v2690, %v2692
    %2701 = vst [vmem:[#allocation4 + $0x40] sm:$0xff] %v2693
    %2702 = vst [vmem:[#allocation4 + $0x48] sm:$0xff] %v2694
    %2703 = vst [vmem:[#allocation4 + $0x50] sm:$0xff] %v2695
    %2704 = vst [vmem:[#allocation4 + $0x58] sm:$0xff] %v2696
    %v2705 = vld [vmem:[#allocation2] sm:$0xff]
    %v2706 = vld [vmem:[#allocation2 + $0x8] sm:$0xff]
    %v2707 = vld [vmem:[#allocation2 + $0x10] sm:$0xff]
    %v2708 = vld [vmem:[#allocation2 + $0x18] sm:$0xff]
    %v2709 = vld [vmem:[#allocation2 + $0x20] sm:$0xff]
    %v2710 = vld [vmem:[%s339] ss:$8 sm:$0xf]
    %v2712 = vlaneseq
    %v2713 = vshrl.u32 %v2712, 7
    %v2714 = vsub.s32 0, %v2713
    %v2715 = vrot.slane %v2710, %v2714
    %v2716 = vlaneseq
    %v2717 = vshrl.u32 %v2716, 7
    %v2718 = vsub.s32 1, %v2717
    %v2719 = vrot.slane %v2710, %v2718
    %v2720 = vlaneseq
    %v2721 = vshrl.u32 %v2720, 7
    %v2722 = vsub.s32 2, %v2721
    %v2723 = vrot.slane %v2710, %v2722
    %v2724 = vlaneseq
    %v2725 = vshrl.u32 %v2724, 7
    %v2726 = vsub.s32 3, %v2725
    %v2727 = vrot.slane %v2710, %v2726
    %2728 = vrot.lane.b32.xlu0 %v2715, 127
    %v2729 = vpop.permute.xlu0 %2728
    %2730 = vrot.lane.b32.xlu0 %v2719, 127
    %v2731 = vpop.permute.xlu0 %2730
    %2732 = vrot.lane.b32.xlu0 %v2723, 127
    %v2733 = vpop.permute.xlu0 %2732
    %2734 = vrot.lane.b32.xlu0 %v2727, 127
    %v2735 = vpop.permute.xlu0 %2734
    %v2736 = vsel %vm366, %v2729, %v2731
    %v2737 = vsel %vm366, %v2731, %v2733
    %v2738 = vsel %vm366, %v2733, %v2735
    %v2744 = vmul.f32 %v2705, %v2729
    %v2745 = vmul.f32 %v2706, %v2736
    %v2746 = vmul.f32 %v2707, %v2737
    %v2747 = vmul.f32 %v2708, %v2738
    %v2748 = vmul.f32 %v2709, %v2735
    %2754 = vrot.lane.b32.xlu0 %v2744, 1
    %v2755 = vpop.permute.xlu0 %2754
    %2756 = vrot.lane.b32.xlu0 %v2745, 1
    %v2757 = vpop.permute.xlu0 %2756
    %2758 = vrot.lane.b32.xlu0 %v2746, 1
    %v2759 = vpop.permute.xlu0 %2758
    %2760 = vrot.lane.b32.xlu0 %v2747, 1
    %v2761 = vpop.permute.xlu0 %2760
    %2762 = vrot.lane.b32.xlu0 %v2748, 1
    %v2763 = vpop.permute.xlu0 %2762
    %v2764 = vsel %vm395, %v2755, %v2757
    %v2765 = vsel %vm395, %v2757, %v2759
    %v2766 = vsel %vm395, %v2759, %v2761
    %v2767 = vsel %vm395, %v2761, %v2763
    %2772 = vst [vmem:[#allocation4 + $0x60] sm:$0xff] %v2764
    %2773 = vst [vmem:[#allocation4 + $0x68] sm:$0xff] %v2765
    %2774 = vst [vmem:[#allocation4 + $0x70] sm:$0xff] %v2766
    %2775 = vst [vmem:[#allocation4 + $0x78] sm:$0xff] %v2767
    %v2776 = vld [vmem:[#allocation2 + $0x8] sm:$0xff]
    %v2777 = vld [vmem:[#allocation2 + $0x10] sm:$0xff]
    %v2778 = vld [vmem:[#allocation2 + $0x18] sm:$0xff]
    %v2779 = vld [vmem:[#allocation2 + $0x20] sm:$0xff]
    %2780 = vst [vmem:[#allocation4 + $0x80] sm:$0xff] %v2776
    %2781 = vst [vmem:[#allocation4 + $0x88] sm:$0xff] %v2777
    %2782 = vst [vmem:[#allocation4 + $0x90] sm:$0xff] %v2778
    %2783 = vst [vmem:[#allocation4 + $0x98] sm:$0xff] %v2779
    %v2784 = vld [vmem:[#allocation2 + $0x8] sm:$0xff]
    %v2785 = vld [vmem:[#allocation2 + $0x10] sm:$0xff]
    %v2786 = vld [vmem:[#allocation2 + $0x18] sm:$0xff]
    %v2787 = vld [vmem:[#allocation2 + $0x20] sm:$0xff]
    %v2788 = vld [vmem:[#allocation2 + $0x28] sm:$0xff]
    %v2789 = vld [vmem:[%s421] ss:$8 sm:$0xf]
    %v2791 = vlaneseq
    %v2792 = vshrl.u32 %v2791, 7
    %v2793 = vsub.s32 0, %v2792
    %v2794 = vrot.slane %v2789, %v2793
    %v2795 = vlaneseq
    %v2796 = vshrl.u32 %v2795, 7
    %v2797 = vsub.s32 1, %v2796
    %v2798 = vrot.slane %v2789, %v2797
    %v2799 = vlaneseq
    %v2800 = vshrl.u32 %v2799, 7
    %v2801 = vsub.s32 2, %v2800
    %v2802 = vrot.slane %v2789, %v2801
    %v2803 = vlaneseq
    %v2804 = vshrl.u32 %v2803, 7
    %v2805 = vsub.s32 3, %v2804
    %v2806 = vrot.slane %v2789, %v2805
    %2807 = vrot.lane.b32.xlu0 %v2794, 1
    %v2808 = vpop.permute.xlu0 %2807
    %2809 = vrot.lane.b32.xlu0 %v2798, 1
    %v2810 = vpop.permute.xlu0 %2809
    %2811 = vrot.lane.b32.xlu0 %v2802, 1
    %v2812 = vpop.permute.xlu0 %2811
    %2813 = vrot.lane.b32.xlu0 %v2806, 1
    %v2814 = vpop.permute.xlu0 %2813
    %v2815 = vsel %vm395, %v2808, %v2810
    %v2816 = vsel %vm395, %v2810, %v2812
    %v2817 = vsel %vm395, %v2812, %v2814
    %v2823 = vmul.f32 %v2784, %v2808
    %v2824 = vmul.f32 %v2785, %v2815
    %v2825 = vmul.f32 %v2786, %v2816
    %v2826 = vmul.f32 %v2787, %v2817
    %v2827 = vmul.f32 %v2788, %v2814
    %2833 = vrot.lane.b32.xlu0 %v2823, 127
    %v2834 = vpop.permute.xlu0 %2833
    %2835 = vrot.lane.b32.xlu0 %v2824, 127
    %v2836 = vpop.permute.xlu0 %2835
    %2837 = vrot.lane.b32.xlu0 %v2825, 127
    %v2838 = vpop.permute.xlu0 %2837
    %2839 = vrot.lane.b32.xlu0 %v2826, 127
    %v2840 = vpop.permute.xlu0 %2839
    %2841 = vrot.lane.b32.xlu0 %v2827, 127
    %v2842 = vpop.permute.xlu0 %2841
    %v2843 = vsel %vm366, %v2834, %v2836
    %v2844 = vsel %vm366, %v2836, %v2838
    %v2845 = vsel %vm366, %v2838, %v2840
    %v2846 = vsel %vm366, %v2840, %v2842
    %2851 = vst [vmem:[#allocation4 + $0xa0] sm:$0xff] %v2843
    %2852 = vst [vmem:[#allocation4 + $0xa8] sm:$0xff] %v2844
    %2853 = vst [vmem:[#allocation4 + $0xb0] sm:$0xff] %v2845
    %2854 = vst [vmem:[#allocation4 + $0xb8] sm:$0xff] %v2846
    %v2855 = vld [vmem:[#allocation2 + $0x8] sm:$0xff]
    %v2856 = vld [vmem:[#allocation2 + $0x10] sm:$0xff]
    %v2857 = vld [vmem:[#allocation2 + $0x18] sm:$0xff]
    %v2858 = vld [vmem:[#allocation2 + $0x20] sm:$0xff]
    %v2859 = vld [vmem:[#allocation2 + $0x28] sm:$0xff]
    %v2860 = vld [vmem:[%s493] ss:$8 sm:$0xf]
    %v2862 = vlaneseq
    %v2863 = vshrl.u32 %v2862, 7
    %v2864 = vsub.s32 0, %v2863
    %v2865 = vrot.slane %v2860, %v2864
    %v2866 = vlaneseq
    %v2867 = vshrl.u32 %v2866, 7
    %v2868 = vsub.s32 1, %v2867
    %v2869 = vrot.slane %v2860, %v2868
    %v2870 = vlaneseq
    %v2871 = vshrl.u32 %v2870, 7
    %v2872 = vsub.s32 2, %v2871
    %v2873 = vrot.slane %v2860, %v2872
    %v2874 = vlaneseq
    %v2875 = vshrl.u32 %v2874, 7
    %v2876 = vsub.s32 3, %v2875
    %v2877 = vrot.slane %v2860, %v2876
    %2878 = vrot.lane.b32.xlu0 %v2865, 15
    %v2879 = vpop.permute.xlu0 %2878
    %2880 = vrot.lane.b32.xlu0 %v2869, 15
    %v2881 = vpop.permute.xlu0 %2880
    %2882 = vrot.lane.b32.xlu0 %v2873, 15
    %v2883 = vpop.permute.xlu0 %2882
    %2884 = vrot.lane.b32.xlu0 %v2877, 15
    %v2885 = vpop.permute.xlu0 %2884
    %v2886 = vsel %vm321, %v2879, %v2881
    %v2887 = vsel %vm321, %v2881, %v2883
    %v2888 = vsel %vm321, %v2883, %v2885
    %v2894 = vmul.f32 %v2855, %v2879
    %v2895 = vmul.f32 %v2856, %v2886
    %v2896 = vmul.f32 %v2857, %v2887
    %v2897 = vmul.f32 %v2858, %v2888
    %v2898 = vmul.f32 %v2859, %v2885
    %2904 = vrot.lane.b32.xlu0 %v2894, 113
    %v2905 = vpop.permute.xlu0 %2904
    %2906 = vrot.lane.b32.xlu0 %v2895, 113
    %v2907 = vpop.permute.xlu0 %2906
    %2908 = vrot.lane.b32.xlu0 %v2896, 113
    %v2909 = vpop.permute.xlu0 %2908
    %2910 = vrot.lane.b32.xlu0 %v2897, 113
    %v2911 = vpop.permute.xlu0 %2910
    %2912 = vrot.lane.b32.xlu0 %v2898, 113
    %v2913 = vpop.permute.xlu0 %2912
    %v2914 = vsel %vm292, %v2905, %v2907
    %v2915 = vsel %vm292, %v2907, %v2909
    %v2916 = vsel %vm292, %v2909, %v2911
    %v2917 = vsel %vm292, %v2911, %v2913
    %2922 = vst [vmem:[#allocation4 + $0xc0] sm:$0xff] %v2914
    %2923 = vst [vmem:[#allocation4 + $0xc8] sm:$0xff] %v2915
    %2924 = vst [vmem:[#allocation4 + $0xd0] sm:$0xff] %v2916
    %2925 = vst [vmem:[#allocation4 + $0xd8] sm:$0xff] %v2917
    %v2926 = vld [vmem:[#allocation2 + $0x8] sm:$0xff]
    %v2927 = vld [vmem:[#allocation2 + $0x10] sm:$0xff]
    %v2928 = vld [vmem:[#allocation2 + $0x18] sm:$0xff]
    %v2929 = vld [vmem:[#allocation2 + $0x20] sm:$0xff]
    %v2930 = vld [vmem:[#allocation2 + $0x28] sm:$0xff]
    %v2931 = vld [vmem:[%s565] ss:$8 sm:$0xf]
    %v2933 = vlaneseq
    %v2934 = vshrl.u32 %v2933, 7
    %v2935 = vsub.s32 0, %v2934
    %v2936 = vrot.slane %v2931, %v2935
    %v2937 = vlaneseq
    %v2938 = vshrl.u32 %v2937, 7
    %v2939 = vsub.s32 1, %v2938
    %v2940 = vrot.slane %v2931, %v2939
    %v2941 = vlaneseq
    %v2942 = vshrl.u32 %v2941, 7
    %v2943 = vsub.s32 2, %v2942
    %v2944 = vrot.slane %v2931, %v2943
    %v2945 = vlaneseq
    %v2946 = vshrl.u32 %v2945, 7
    %v2947 = vsub.s32 3, %v2946
    %v2948 = vrot.slane %v2931, %v2947
    %2949 = vrot.lane.b32.xlu0 %v2936, 16
    %v2950 = vpop.permute.xlu0 %2949
    %2951 = vrot.lane.b32.xlu0 %v2940, 16
    %v2952 = vpop.permute.xlu0 %2951
    %2953 = vrot.lane.b32.xlu0 %v2944, 16
    %v2954 = vpop.permute.xlu0 %2953
    %2955 = vrot.lane.b32.xlu0 %v2948, 16
    %v2956 = vpop.permute.xlu0 %2955
    %v2957 = vsel %vm247, %v2950, %v2952
    %v2958 = vsel %vm247, %v2952, %v2954
    %v2959 = vsel %vm247, %v2954, %v2956
    %v2965 = vmul.f32 %v2926, %v2950
    %v2966 = vmul.f32 %v2927, %v2957
    %v2967 = vmul.f32 %v2928, %v2958
    %v2968 = vmul.f32 %v2929, %v2959
    %v2969 = vmul.f32 %v2930, %v2956
    %2975 = vrot.lane.b32.xlu0 %v2965, 112
    %v2976 = vpop.permute.xlu0 %2975
    %2977 = vrot.lane.b32.xlu0 %v2966, 112
    %v2978 = vpop.permute.xlu0 %2977
    %2979 = vrot.lane.b32.xlu0 %v2967, 112
    %v2980 = vpop.permute.xlu0 %2979
    %2981 = vrot.lane.b32.xlu0 %v2968, 112
    %v2982 = vpop.permute.xlu0 %2981
    %2983 = vrot.lane.b32.xlu0 %v2969, 112
    %v2984 = vpop.permute.xlu0 %2983
    %v2985 = vsel %vm218, %v2976, %v2978
    %v2986 = vsel %vm218, %v2978, %v2980
    %v2987 = vsel %vm218, %v2980, %v2982
    %v2988 = vsel %vm218, %v2982, %v2984
    %2993 = vst [vmem:[#allocation4 + $0xe0] sm:$0xff] %v2985
    %2994 = vst [vmem:[#allocation4 + $0xe8] sm:$0xff] %v2986
    %2995 = vst [vmem:[#allocation4 + $0xf0] sm:$0xff] %v2987
    %2996 = vst [vmem:[#allocation4 + $0xf8] sm:$0xff] %v2988
    %v2997 = vld [vmem:[#allocation2 + $0x8] sm:$0xff]
    %v2998 = vld [vmem:[#allocation2 + $0x10] sm:$0xff]
    %v2999 = vld [vmem:[#allocation2 + $0x18] sm:$0xff]
    %v3000 = vld [vmem:[#allocation2 + $0x20] sm:$0xff]
    %v3001 = vld [vmem:[#allocation2 + $0x28] sm:$0xff]
    %v3002 = vld [vmem:[%s637] ss:$8 sm:$0xf]
    %v3004 = vlaneseq
    %v3005 = vshrl.u32 %v3004, 7
    %v3006 = vsub.s32 0, %v3005
    %v3007 = vrot.slane %v3002, %v3006
    %v3008 = vlaneseq
    %v3009 = vshrl.u32 %v3008, 7
    %v3010 = vsub.s32 1, %v3009
    %v3011 = vrot.slane %v3002, %v3010
    %v3012 = vlaneseq
    %v3013 = vshrl.u32 %v3012, 7
    %v3014 = vsub.s32 2, %v3013
    %v3015 = vrot.slane %v3002, %v3014
    %v3016 = vlaneseq
    %v3017 = vshrl.u32 %v3016, 7
    %v3018 = vsub.s32 3, %v3017
    %v3019 = vrot.slane %v3002, %v3018
    %3020 = vrot.lane.b32.xlu0 %v3007, 17
    %v3021 = vpop.permute.xlu0 %3020
    %3022 = vrot.lane.b32.xlu0 %v3011, 17
    %v3023 = vpop.permute.xlu0 %3022
    %3024 = vrot.lane.b32.xlu0 %v3015, 17
    %v3025 = vpop.permute.xlu0 %3024
    %3026 = vrot.lane.b32.xlu0 %v3019, 17
    %v3027 = vpop.permute.xlu0 %3026
    %v3028 = vsel %vm173, %v3021, %v3023
    %v3029 = vsel %vm173, %v3023, %v3025
    %v3030 = vsel %vm173, %v3025, %v3027
    %v3036 = vmul.f32 %v2997, %v3021
    %v3037 = vmul.f32 %v2998, %v3028
    %v3038 = vmul.f32 %v2999, %v3029
    %v3039 = vmul.f32 %v3000, %v3030
    %v3040 = vmul.f32 %v3001, %v3027
    %3046 = vrot.lane.b32.xlu0 %v3036, 111
    %v3047 = vpop.permute.xlu0 %3046
    %3048 = vrot.lane.b32.xlu0 %v3037, 111
    %v3049 = vpop.permute.xlu0 %3048
    %3050 = vrot.lane.b32.xlu0 %v3038, 111
    %v3051 = vpop.permute.xlu0 %3050
    %3052 = vrot.lane.b32.xlu0 %v3039, 111
    %v3053 = vpop.permute.xlu0 %3052
    %3054 = vrot.lane.b32.xlu0 %v3040, 111
    %v3055 = vpop.permute.xlu0 %3054
    %v3056 = vsel %vm144, %v3047, %v3049
    %v3057 = vsel %vm144, %v3049, %v3051
    %v3058 = vsel %vm144, %v3051, %v3053
    %v3059 = vsel %vm144, %v3053, %v3055
    %3064 = vst [vmem:[#allocation4 + $0x100] sm:$0xff] %v3056
    %3065 = vst [vmem:[#allocation4 + $0x108] sm:$0xff] %v3057
    %3066 = vst [vmem:[#allocation4 + $0x110] sm:$0xff] %v3058
    %3067 = vst [vmem:[#allocation4 + $0x118] sm:$0xff] %v3059
    %v3068 = vld [vmem:[#allocation11 + $0x20] sm:$0xff]
    %v3069 = vld [vmem:[#allocation11 + $0x30] sm:$0xff]
    %v3070 = vld [vmem:[#allocation4] sm:$0xff]
    %v3071 = vld [vmem:[#allocation4 + $0x8] sm:$0xff]
    %v3072 = vld [vmem:[#allocation4 + $0x10] sm:$0xff]
    %v3073 = vld [vmem:[#allocation4 + $0x18] sm:$0xff]
    %v3074 = vld [vmem:[#allocation4 + $0x20] sm:$0xff]
    %v3075 = vld [vmem:[#allocation4 + $0x28] sm:$0xff]
    %v3076 = vld [vmem:[#allocation4 + $0x30] sm:$0xff]
    %v3077 = vld [vmem:[#allocation4 + $0x38] sm:$0xff]
    %v3078 = vld [vmem:[#allocation4 + $0x40] sm:$0xff]
    %v3079 = vld [vmem:[#allocation4 + $0x48] sm:$0xff]
    %v3080 = vld [vmem:[#allocation4 + $0x50] sm:$0xff]
    %v3081 = vld [vmem:[#allocation4 + $0x58] sm:$0xff]
    %v3082 = vld [vmem:[#allocation4 + $0x60] sm:$0xff]
    %v3083 = vld [vmem:[#allocation4 + $0x68] sm:$0xff]
    %v3084 = vld [vmem:[#allocation4 + $0x70] sm:$0xff]
    %v3085 = vld [vmem:[#allocation4 + $0x78] sm:$0xff]
    %v3086 = vld [vmem:[#allocation4 + $0x80] sm:$0xff]
    %v3087 = vld [vmem:[#allocation4 + $0x88] sm:$0xff]
    %v3088 = vld [vmem:[#allocation4 + $0x90] sm:$0xff]
    %v3089 = vld [vmem:[#allocation4 + $0x98] sm:$0xff]
    %v3090 = vld [vmem:[#allocation4 + $0xa0] sm:$0xff]
    %v3091 = vld [vmem:[#allocation4 + $0xa8] sm:$0xff]
    %v3092 = vld [vmem:[#allocation4 + $0xb0] sm:$0xff]
    %v3093 = vld [vmem:[#allocation4 + $0xb8] sm:$0xff]
    %v3094 = vld [vmem:[#allocation4 + $0xc0] sm:$0xff]
    %v3095 = vld [vmem:[#allocation4 + $0xc8] sm:$0xff]
    %v3096 = vld [vmem:[#allocation4 + $0xd0] sm:$0xff]
    %v3097 = vld [vmem:[#allocation4 + $0xd8] sm:$0xff]
    %v3098 = vld [vmem:[#allocation4 + $0xe0] sm:$0xff]
    %v3099 = vld [vmem:[#allocation4 + $0xe8] sm:$0xff]
    %v3100 = vld [vmem:[#allocation4 + $0xf0] sm:$0xff]
    %v3101 = vld [vmem:[#allocation4 + $0xf8] sm:$0xff]
    %v3102 = vld [vmem:[#allocation4 + $0x100] sm:$0xff]
    %v3103 = vld [vmem:[#allocation4 + $0x108] sm:$0xff]
    %v3104 = vld [vmem:[#allocation4 + $0x110] sm:$0xff]
    %v3105 = vld [vmem:[#allocation4 + $0x118] sm:$0xff]
    %v3106 = vld [vmem:[#allocation4 + $0x120] sm:$0x1]
    %v3107 = vld [vmem:[#allocation4 + $0x128] sm:$0x1]
    %v3108 = vld [vmem:[#allocation4 + $0x130] sm:$0x1]
    %v3109 = vld [vmem:[#allocation4 + $0x138] sm:$0x1]
    %v3111 = vsel %vm745, %v3068, 0
    %v3114 = vsel %vm745, %v3069, 0
    %v3117 = vsel %vm749, %v3106, 0
    %v3120 = vsel %vm749, %v3107, 0
    %v3123 = vsel %vm749, %v3108, 0
    %v3126 = vsel %vm749, %v3109, 0
    %3128 = vmatprep.subr.mxu0 0.0
    %3129 = vmatpush1.msra.mxu0 0.0
    %3130 = vmatprep.subr.mxu0 0.0
    %3131 = vmatpush1.msra.mxu0 0.0
    %3132 = vmatprep.subr.mxu0 0.0
    %3133 = vmatpush1.msra.mxu0 0.0
    %3134 = vmatprep.subr.mxu0 0.0
    %3135 = vmatpush1.msra.mxu0 0.0
    %3136 = vmatprep.subr.mxu0 0.0
    %3137 = vmatpush1.msra.mxu0 0.0
    %3138 = vmatprep.subr.mxu0 0.0
    %3139 = vmatpush1.msra.mxu0 0.0
    %3140 = vmatprep.subr.mxu0 %v3120
    %3141 = vmatpush1.msra.mxu0 %v3117
    %3142 = vmatprep.subr.mxu0 %v3103
    %3143 = vmatpush1.msra.mxu0 %v3102
    %3144 = vmatprep.subr.mxu0 %v3099
    %3145 = vmatpush1.msra.mxu0 %v3098
    %3146 = vmatprep.subr.mxu0 %v3095
    %3147 = vmatpush1.msra.mxu0 %v3094
    %3148 = vmatprep.subr.mxu0 %v3091
    %3149 = vmatpush1.msra.mxu0 %v3090
    %3150 = vmatprep.subr.mxu0 %v3087
    %3151 = vmatpush1.msra.mxu0 %v3086
    %3152 = vmatprep.subr.mxu0 %v3083
    %3153 = vmatpush1.msra.mxu0 %v3082
    %3154 = vmatprep.subr.mxu0 %v3079
    %3155 = vmatpush1.msra.mxu0 %v3078
    %3156 = vmatprep.subr.mxu0 %v3075
    %3157 = vmatpush1.msra.mxu0 %v3074
    %3158 = vmatprep.subr.mxu0 %v3071
    %3159 = vmatpush1.msra.mxu0 %v3070
    %3160 = vmatprep.subr.mxu0 0.0
    %3161 = vmatpush2.msra.mxu0 0.0
    %3162 = vmatprep.subr.mxu0 0.0
    %3163 = vmatpush2.msra.mxu0 0.0
    %3164 = vmatprep.subr.mxu0 0.0
    %3165 = vmatpush2.msra.mxu0 0.0
    %3166 = vmatprep.subr.mxu0 0.0
    %3167 = vmatpush2.msra.mxu0 0.0
    %3168 = vmatprep.subr.mxu0 0.0
    %3169 = vmatpush2.msra.mxu0 0.0
    %3170 = vmatprep.subr.mxu0 0.0
    %3171 = vmatpush2.msra.mxu0 0.0
    %3172 = vmatprep.subr.mxu0 0.0
    %3173 = vmatpush2.msra.mxu0 0.0
    %3174 = vmatprep.subr.mxu0 0.0
    %3175 = vmatpush2.msra.mxu0 0.0
    %3176 = vmatprep.subr.mxu0 0.0
    %3177 = vmatpush2.msra.mxu0 0.0
    %3178 = vmatprep.subr.mxu0 0.0
    %3179 = vmatpush2.msra.mxu0 0.0
    %3180 = vmatprep.subr.mxu0 0.0
    %3181 = vmatpush2.msra.mxu0 0.0
    %3182 = vmatprep.subr.mxu0 0.0
    %3183 = vmatpush2.msra.mxu0 0.0
    %3184 = vmatprep.subr.mxu0 0.0
    %3185 = vmatpush2.msra.mxu0 0.0
    %3186 = vmatprep.subr.mxu0 0.0
    %3187 = vmatpush2.msra.mxu0 0.0
    %3188 = vmatprep.subr.mxu0 0.0
    %3189 = vmatpush2.msra.mxu0 0.0
    %3190 = vmatprep.subr.mxu0 0.0
    %3191 = vmatpush2.msra.mxu0 0.0
    %3192 = vmatprep.mubr.f32.mxu0 0.0
    %3193 = vmatmul.mubr.f32.gmra.mxu0 %v3111
    %v3194 = vpop.f32.mrf.mxu0
    %v3195 = vadd.f32 0.0, %v3194
    %v3196 = vpop.f32.mrf.mxu0
    %v3197 = vadd.f32 0.0, %v3196
    %3198 = vmatprep.mubr.f32.mxu0 0.0
    %3199 = vmatmul.mubr.f32.gmra.mxu0 %v3114
    %v3200 = vpop.f32.mrf.mxu0
    %v3201 = vadd.f32 0.0, %v3200
    %v3202 = vpop.f32.mrf.mxu0
    %v3203 = vadd.f32 0.0, %v3202
    %3204 = vdwg.mxu0
    %3205 = vmatprep.subr.mxu0 0.0
    %3206 = vmatpush1.msra.mxu0 0.0
    %3207 = vmatprep.subr.mxu0 0.0
    %3208 = vmatpush1.msra.mxu0 0.0
    %3209 = vmatprep.subr.mxu0 0.0
    %3210 = vmatpush1.msra.mxu0 0.0
    %3211 = vmatprep.subr.mxu0 0.0
    %3212 = vmatpush1.msra.mxu0 0.0
    %3213 = vmatprep.subr.mxu0 0.0
    %3214 = vmatpush1.msra.mxu0 0.0
    %3215 = vmatprep.subr.mxu0 0.0
    %3216 = vmatpush1.msra.mxu0 0.0
    %3217 = vmatprep.subr.mxu0 %v3126
    %3218 = vmatpush1.msra.mxu0 %v3123
    %3219 = vmatprep.subr.mxu0 %v3105
    %3220 = vmatpush1.msra.mxu0 %v3104
    %3221 = vmatprep.subr.mxu0 %v3101
    %3222 = vmatpush1.msra.mxu0 %v3100
    %3223 = vmatprep.subr.mxu0 %v3097
    %3224 = vmatpush1.msra.mxu0 %v3096
    %3225 = vmatprep.subr.mxu0 %v3093
    %3226 = vmatpush1.msra.mxu0 %v3092
    %3227 = vmatprep.subr.mxu0 %v3089
    %3228 = vmatpush1.msra.mxu0 %v3088
    %3229 = vmatprep.subr.mxu0 %v3085
    %3230 = vmatpush1.msra.mxu0 %v3084
    %3231 = vmatprep.subr.mxu0 %v3081
    %3232 = vmatpush1.msra.mxu0 %v3080
    %3233 = vmatprep.subr.mxu0 %v3077
    %3234 = vmatpush1.msra.mxu0 %v3076
    %3235 = vmatprep.subr.mxu0 %v3073
    %3236 = vmatpush1.msra.mxu0 %v3072
    %3237 = vmatprep.subr.mxu0 0.0
    %3238 = vmatpush2.msra.mxu0 0.0
    %3239 = vmatprep.subr.mxu0 0.0
    %3240 = vmatpush2.msra.mxu0 0.0
    %3241 = vmatprep.subr.mxu0 0.0
    %3242 = vmatpush2.msra.mxu0 0.0
    %3243 = vmatprep.subr.mxu0 0.0
    %3244 = vmatpush2.msra.mxu0 0.0
    %3245 = vmatprep.subr.mxu0 0.0
    %3246 = vmatpush2.msra.mxu0 0.0
    %3247 = vmatprep.subr.mxu0 0.0
    %3248 = vmatpush2.msra.mxu0 0.0
    %3249 = vmatprep.subr.mxu0 0.0
    %3250 = vmatpush2.msra.mxu0 0.0
    %3251 = vmatprep.subr.mxu0 0.0
    %3252 = vmatpush2.msra.mxu0 0.0
    %3253 = vmatprep.subr.mxu0 0.0
    %3254 = vmatpush2.msra.mxu0 0.0
    %3255 = vmatprep.subr.mxu0 0.0
    %3256 = vmatpush2.msra.mxu0 0.0
    %3257 = vmatprep.subr.mxu0 0.0
    %3258 = vmatpush2.msra.mxu0 0.0
    %3259 = vmatprep.subr.mxu0 0.0
    %3260 = vmatpush2.msra.mxu0 0.0
    %3261 = vmatprep.subr.mxu0 0.0
    %3262 = vmatpush2.msra.mxu0 0.0
    %3263 = vmatprep.subr.mxu0 0.0
    %3264 = vmatpush2.msra.mxu0 0.0
    %3265 = vmatprep.subr.mxu0 0.0
    %3266 = vmatpush2.msra.mxu0 0.0
    %3267 = vmatprep.subr.mxu0 0.0
    %3268 = vmatpush2.msra.mxu0 0.0
    %3269 = vmatprep.mubr.f32.mxu0 0.0
    %3270 = vmatmul.mubr.f32.gmra.mxu0 %v3111
    %v3271 = vpop.f32.mrf.mxu0
    %v3272 = vadd.f32 0.0, %v3271
    %v3273 = vpop.f32.mrf.mxu0
    %v3274 = vadd.f32 0.0, %v3273
    %3275 = vmatprep.mubr.f32.mxu0 0.0
    %3276 = vmatmul.mubr.f32.gmra.mxu0 %v3114
    %v3277 = vpop.f32.mrf.mxu0
    %v3278 = vadd.f32 0.0, %v3277
    %v3279 = vpop.f32.mrf.mxu0
    %v3280 = vadd.f32 0.0, %v3279
    %3281 = vdwg.mxu0
    %v3282 = vld [vmem:[#allocation14] sm:$0xff]
    %v3283 = vld [vmem:[#allocation14 + $0x8] sm:$0xff]
    %v3284 = vld [vmem:[#allocation14 + $0x10] sm:$0xff]
    %v3285 = vld [vmem:[#allocation14 + $0x18] sm:$0xff]
    %v3286 = vld [vmem:[#allocation14 + $0x20] sm:$0xff]
    %v3287 = vld [vmem:[#allocation14 + $0x28] sm:$0xff]
    %v3288 = vld [vmem:[#allocation14 + $0x30] sm:$0xff]
    %v3289 = vld [vmem:[#allocation14 + $0x38] sm:$0xff]
    %v3290 = vld [vmem:[#allocation14 + $0x40] sm:$0xff]
    %v3291 = vld [vmem:[#allocation14 + $0x48] sm:$0xff]
    %v3292 = vld [vmem:[#allocation14 + $0x50] sm:$0xff]
    %v3293 = vld [vmem:[#allocation14 + $0x58] sm:$0xff]
    %v3294 = vld [vmem:[#allocation14 + $0x60] sm:$0xff]
    %v3295 = vld [vmem:[#allocation14 + $0x68] sm:$0xff]
    %v3296 = vld [vmem:[#allocation14 + $0x70] sm:$0xff]
    %v3297 = vld [vmem:[#allocation14 + $0x78] sm:$0xff]
    %v3298 = vld [vmem:[#allocation14 + $0x80] sm:$0xff]
    %v3299 = vld [vmem:[#allocation14 + $0x88] sm:$0xff]
    %v3300 = vld [vmem:[#allocation14 + $0x90] sm:$0xff]
    %v3301 = vld [vmem:[#allocation14 + $0x98] sm:$0xff]
    %v3302 = vld [vmem:[#allocation14 + $0xa0] sm:$0xff]
    %v3303 = vld [vmem:[#allocation14 + $0xa8] sm:$0xff]
    %v3304 = vld [vmem:[#allocation14 + $0xb0] sm:$0xff]
    %v3305 = vld [vmem:[#allocation14 + $0xb8] sm:$0xff]
    %v3306 = vld [vmem:[#allocation14 + $0xc0] sm:$0xff]
    %v3307 = vld [vmem:[#allocation14 + $0xc8] sm:$0xff]
    %v3308 = vld [vmem:[#allocation14 + $0xd0] sm:$0xff]
    %v3309 = vld [vmem:[#allocation14 + $0xd8] sm:$0xff]
    %v3310 = vld [vmem:[#allocation14 + $0xe0] sm:$0xff]
    %v3311 = vld [vmem:[#allocation14 + $0xe8] sm:$0xff]
    %v3312 = vld [vmem:[#allocation14 + $0xf0] sm:$0xff]
    %v3313 = vld [vmem:[#allocation14 + $0xf8] sm:$0xff]
    %v3314 = vld [vmem:[#allocation14 + $0x100] sm:$0xff]
    %v3315 = vld [vmem:[#allocation14 + $0x108] sm:$0xff]
    %v3316 = vld [vmem:[#allocation14 + $0x110] sm:$0xff]
    %v3317 = vld [vmem:[#allocation14 + $0x118] sm:$0xff]
    %v3318 = vld [vmem:[#allocation14 + $0x120] sm:$0xff]
    %v3319 = vld [vmem:[#allocation14 + $0x128] sm:$0xff]
    %v3320 = vld [vmem:[#allocation14 + $0x130] sm:$0xff]
    %v3321 = vld [vmem:[#allocation14 + $0x138] sm:$0xff]
    %v3322 = vld [vmem:[#allocation14 + $0x140] sm:$0xff]
    %v3323 = vld [vmem:[#allocation14 + $0x148] sm:$0xff]
    %v3324 = vld [vmem:[#allocation14 + $0x150] sm:$0xff]
    %v3325 = vld [vmem:[#allocation14 + $0x158] sm:$0xff]
    %v3326 = vld [vmem:[#allocation14 + $0x160] sm:$0xff]
    %v3327 = vld [vmem:[#allocation14 + $0x168] sm:$0xff]
    %v3328 = vld [vmem:[#allocation14 + $0x170] sm:$0xff]
    %v3329 = vld [vmem:[#allocation14 + $0x178] sm:$0xff]
    %v3330 = vld [vmem:[#allocation14 + $0x180] sm:$0xff]
    %v3331 = vld [vmem:[#allocation14 + $0x188] sm:$0xff]
    %v3332 = vld [vmem:[#allocation14 + $0x190] sm:$0xff]
    %v3333 = vld [vmem:[#allocation14 + $0x198] sm:$0xff]
    %v3334 = vld [vmem:[#allocation14 + $0x1a0] sm:$0xff]
    %v3335 = vld [vmem:[#allocation14 + $0x1a8] sm:$0xff]
    %v3336 = vld [vmem:[#allocation14 + $0x1b0] sm:$0xff]
    %v3337 = vld [vmem:[#allocation14 + $0x1b8] sm:$0xff]
    %v3338 = vld [vmem:[#allocation14 + $0x1c0] sm:$0xff]
    %v3339 = vld [vmem:[#allocation14 + $0x1c8] sm:$0xff]
    %v3340 = vld [vmem:[#allocation14 + $0x1d0] sm:$0xff]
    %v3341 = vld [vmem:[#allocation14 + $0x1d8] sm:$0xff]
    %v3342 = vld [vmem:[#allocation14 + $0x1e0] sm:$0xff]
    %v3343 = vld [vmem:[#allocation14 + $0x1e8] sm:$0xff]
    %v3344 = vld [vmem:[#allocation14 + $0x1f0] sm:$0xff]
    %v3345 = vld [vmem:[#allocation14 + $0x1f8] sm:$0xff]
    %3346 = vmatprep.subr.mxu0 0.0
    %3347 = vmatpush1.msra.mxu0 %v3297
    %3348 = vmatprep.subr.mxu0 0.0
    %3349 = vmatpush1.msra.mxu0 %v3296
    %3350 = vmatprep.subr.mxu0 0.0
    %3351 = vmatpush1.msra.mxu0 %v3295
    %3352 = vmatprep.subr.mxu0 0.0
    %3353 = vmatpush1.msra.mxu0 %v3294
    %3354 = vmatprep.subr.mxu0 0.0
    %3355 = vmatpush1.msra.mxu0 %v3293
    %3356 = vmatprep.subr.mxu0 0.0
    %3357 = vmatpush1.msra.mxu0 %v3292
    %3358 = vmatprep.subr.mxu0 0.0
    %3359 = vmatpush1.msra.mxu0 %v3291
    %3360 = vmatprep.subr.mxu0 0.0
    %3361 = vmatpush1.msra.mxu0 %v3290
    %3362 = vmatprep.subr.mxu0 0.0
    %3363 = vmatpush1.msra.mxu0 %v3289
    %3364 = vmatprep.subr.mxu0 0.0
    %3365 = vmatpush1.msra.mxu0 %v3288
    %3366 = vmatprep.subr.mxu0 0.0
    %3367 = vmatpush1.msra.mxu0 %v3287
    %3368 = vmatprep.subr.mxu0 0.0
    %3369 = vmatpush1.msra.mxu0 %v3286
    %3370 = vmatprep.subr.mxu0 0.0
    %3371 = vmatpush1.msra.mxu0 %v3285
    %3372 = vmatprep.subr.mxu0 0.0
    %3373 = vmatpush1.msra.mxu0 %v3284
    %3374 = vmatprep.subr.mxu0 0.0
    %3375 = vmatpush1.msra.mxu0 %v3283
    %3376 = vmatprep.subr.mxu0 0.0
    %3377 = vmatpush1.msra.mxu0 %v3282
    %3378 = vmatprep.subr.mxu0 0.0
    %3379 = vmatpush2.msra.mxu0 %v3313
    %3380 = vmatprep.subr.mxu0 0.0
    %3381 = vmatpush2.msra.mxu0 %v3312
    %3382 = vmatprep.subr.mxu0 0.0
    %3383 = vmatpush2.msra.mxu0 %v3311
    %3384 = vmatprep.subr.mxu0 0.0
    %3385 = vmatpush2.msra.mxu0 %v3310
    %3386 = vmatprep.subr.mxu0 0.0
    %3387 = vmatpush2.msra.mxu0 %v3309
    %3388 = vmatprep.subr.mxu0 0.0
    %3389 = vmatpush2.msra.mxu0 %v3308
    %3390 = vmatprep.subr.mxu0 0.0
    %3391 = vmatpush2.msra.mxu0 %v3307
    %3392 = vmatprep.subr.mxu0 0.0
    %3393 = vmatpush2.msra.mxu0 %v3306
    %3394 = vmatprep.subr.mxu0 0.0
    %3395 = vmatpush2.msra.mxu0 %v3305
    %3396 = vmatprep.subr.mxu0 0.0
    %3397 = vmatpush2.msra.mxu0 %v3304
    %3398 = vmatprep.subr.mxu0 0.0
    %3399 = vmatpush2.msra.mxu0 %v3303
    %3400 = vmatprep.subr.mxu0 0.0
    %3401 = vmatpush2.msra.mxu0 %v3302
    %3402 = vmatprep.subr.mxu0 0.0
    %3403 = vmatpush2.msra.mxu0 %v3301
    %3404 = vmatprep.subr.mxu0 0.0
    %3405 = vmatpush2.msra.mxu0 %v3300
    %3406 = vmatprep.subr.mxu0 0.0
    %3407 = vmatpush2.msra.mxu0 %v3299
    %3408 = vmatprep.subr.mxu0 0.0
    %3409 = vmatpush2.msra.mxu0 %v3298
    %3410 = vmatprep.mubr.f32.mxu0 %v3197
    %3411 = vmatmul.mubr.f32.gmra.mxu0 %v3195
    %v3412 = vpop.f32.mrf.mxu0
    %v3413 = vadd.f32 %v2490, %v3412
    %v3414 = vpop.f32.mrf.mxu0
    %3415 = vmatprep.mubr.f32.mxu0 %v3203
    %3416 = vmatmul.mubr.f32.gmra.mxu0 %v3201
    %v3417 = vpop.f32.mrf.mxu0
    %v3418 = vadd.f32 %v2491, %v3417
    %v3419 = vpop.f32.mrf.mxu0
    %3420 = vdwg.mxu0
    %3421 = vmatprep.subr.mxu0 0.0
    %3422 = vmatpush1.msra.mxu0 %v3329
    %3423 = vmatprep.subr.mxu0 0.0
    %3424 = vmatpush1.msra.mxu0 %v3328
    %3425 = vmatprep.subr.mxu0 0.0
    %3426 = vmatpush1.msra.mxu0 %v3327
    %3427 = vmatprep.subr.mxu0 0.0
    %3428 = vmatpush1.msra.mxu0 %v3326
    %3429 = vmatprep.subr.mxu0 0.0
    %3430 = vmatpush1.msra.mxu0 %v3325
    %3431 = vmatprep.subr.mxu0 0.0
    %3432 = vmatpush1.msra.mxu0 %v3324
    %3433 = vmatprep.subr.mxu0 0.0
    %3434 = vmatpush1.msra.mxu0 %v3323
    %3435 = vmatprep.subr.mxu0 0.0
    %3436 = vmatpush1.msra.mxu0 %v3322
    %3437 = vmatprep.subr.mxu0 0.0
    %3438 = vmatpush1.msra.mxu0 %v3321
    %3439 = vmatprep.subr.mxu0 0.0
    %3440 = vmatpush1.msra.mxu0 %v3320
    %3441 = vmatprep.subr.mxu0 0.0
    %3442 = vmatpush1.msra.mxu0 %v3319
    %3443 = vmatprep.subr.mxu0 0.0
    %3444 = vmatpush1.msra.mxu0 %v3318
    %3445 = vmatprep.subr.mxu0 0.0
    %3446 = vmatpush1.msra.mxu0 %v3317
    %3447 = vmatprep.subr.mxu0 0.0
    %3448 = vmatpush1.msra.mxu0 %v3316
    %3449 = vmatprep.subr.mxu0 0.0
    %3450 = vmatpush1.msra.mxu0 %v3315
    %3451 = vmatprep.subr.mxu0 0.0
    %3452 = vmatpush1.msra.mxu0 %v3314
    %3453 = vmatprep.subr.mxu0 0.0
    %3454 = vmatpush2.msra.mxu0 %v3345
    %3455 = vmatprep.subr.mxu0 0.0
    %3456 = vmatpush2.msra.mxu0 %v3344
    %3457 = vmatprep.subr.mxu0 0.0
    %3458 = vmatpush2.msra.mxu0 %v3343
    %3459 = vmatprep.subr.mxu0 0.0
    %3460 = vmatpush2.msra.mxu0 %v3342
    %3461 = vmatprep.subr.mxu0 0.0
    %3462 = vmatpush2.msra.mxu0 %v3341
    %3463 = vmatprep.subr.mxu0 0.0
    %3464 = vmatpush2.msra.mxu0 %v3340
    %3465 = vmatprep.subr.mxu0 0.0
    %3466 = vmatpush2.msra.mxu0 %v3339
    %3467 = vmatprep.subr.mxu0 0.0
    %3468 = vmatpush2.msra.mxu0 %v3338
    %3469 = vmatprep.subr.mxu0 0.0
    %3470 = vmatpush2.msra.mxu0 %v3337
    %3471 = vmatprep.subr.mxu0 0.0
    %3472 = vmatpush2.msra.mxu0 %v3336
    %3473 = vmatprep.subr.mxu0 0.0
    %3474 = vmatpush2.msra.mxu0 %v3335
    %3475 = vmatprep.subr.mxu0 0.0
    %3476 = vmatpush2.msra.mxu0 %v3334
    %3477 = vmatprep.subr.mxu0 0.0
    %3478 = vmatpush2.msra.mxu0 %v3333
    %3479 = vmatprep.subr.mxu0 0.0
    %3480 = vmatpush2.msra.mxu0 %v3332
    %3481 = vmatprep.subr.mxu0 0.0
    %3482 = vmatpush2.msra.mxu0 %v3331
    %3483 = vmatprep.subr.mxu0 0.0
    %3484 = vmatpush2.msra.mxu0 %v3330
    %3485 = vmatprep.mubr.f32.mxu0 %v3274
    %3486 = vmatmul.mubr.f32.gmra.mxu0 %v3272
    %v3487 = vpop.f32.mrf.mxu0
    %v3488 = vadd.f32 %v3413, %v3487
    %v3489 = vpop.f32.mrf.mxu0
    %3490 = vmatprep.mubr.f32.mxu0 %v3280
    %3491 = vmatmul.mubr.f32.gmra.mxu0 %v3278
    %v3492 = vpop.f32.mrf.mxu0
    %v3493 = vadd.f32 %v3418, %v3492
    %v3494 = vpop.f32.mrf.mxu0
    %3495 = vdwg.mxu0
    %v3496 = vmax.f32 %v3488, 0.0
    %v3497 = vmax.f32 %v3493, 0.0
    %3498 = vst [vmem:[#allocation16] sm:$0xff] %v3496
    %3499 = vst [vmem:[#allocation16 + $0x8] sm:$0xff] %v3497
    %v3500 = vld [vmem:[#allocation11 + $0x80] sm:$0xff]
    %3502 = vset.pattern.permute.xlu0 16
    %3503 = vperm.xlu0 %3502, %v3500
    %v3504 = vpop.permute.xlu0 %3503
    %v3506 = vsel %vm247, %v3500, 0
    %3508 = vmatprep.subr.mxu0 0.0
    %3509 = vmatpush1.msra.mxu0 0.0
    %3510 = vmatprep.subr.mxu0 0.0
    %3511 = vmatpush1.msra.mxu0 0.0
    %3512 = vmatprep.subr.mxu0 0.0
    %3513 = vmatpush1.msra.mxu0 0.0
    %3514 = vmatprep.subr.mxu0 0.0
    %3515 = vmatpush1.msra.mxu0 0.0
    %3516 = vmatprep.subr.mxu0 0.0
    %3517 = vmatpush1.msra.mxu0 0.0
    %3518 = vmatprep.subr.mxu0 0.0
    %3519 = vmatpush1.msra.mxu0 0.0
    %3520 = vmatprep.subr.mxu0 0.0
    %3521 = vmatpush1.msra.mxu0 0.0
    %3522 = vmatprep.subr.mxu0 0.0
    %3523 = vmatpush1.msra.mxu0 0.0
    %3524 = vmatprep.subr.mxu0 0.0
    %3525 = vmatpush1.msra.mxu0 0.0
    %3526 = vmatprep.subr.mxu0 0.0
    %3527 = vmatpush1.msra.mxu0 0.0
    %3528 = vmatprep.subr.mxu0 0.0
    %3529 = vmatpush1.msra.mxu0 0.0
    %3530 = vmatprep.subr.mxu0 0.0
    %3531 = vmatpush1.msra.mxu0 0.0
    %3532 = vmatprep.subr.mxu0 0.0
    %3533 = vmatpush1.msra.mxu0 0.0
    %3534 = vmatprep.subr.mxu0 0.0
    %3535 = vmatpush1.msra.mxu0 0.0
    %3536 = vmatprep.subr.mxu0 0.0
    %3537 = vmatpush1.msra.mxu0 %v2491
    %3538 = vmatprep.subr.mxu0 0.0
    %3539 = vmatpush1.msra.mxu0 %v2490
    %3540 = vmatprep.subr.mxu0 0.0
    %3541 = vmatpush2.msra.mxu0 0.0
    %3542 = vmatprep.subr.mxu0 0.0
    %3543 = vmatpush2.msra.mxu0 0.0
    %3544 = vmatprep.subr.mxu0 0.0
    %3545 = vmatpush2.msra.mxu0 0.0
    %3546 = vmatprep.subr.mxu0 0.0
    %3547 = vmatpush2.msra.mxu0 0.0
    %3548 = vmatprep.subr.mxu0 0.0
    %3549 = vmatpush2.msra.mxu0 0.0
    %3550 = vmatprep.subr.mxu0 0.0
    %3551 = vmatpush2.msra.mxu0 0.0
    %3552 = vmatprep.subr.mxu0 0.0
    %3553 = vmatpush2.msra.mxu0 0.0
    %3554 = vmatprep.subr.mxu0 0.0
    %3555 = vmatpush2.msra.mxu0 0.0
    %3556 = vmatprep.subr.mxu0 0.0
    %3557 = vmatpush2.msra.mxu0 0.0
    %3558 = vmatprep.subr.mxu0 0.0
    %3559 = vmatpush2.msra.mxu0 0.0
    %3560 = vmatprep.subr.mxu0 0.0
    %3561 = vmatpush2.msra.mxu0 0.0
    %3562 = vmatprep.subr.mxu0 0.0
    %3563 = vmatpush2.msra.mxu0 0.0
    %3564 = vmatprep.subr.mxu0 0.0
    %3565 = vmatpush2.msra.mxu0 0.0
    %3566 = vmatprep.subr.mxu0 0.0
    %3567 = vmatpush2.msra.mxu0 0.0
    %3568 = vmatprep.subr.mxu0 0.0
    %3569 = vmatpush2.msra.mxu0 0.0
    %3570 = vmatprep.subr.mxu0 0.0
    %3571 = vmatpush2.msra.mxu0 0.0
    %3572 = vmatprep.mubr.f32.mxu0 0.0
    %3573 = vmatmul.mubr.f32.gmra.mxu0 %v3506
    %v3574 = vpop.f32.mrf.mxu0
    %v3575 = vadd.f32 %v3504, %v3574
    %v3576 = vpop.f32.mrf.mxu0
    %3577 = vdwg.mxu0
    %v3578 = vld [vmem:[#allocation12] sm:$0xff]
    %v3579 = vld [vmem:[#allocation12 + $0x8] sm:$0xff]
    %v3580 = vld [vmem:[#allocation12 + $0x10] sm:$0xff]
    %v3581 = vld [vmem:[#allocation12 + $0x18] sm:$0xff]
    %v3582 = vld [vmem:[#allocation12 + $0x20] sm:$0xff]
    %v3583 = vld [vmem:[#allocation12 + $0x28] sm:$0xff]
    %v3584 = vld [vmem:[#allocation12 + $0x30] sm:$0xff]
    %v3585 = vld [vmem:[#allocation12 + $0x38] sm:$0xff]
    %v3586 = vld [vmem:[#allocation12 + $0x40] sm:$0xff]
    %v3587 = vld [vmem:[#allocation12 + $0x48] sm:$0xff]
    %v3588 = vld [vmem:[#allocation12 + $0x50] sm:$0xff]
    %v3589 = vld [vmem:[#allocation12 + $0x58] sm:$0xff]
    %v3590 = vld [vmem:[#allocation12 + $0x60] sm:$0xff]
    %v3591 = vld [vmem:[#allocation12 + $0x68] sm:$0xff]
    %v3592 = vld [vmem:[#allocation12 + $0x70] sm:$0xff]
    %v3593 = vld [vmem:[#allocation12 + $0x78] sm:$0xff]
    %v3594 = vld [vmem:[#allocation12 + $0x80] sm:$0xff]
    %v3595 = vld [vmem:[#allocation12 + $0x88] sm:$0xff]
    %v3596 = vld [vmem:[#allocation12 + $0x90] sm:$0xff]
    %v3597 = vld [vmem:[#allocation12 + $0x98] sm:$0xff]
    %v3598 = vld [vmem:[#allocation12 + $0xa0] sm:$0xff]
    %v3599 = vld [vmem:[#allocation12 + $0xa8] sm:$0xff]
    %v3600 = vld [vmem:[#allocation12 + $0xb0] sm:$0xff]
    %v3601 = vld [vmem:[#allocation12 + $0xb8] sm:$0xff]
    %v3602 = vld [vmem:[#allocation12 + $0xc0] sm:$0xff]
    %v3603 = vld [vmem:[#allocation12 + $0xc8] sm:$0xff]
    %v3604 = vld [vmem:[#allocation12 + $0xd0] sm:$0xff]
    %v3605 = vld [vmem:[#allocation12 + $0xd8] sm:$0xff]
    %v3606 = vld [vmem:[#allocation12 + $0xe0] sm:$0xff]
    %v3607 = vld [vmem:[#allocation12 + $0xe8] sm:$0xff]
    %v3608 = vld [vmem:[#allocation12 + $0xf0] sm:$0xff]
    %v3609 = vld [vmem:[#allocation12 + $0xf8] sm:$0xff]
    %v3610 = vld [vmem:[#allocation12 + $0x100] sm:$0xff]
    %v3611 = vld [vmem:[#allocation12 + $0x108] sm:$0xff]
    %v3612 = vld [vmem:[#allocation12 + $0x110] sm:$0xff]
    %v3613 = vld [vmem:[#allocation12 + $0x118] sm:$0xff]
    %v3614 = vld [vmem:[#allocation12 + $0x120] sm:$0xff]
    %v3615 = vld [vmem:[#allocation12 + $0x128] sm:$0xff]
    %v3616 = vld [vmem:[#allocation12 + $0x130] sm:$0xff]
    %v3617 = vld [vmem:[#allocation12 + $0x138] sm:$0xff]
    %v3618 = vld [vmem:[#allocation12 + $0x140] sm:$0xff]
    %v3619 = vld [vmem:[#allocation12 + $0x148] sm:$0xff]
    %v3620 = vld [vmem:[#allocation12 + $0x150] sm:$0xff]
    %v3621 = vld [vmem:[#allocation12 + $0x158] sm:$0xff]
    %v3622 = vld [vmem:[#allocation12 + $0x160] sm:$0xff]
    %v3623 = vld [vmem:[#allocation12 + $0x168] sm:$0xff]
    %v3624 = vld [vmem:[#allocation12 + $0x170] sm:$0xff]
    %v3625 = vld [vmem:[#allocation12 + $0x178] sm:$0xff]
    %v3626 = vld [vmem:[#allocation12 + $0x180] sm:$0xff]
    %v3627 = vld [vmem:[#allocation12 + $0x188] sm:$0xff]
    %v3628 = vld [vmem:[#allocation12 + $0x190] sm:$0xff]
    %v3629 = vld [vmem:[#allocation12 + $0x198] sm:$0xff]
    %v3630 = vld [vmem:[#allocation12 + $0x1a0] sm:$0xff]
    %v3631 = vld [vmem:[#allocation12 + $0x1a8] sm:$0xff]
    %v3632 = vld [vmem:[#allocation12 + $0x1b0] sm:$0xff]
    %v3633 = vld [vmem:[#allocation12 + $0x1b8] sm:$0xff]
    %v3634 = vld [vmem:[#allocation12 + $0x1c0] sm:$0xff]
    %v3635 = vld [vmem:[#allocation12 + $0x1c8] sm:$0xff]
    %v3636 = vld [vmem:[#allocation12 + $0x1d0] sm:$0xff]
    %v3637 = vld [vmem:[#allocation12 + $0x1d8] sm:$0xff]
    %v3638 = vld [vmem:[#allocation12 + $0x1e0] sm:$0xff]
    %v3639 = vld [vmem:[#allocation12 + $0x1e8] sm:$0xff]
    %v3640 = vld [vmem:[#allocation12 + $0x1f0] sm:$0xff]
    %v3641 = vld [vmem:[#allocation12 + $0x1f8] sm:$0xff]
    %3642 = vmatprep.subr.mxu0 %v3639
    %3643 = vmatpush1.msra.mxu0 %v3638
    %3644 = vmatprep.subr.mxu0 %v3635
    %3645 = vmatpush1.msra.mxu0 %v3634
    %3646 = vmatprep.subr.mxu0 %v3631
    %3647 = vmatpush1.msra.mxu0 %v3630
    %3648 = vmatprep.subr.mxu0 %v3627
    %3649 = vmatpush1.msra.mxu0 %v3626
    %3650 = vmatprep.subr.mxu0 %v3623
    %3651 = vmatpush1.msra.mxu0 %v3622
    %3652 = vmatprep.subr.mxu0 %v3619
    %3653 = vmatpush1.msra.mxu0 %v3618
    %3654 = vmatprep.subr.mxu0 %v3615
    %3655 = vmatpush1.msra.mxu0 %v3614
    %3656 = vmatprep.subr.mxu0 %v3611
    %3657 = vmatpush1.msra.mxu0 %v3610
    %3658 = vmatprep.subr.mxu0 %v3607
    %3659 = vmatpush1.msra.mxu0 %v3606
    %3660 = vmatprep.subr.mxu0 %v3603
    %3661 = vmatpush1.msra.mxu0 %v3602
    %3662 = vmatprep.subr.mxu0 %v3599
    %3663 = vmatpush1.msra.mxu0 %v3598
    %3664 = vmatprep.subr.mxu0 %v3595
    %3665 = vmatpush1.msra.mxu0 %v3594
    %3666 = vmatprep.subr.mxu0 %v3591
    %3667 = vmatpush1.msra.mxu0 %v3590
    %3668 = vmatprep.subr.mxu0 %v3587
    %3669 = vmatpush1.msra.mxu0 %v3586
    %3670 = vmatprep.subr.mxu0 %v3583
    %3671 = vmatpush1.msra.mxu0 %v3582
    %3672 = vmatprep.subr.mxu0 %v3579
    %3673 = vmatpush1.msra.mxu0 %v3578
    %3674 = vmatprep.subr.mxu0 0.0
    %3675 = vmatpush2.msra.mxu0 0.0
    %3676 = vmatprep.subr.mxu0 0.0
    %3677 = vmatpush2.msra.mxu0 0.0
    %3678 = vmatprep.subr.mxu0 0.0
    %3679 = vmatpush2.msra.mxu0 0.0
    %3680 = vmatprep.subr.mxu0 0.0
    %3681 = vmatpush2.msra.mxu0 0.0
    %3682 = vmatprep.subr.mxu0 0.0
    %3683 = vmatpush2.msra.mxu0 0.0
    %3684 = vmatprep.subr.mxu0 0.0
    %3685 = vmatpush2.msra.mxu0 0.0
    %3686 = vmatprep.subr.mxu0 0.0
    %3687 = vmatpush2.msra.mxu0 0.0
    %3688 = vmatprep.subr.mxu0 0.0
    %3689 = vmatpush2.msra.mxu0 0.0
    %3690 = vmatprep.subr.mxu0 0.0
    %3691 = vmatpush2.msra.mxu0 0.0
    %3692 = vmatprep.subr.mxu0 0.0
    %3693 = vmatpush2.msra.mxu0 0.0
    %3694 = vmatprep.subr.mxu0 0.0
    %3695 = vmatpush2.msra.mxu0 0.0
    %3696 = vmatprep.subr.mxu0 0.0
    %3697 = vmatpush2.msra.mxu0 0.0
    %3698 = vmatprep.subr.mxu0 0.0
    %3699 = vmatpush2.msra.mxu0 0.0
    %3700 = vmatprep.subr.mxu0 0.0
    %3701 = vmatpush2.msra.mxu0 0.0
    %3702 = vmatprep.subr.mxu0 0.0
    %3703 = vmatpush2.msra.mxu0 0.0
    %3704 = vmatprep.subr.mxu0 0.0
    %3705 = vmatpush2.msra.mxu0 0.0
    %3706 = vmatprep.mubr.f32.mxu0 0.0
    %3707 = vmatmul.mubr.f32.gmra.mxu0 %v3575
    %v3708 = vpop.f32.mrf.mxu0
    %v3709 = vadd.f32 0.0, %v3708
    %v3710 = vpop.f32.mrf.mxu0
    %v3711 = vadd.f32 0.0, %v3710
    %3712 = vdwg.mxu0
    %3713 = vmatprep.subr.mxu0 %v3641
    %3714 = vmatpush1.msra.mxu0 %v3640
    %3715 = vmatprep.subr.mxu0 %v3637
    %3716 = vmatpush1.msra.mxu0 %v3636
    %3717 = vmatprep.subr.mxu0 %v3633
    %3718 = vmatpush1.msra.mxu0 %v3632
    %3719 = vmatprep.subr.mxu0 %v3629
    %3720 = vmatpush1.msra.mxu0 %v3628
    %3721 = vmatprep.subr.mxu0 %v3625
    %3722 = vmatpush1.msra.mxu0 %v3624
    %3723 = vmatprep.subr.mxu0 %v3621
    %3724 = vmatpush1.msra.mxu0 %v3620
    %3725 = vmatprep.subr.mxu0 %v3617
    %3726 = vmatpush1.msra.mxu0 %v3616
    %3727 = vmatprep.subr.mxu0 %v3613
    %3728 = vmatpush1.msra.mxu0 %v3612
    %3729 = vmatprep.subr.mxu0 %v3609
    %3730 = vmatpush1.msra.mxu0 %v3608
    %3731 = vmatprep.subr.mxu0 %v3605
    %3732 = vmatpush1.msra.mxu0 %v3604
    %3733 = vmatprep.subr.mxu0 %v3601
    %3734 = vmatpush1.msra.mxu0 %v3600
    %3735 = vmatprep.subr.mxu0 %v3597
    %3736 = vmatpush1.msra.mxu0 %v3596
    %3737 = vmatprep.subr.mxu0 %v3593
    %3738 = vmatpush1.msra.mxu0 %v3592
    %3739 = vmatprep.subr.mxu0 %v3589
    %3740 = vmatpush1.msra.mxu0 %v3588
    %3741 = vmatprep.subr.mxu0 %v3585
    %3742 = vmatpush1.msra.mxu0 %v3584
    %3743 = vmatprep.subr.mxu0 %v3581
    %3744 = vmatpush1.msra.mxu0 %v3580
    %3745 = vmatprep.subr.mxu0 0.0
    %3746 = vmatpush2.msra.mxu0 0.0
    %3747 = vmatprep.subr.mxu0 0.0
    %3748 = vmatpush2.msra.mxu0 0.0
    %3749 = vmatprep.subr.mxu0 0.0
    %3750 = vmatpush2.msra.mxu0 0.0
    %3751 = vmatprep.subr.mxu0 0.0
    %3752 = vmatpush2.msra.mxu0 0.0
    %3753 = vmatprep.subr.mxu0 0.0
    %3754 = vmatpush2.msra.mxu0 0.0
    %3755 = vmatprep.subr.mxu0 0.0
    %3756 = vmatpush2.msra.mxu0 0.0
    %3757 = vmatprep.subr.mxu0 0.0
    %3758 = vmatpush2.msra.mxu0 0.0
    %3759 = vmatprep.subr.mxu0 0.0
    %3760 = vmatpush2.msra.mxu0 0.0
    %3761 = vmatprep.subr.mxu0 0.0
    %3762 = vmatpush2.msra.mxu0 0.0
    %3763 = vmatprep.subr.mxu0 0.0
    %3764 = vmatpush2.msra.mxu0 0.0
    %3765 = vmatprep.subr.mxu0 0.0
    %3766 = vmatpush2.msra.mxu0 0.0
    %3767 = vmatprep.subr.mxu0 0.0
    %3768 = vmatpush2.msra.mxu0 0.0
    %3769 = vmatprep.subr.mxu0 0.0
    %3770 = vmatpush2.msra.mxu0 0.0
    %3771 = vmatprep.subr.mxu0 0.0
    %3772 = vmatpush2.msra.mxu0 0.0
    %3773 = vmatprep.subr.mxu0 0.0
    %3774 = vmatpush2.msra.mxu0 0.0
    %3775 = vmatprep.subr.mxu0 0.0
    %3776 = vmatpush2.msra.mxu0 0.0
    %3777 = vmatprep.mubr.f32.mxu0 0.0
    %3778 = vmatmul.mubr.f32.gmra.mxu0 %v3575
    %v3779 = vpop.f32.mrf.mxu0
    %v3780 = vadd.f32 0.0, %v3779
    %v3781 = vpop.f32.mrf.mxu0
    %v3782 = vadd.f32 0.0, %v3781
    %3783 = vdwg.mxu0
    %v3784 = vadd.f32 %v1686, %v3709
    %v3785 = vadd.f32 %v1687, %v3711
    %v3786 = vadd.f32 %v1688, %v3780
    %v3787 = vadd.f32 %v1689, %v3782
    %v3788 = vmax.f32 %v3784, 0.0
    %v3789 = vmax.f32 %v3785, 0.0
    %v3790 = vmax.f32 %v3786, 0.0
    %v3791 = vmax.f32 %v3787, 0.0
    %3792 = vst [vmem:[#allocation15] sm:$0xff] %v3788
    %3793 = vst [vmem:[#allocation15 + $0x8] sm:$0xff] %v3789
    %3794 = vst [vmem:[#allocation15 + $0x10] sm:$0xff] %v3790
    %3795 = vst [vmem:[#allocation15 + $0x18] sm:$0xff] %v3791
    // Predicated region
    $region42: #{tpu_custom_call.1} parent=1 // pred_check
      _
    $region43: #{tpu_custom_call.1} parent=1 // pred_check_branch
      %3797 = sbr.rel (0) target = $region45
    $region44: #{tpu_custom_call.1} parent=1 // pred_region
      %s3799 = ssub.s32 512, 512
      %3800 = vsyncadd [#allocation8], %s3799
      %s3802 = sshll.u32 [#allocation15], 4
      %s3803 = int_to_ptr.vmem [resolvable:$true] %s3802
      %3805 = dma.vmem_to_hbm [thread:$0]  %s3803, 512, %s5, [#allocation8]
    $region45: #{tpu_custom_call.1} parent=1 // pred_fallthru
      _
    // Predicated region
    $region46: #{tpu_custom_call.1} parent=1 // pred_check
      _
    $region47: #{tpu_custom_call.1} parent=1 // pred_check_branch
      %3807 = sbr.rel (0) target = $region49
    $region48: #{tpu_custom_call.1} parent=1 // pred_region
      %s3809 = ssub.s32 256, 256
      %3810 = vsyncadd [#allocation17], %s3809
      %s3811 = sshll.u32 [#allocation16], 4
      %s3812 = int_to_ptr.vmem [resolvable:$true] %s3811
      %3817 = dma.vmem_to_hbm [thread:$0]  %s3812, 256, %s6, [#allocation17], 128, 128, 8
    $region49: #{tpu_custom_call.1} parent=1 // pred_fallthru
      _
    // Predicated region
    $region50: #{tpu_custom_call.1} parent=1 // pred_check
      _
    $region51: #{tpu_custom_call.1} parent=1 // pred_check_branch
      %3819 = sbr.rel (0) target = $region53
    $region52: #{tpu_custom_call.1} parent=1 // pred_region
      %3820 = dma.done [#allocation8], 512
    $region53: #{tpu_custom_call.1} parent=1 // pred_fallthru
      _
    // Predicated region
    $region54: #{tpu_custom_call.1} parent=1 // pred_check
      _
    $region55: #{tpu_custom_call.1} parent=1 // pred_check_branch
      %3822 = sbr.rel (0) target = $region57
    $region56: #{tpu_custom_call.1} parent=1 // pred_region
      %3823 = dma.done [#allocation17], 256
    $region57: #{tpu_custom_call.1} parent=1 // pred_fallthru
      _
    %3824 = vsyncpa [#allocation7], 1
    %3825 = vsyncpa [#allocation10], 1
    %3826 = vsyncpa [#allocation13], 1
    %3827 = vsyncpa [#allocation8], 1
    %3828 = vsyncpa [#allocation17], 1

</llo_original>
